<compile_context>
chip_gen: v6e
topology: v6e:2x2x1
jax: 0.10.0
libtpu: 0.0.40
codegen_flags: <defaults>
</compile_context>

<pallas_src>
import functools
import math

import jax
import jax.numpy as jnp
from jax.experimental import pallas as pl
from jax.experimental.pallas import tpu as pltpu

# Small, forward-consistent hyperparameters (embedding_dim divisible by num_heads).
HP = {
    "batch_size": 2,
    "seq_len": 16,
    "embedding_dim": 48,
    "num_heads": 6,
    "dropout": 0.2,   # identity at inference
}


# ---------------------------------------------------------------------------
# Fused kernel (single grid step, whole problem resident in VMEM):
#   x_ref    : (B*T, E)        both batch elements stacked along sublanes
#   wqkv_ref : (3*H, E, D)     head-major stacked [Q heads | K heads | V heads]
#                              (1/sqrt(D) already folded into the Q blocks)
#   wo_ref   : (H, D, E)       per-head rows of W_out.T
#   bo_ref   : (1, E)          output-projection bias
#   mask_ref : (B*T, B*T)      additive bias: 0 keep / -1e9 drop
#                              (causal AND same-batch-element)
#   o_ref    : (B*T, E)
# ---------------------------------------------------------------------------
def _fused_mhsa_kernel(x_ref, wqkv_ref, wo_ref, bo_ref, mask_ref, o_ref, *,
                       num_heads):
    x = x_ref[...]                                   # (BT, E)
    BT, E = x.shape
    H = num_heads
    G = 3 * H

    # One batched MXU matmul for all heads' Q, K, V. The head axis is the
    # leading (batch) axis -> no width-D lane slicing anywhere in the kernel.
    xb = jnp.broadcast_to(x, (G, BT, E))             # (3H, BT, E)
    qkv = jnp.einsum("gte,ged->gtd", xb, wqkv_ref[...],
                     preferred_element_type=jnp.float32)   # (3H, BT, D)

    q = qkv[0:H]                                     # (H, BT, D) leading views
    k = qkv[H:2 * H]
    v = qkv[2 * H:3 * H]

    # Scores, batched over heads (1/sqrt(D) folded into Q weights already).
    s = jnp.einsum("htd,hud->htu", q, k,
                   preferred_element_type=jnp.float32)     # (H, BT, BT)

    # Causal + block-diagonal same-batch mask as a precomputed additive bias.
    s = s + jnp.broadcast_to(mask_ref[...], s.shape)

    # Numerically stable softmax over the last axis.
    s = s - jnp.max(s, axis=-1, keepdims=True)
    p = jnp.exp(s)
    denom = jnp.sum(p, axis=-1, keepdims=True)
    r = pl.reciprocal(denom, approx=True)            # EUP slot
    r = r * (2.0 - denom * r)                        # one Newton step -> ~exact
    p = p * r
    # TODO(synk): nn.Dropout on attention weights is identity (inference).

    o = jnp.einsum("htu,hud->htd", p, v,
                   preferred_element_type=jnp.float32)     # (H, BT, D)

    # Output projection accumulated over heads (replaces head-concat + (E,E)
    # matmul): per-head (D, E) blocks of W_out.T, then a cheap sum over H.
    y = jnp.einsum("htd,hde->hte", o, wo_ref[...],
                   preferred_element_type=jnp.float32)     # (H, BT, E)
    o_ref[...] = jnp.sum(y, axis=0) + bo_ref[...]
    # TODO(synk): output dropout is identity (inference mode).


def multi_head_self_attention(x, wq, wk, wv, wo_t, bo):
    """x: (B, T, E); wq/wk/wv: (H, E, D); wo_t: (E, E) [= W_out.T]; bo: (E,)."""
    B, T, E = x.shape
    H, _, D = wq.shape
    assert H * D == E
    BT = B * T
    scale = 1.0 / math.sqrt(D)

    # --- constant weight / mask preprocessing (in a real model, hoist to init
    # --- or rely on jit constant folding; all host-side, nothing in-kernel).
    wqkv = jnp.concatenate([wq * scale, wk, wv], axis=0)          # (3H, E, D)
    wo_h = wo_t.reshape(H, D, E)                                  # (H, D, E)
    bo2 = bo.reshape(1, E)

    row = jnp.arange(BT, dtype=jnp.int32)[:, None]
    col = jnp.arange(BT, dtype=jnp.int32)[None, :]
    keep = (col <= row) & ((row // T) == (col // T))              # causal & same batch
    attn_bias = jnp.where(keep, 0.0, -1e9).astype(jnp.float32)    # (BT, BT)

    x2 = x.reshape(BT, E)

    kernel = functools.partial(_fused_mhsa_kernel, num_heads=H)

    out = pl.pallas_call(
        kernel,
        out_shape=jax.ShapeDtypeStruct((BT, E), jnp.float32),
        grid=(1,),                                   # single step: whole problem fits in VMEM
        in_specs=[
            pl.BlockSpec((BT, E), lambda i: (0, 0)),
            pl.BlockSpec((3 * H, E, D), lambda i: (0, 0, 0)),
            pl.BlockSpec((H, D, E), lambda i: (0, 0, 0)),
            pl.BlockSpec((1, E), lambda i: (0, 0)),
            pl.BlockSpec((BT, BT), lambda i: (0, 0)),
        ],
        out_specs=pl.BlockSpec((BT, E), lambda i: (0, 0)),
        compiler_params=pltpu.CompilerParams(
            dimension_semantics=("arbitrary",)),
    )(x2, wqkv, wo_h, bo2, attn_bias)

    return out.reshape(B, T, E)


def _reference(x, wq, wk, wv, wo_t, bo):
    """Pure-JAX reference matching the PyTorch forward (dropout = identity)."""
    B, T, E = x.shape
    H, _, D = wq.shape
    q = jnp.einsum("bte,hed->bhtd", x, wq)
    k = jnp.einsum("bte,hed->bhtd", x, wk)
    v = jnp.einsum("bte,hed->bhtd", x, wv)
    s = jnp.einsum("bhqd,bhkd->bhqk", q, k) / (D ** 0.5)
    mask = jnp.tril(jnp.ones((T, T), dtype=bool))
    s = jnp.where(mask, s, -jnp.inf)
    p = jax.nn.softmax(s, axis=-1)
    o = jnp.einsum("bhqk,bhkd->bhqd", p, v)
    o = jnp.transpose(o, (0, 2, 1, 3)).reshape(B, T, E)
    return o @ wo_t + bo


if __name__ == "__main__":
    B = HP["batch_size"]
    T = HP["seq_len"]
    E = HP["embedding_dim"]
    H = HP["num_heads"]
    D = E // H

    key = jax.random.PRNGKey(0)
    kx, kq, kk, kv, kw, kb = jax.random.split(key, 6)

    # Deterministic parameter init (PyTorch-Linear-style uniform bounds).
    bound = 1.0 / math.sqrt(E)
    x = jax.random.normal(kx, (B, T, E), dtype=jnp.float32)
    wq = jax.random.uniform(kq, (H, E, D), jnp.float32, -bound, bound)
    wk = jax.random.uniform(kk, (H, E, D), jnp.float32, -bound, bound)
    wv = jax.random.uniform(kv, (H, E, D), jnp.float32, -bound, bound)
    wo_t = jax.random.uniform(kw, (E, E), jnp.float32, -bound, bound)  # == W_out.T
    bo = jax.random.uniform(kb, (E,), jnp.float32, -bound, bound)

    out = multi_head_self_attention(x, wq, wk, wv, wo_t, bo)
    out = jax.block_until_ready(out)

    ref = _reference(x, wq, wk, wv, wo_t, bo)
    assert out.shape == (B, T, E)
    assert jnp.allclose(out, ref, atol=1e-4, rtol=1e-4), "mismatch vs reference"

    print("KERNEL_OK")
</pallas_src>

<mosaic_0001>
module attributes {stable_mosaic.version = 11 : i64} {
  func.func @_fused_mhsa_kernel(%arg0: i32, %arg1: memref<32x48xf32, #tpu.memory_space<vmem>>, %arg2: memref<18x48x8xf32, #tpu.memory_space<vmem>>, %arg3: memref<6x8x48xf32, #tpu.memory_space<vmem>>, %arg4: memref<1x48xf32, #tpu.memory_space<vmem>>, %arg5: memref<32x32xf32, #tpu.memory_space<vmem>>, %arg6: memref<32x48xf32, #tpu.memory_space<vmem>>) attributes {dimension_semantics = [#tpu.dimension_semantics<arbitrary>], iteration_bounds = array<i64: 1>, scalar_prefetch = 0 : i64, scratch_operands = 0 : i64, tpu.core_type = #tpu.core_type<tc>, window_params = [{pipeline_mode = #tpu.pipeline_mode<synchronous>, transform_indices = @transform_0, window_bounds = array<i64: 32, 48>}, {pipeline_mode = #tpu.pipeline_mode<synchronous>, transform_indices = @transform_1, window_bounds = array<i64: 18, 48, 8>}, {pipeline_mode = #tpu.pipeline_mode<synchronous>, transform_indices = @transform_2, window_bounds = array<i64: 6, 8, 48>}, {pipeline_mode = #tpu.pipeline_mode<synchronous>, transform_indices = @transform_3, window_bounds = array<i64: 1, 48>}, {pipeline_mode = #tpu.pipeline_mode<synchronous>, transform_indices = @transform_4, window_bounds = array<i64: 32, 32>}, {pipeline_mode = #tpu.pipeline_mode<synchronous>, transform_indices = @transform_5, window_bounds = array<i64: 32, 48>}]} {
    %c0 = arith.constant 0 : index
    %c0_0 = arith.constant 0 : index
    %0 = vector.load %arg1[%c0, %c0_0] : memref<32x48xf32, #tpu.memory_space<vmem>>, vector<32x48xf32>
    %1 = vector.shape_cast %0 : vector<32x48xf32> to vector<1x32x48xf32>
    %2 = vector.broadcast %1 : vector<1x32x48xf32> to vector<18x32x48xf32>
    %c0_1 = arith.constant 0 : index
    %c0_2 = arith.constant 0 : index
    %c0_3 = arith.constant 0 : index
    %3 = vector.load %arg2[%c0_1, %c0_2, %c0_3] : memref<18x48x8xf32, #tpu.memory_space<vmem>>, vector<18x48x8xf32>
    "tpu.trace_start"() <{level = 10 : i32, message = "gte,ged->gtd"}> : () -> ()
    %cst = arith.constant dense<0.000000e+00> : vector<18x32x8xf32>
    %4 = tpu.matmul %2, %3, %cst {dimension_numbers = #tpu.dot_dimension_numbers<[2], [1], [1], [2], [0, 0, 0, 1, 1, 2], [0], [0]>} : vector<18x32x48xf32>, vector<18x48x8xf32>, vector<18x32x8xf32> -> vector<18x32x8xf32>
    "tpu.trace_stop"() : () -> ()
    %5 = vector.extract_strided_slice %4 {offsets = [0, 0, 0], sizes = [6, 32, 8], strides = [1, 1, 1]} : vector<18x32x8xf32> to vector<6x32x8xf32>
    %6 = vector.extract_strided_slice %4 {offsets = [6, 0, 0], sizes = [6, 32, 8], strides = [1, 1, 1]} : vector<18x32x8xf32> to vector<6x32x8xf32>
    %7 = vector.extract_strided_slice %4 {offsets = [12, 0, 0], sizes = [6, 32, 8], strides = [1, 1, 1]} : vector<18x32x8xf32> to vector<6x32x8xf32>
    "tpu.trace_start"() <{level = 10 : i32, message = "htd,hud->htu"}> : () -> ()
    %cst_4 = arith.constant dense<0.000000e+00> : vector<6x32x32xf32>
    %8 = tpu.matmul %5, %6, %cst_4 {dimension_numbers = #tpu.dot_dimension_numbers<[2], [2], [1], [1], [0, 0, 0, 1, 1, 1], [0], [0]>} : vector<6x32x8xf32>, vector<6x32x8xf32>, vector<6x32x32xf32> -> vector<6x32x32xf32>
    "tpu.trace_stop"() : () -> ()
    %c0_5 = arith.constant 0 : index
    %c0_6 = arith.constant 0 : index
    %9 = vector.load %arg5[%c0_5, %c0_6] : memref<32x32xf32, #tpu.memory_space<vmem>>, vector<32x32xf32>
    %10 = vector.shape_cast %9 : vector<32x32xf32> to vector<1x32x32xf32>
    %11 = vector.broadcast %10 : vector<1x32x32xf32> to vector<6x32x32xf32>
    %12 = arith.addf %8, %11 : vector<6x32x32xf32>
    %cst_7 = arith.constant dense<0xFF800000> : vector<6x32xf32>
    %13 = vector.multi_reduction <maximumf>, %12, %cst_7 [2] : vector<6x32x32xf32> to vector<6x32xf32>
    %14 = vector.shape_cast %13 : vector<6x32xf32> to vector<6x32x1xf32>
    %15 = vector.broadcast %14 : vector<6x32x1xf32> to vector<6x32x32xf32>
    %16 = arith.subf %12, %15 : vector<6x32x32xf32>
    %17 = math.exp %16 : vector<6x32x32xf32>
    %cst_8 = arith.constant dense<0.000000e+00> : vector<6x32xf32>
    %18 = vector.multi_reduction <add>, %17, %cst_8 [2] : vector<6x32x32xf32> to vector<6x32xf32>
    %19 = vector.shape_cast %18 : vector<6x32xf32> to vector<6x32x1xf32>
    %20 = tpu.reciprocal %19 {approx = true} : vector<6x32x1xf32> -> vector<6x32x1xf32>
    %21 = arith.mulf %19, %20 : vector<6x32x1xf32>
    %cst_9 = arith.constant 2.000000e+00 : f32
    %22 = vector.broadcast %cst_9 : f32 to vector<6x32x1xf32>
    %23 = arith.subf %22, %21 : vector<6x32x1xf32>
    %24 = arith.mulf %20, %23 : vector<6x32x1xf32>
    %25 = vector.broadcast %24 : vector<6x32x1xf32> to vector<6x32x32xf32>
    %26 = arith.mulf %17, %25 : vector<6x32x32xf32>
    "tpu.trace_start"() <{level = 10 : i32, message = "htu,hud->htd"}> : () -> ()
    %cst_10 = arith.constant dense<0.000000e+00> : vector<6x32x8xf32>
    %27 = tpu.matmul %26, %7, %cst_10 {dimension_numbers = #tpu.dot_dimension_numbers<[2], [1], [1], [2], [0, 0, 0, 1, 1, 2], [0], [0]>} : vector<6x32x32xf32>, vector<6x32x8xf32>, vector<6x32x8xf32> -> vector<6x32x8xf32>
    "tpu.trace_stop"() : () -> ()
    %c0_11 = arith.constant 0 : index
    %c0_12 = arith.constant 0 : index
    %c0_13 = arith.constant 0 : index
    %28 = vector.load %arg3[%c0_11, %c0_12, %c0_13] : memref<6x8x48xf32, #tpu.memory_space<vmem>>, vector<6x8x48xf32>
    "tpu.trace_start"() <{level = 10 : i32, message = "htd,hde->hte"}> : () -> ()
    %cst_14 = arith.constant dense<0.000000e+00> : vector<6x32x48xf32>
    %29 = tpu.matmul %27, %28, %cst_14 {dimension_numbers = #tpu.dot_dimension_numbers<[2], [1], [1], [2], [0, 0, 0, 1, 1, 2], [0], [0]>} : vector<6x32x8xf32>, vector<6x8x48xf32>, vector<6x32x48xf32> -> vector<6x32x48xf32>
    "tpu.trace_stop"() : () -> ()
    %cst_15 = arith.constant dense<0.000000e+00> : vector<32x48xf32>
    %30 = vector.multi_reduction <add>, %29, %cst_15 [0] : vector<6x32x48xf32> to vector<32x48xf32>
    %c0_16 = arith.constant 0 : index
    %c0_17 = arith.constant 0 : index
    %31 = vector.load %arg4[%c0_16, %c0_17] : memref<1x48xf32, #tpu.memory_space<vmem>>, vector<1x48xf32>
    %32 = vector.broadcast %31 : vector<1x48xf32> to vector<32x48xf32>
    %33 = arith.addf %30, %32 : vector<32x48xf32>
    %c0_18 = arith.constant 0 : index
    %c0_19 = arith.constant 0 : index
    %34 = vector.load %arg6[%c0_18, %c0_19] : memref<32x48xf32, #tpu.memory_space<vmem>>, vector<32x48xf32>
    tpu.vector_store %arg6[%c0_18, %c0_19], %33 {strides = array<i32>} : memref<32x48xf32, #tpu.memory_space<vmem>>, vector<32x48xf32>,
    return
  }
  func.func @transform_0(%arg0: i32) -> (i32, i32) {
    %c0_i32 = arith.constant 0 : i32
    %c0_i32_0 = arith.constant 0 : i32
    %c0_i32_1 = arith.constant 0 : i32
    return %c0_i32, %c0_i32_0 : i32, i32
  }
  func.func @transform_1(%arg0: i32) -> (i32, i32, i32) {
    %c0_i32 = arith.constant 0 : i32
    %c0_i32_0 = arith.constant 0 : i32
    %c0_i32_1 = arith.constant 0 : i32
    %c0_i32_2 = arith.constant 0 : i32
    return %c0_i32, %c0_i32_0, %c0_i32_1 : i32, i32, i32
  }
  func.func @transform_2(%arg0: i32) -> (i32, i32, i32) {
    %c0_i32 = arith.constant 0 : i32
    %c0_i32_0 = arith.constant 0 : i32
    %c0_i32_1 = arith.constant 0 : i32
    %c0_i32_2 = arith.constant 0 : i32
    return %c0_i32, %c0_i32_0, %c0_i32_1 : i32, i32, i32
  }
  func.func @transform_3(%arg0: i32) -> (i32, i32) {
    %c0_i32 = arith.constant 0 : i32
    %c0_i32_0 = arith.constant 0 : i32
    %c0_i32_1 = arith.constant 0 : i32
    return %c0_i32, %c0_i32_0 : i32, i32
  }
  func.func @transform_4(%arg0: i32) -> (i32, i32) {
    %c0_i32 = arith.constant 0 : i32
    %c0_i32_0 = arith.constant 0 : i32
    %c0_i32_1 = arith.constant 0 : i32
    return %c0_i32, %c0_i32_0 : i32, i32
  }
  func.func @transform_5(%arg0: i32) -> (i32, i32) {
    %c0_i32 = arith.constant 0 : i32
    %c0_i32_0 = arith.constant 0 : i32
    %c0_i32_1 = arith.constant 0 : i32
    return %c0_i32, %c0_i32_0 : i32, i32
  }
}

</mosaic_0001>

<llo_original>
// kernel: tpu_custom_call.1
$region0: #{tpu_custom_call.1}
  #allocation0 [shape = 'u32[]', space=smem, size = 0x4, offset = 0x4, fixed_abs, tag = 'smem constant byte address 0x4 - core index']
  #allocation1 [shape = 'u32[144,128]{1,0:T(1,128)}', space=vmem, size = 0x12000, scoped, tag = 'internal scratch']
  %s0 = inlined_call_operand.vmem [shape: f32[32,48], index: 0, kind: input, shape index: {}]
  %s1 = inlined_call_operand.vmem [shape: f32[18,48,8], index: 1, kind: input, shape index: {}]
  %s2 = inlined_call_operand.vmem [shape: f32[6,8,48], index: 2, kind: input, shape index: {}]
  %s3 = inlined_call_operand.vmem [shape: f32[1,48], index: 3, kind: input, shape index: {}]
  %s4 = inlined_call_operand.vmem [shape: f32[32,32], index: 4, kind: input, shape index: {}]
  %s5 = inlined_call_operand.hbm [shape: f32[32,48], index: 5, kind: output, shape index: {}]
  %s6 = sld [smem:[#allocation0]]
  $region30: #{tpu_custom_call.1} parent=0
    _
  %s8 = ssub.s32 1, %s6
  %s9 = scalar_select 0, %s8, %s6
  $region1: #{tpu_custom_call.1} parent=0
    #allocation2 [shape = 'u8[16384]{0}', space=vmem, size = 0x4000, scoped, tag = 'output window, operand 0, single buffered']
    #allocation3 [shape = 's32[1]{0}', space=sflag, size = 0x4, scoped, tag = 'scoped memory for tpu_custom_call.1']
    %10 = vsyncpa [#allocation3], 0
    // Predicated region
    $region2: #{tpu_custom_call.1} parent=1 // pred_check
      _
    $region3: #{tpu_custom_call.1} parent=1 // pred_check_branch
      %12 = sbr.rel (0) target = $region5
    $region4: #{tpu_custom_call.1} parent=1 // pred_region
      _
    $region5: #{tpu_custom_call.1} parent=1 // pred_fallthru
      _
    // Predicated region
    $region6: #{tpu_custom_call.1} parent=1 // pred_check
      _
    $region7: #{tpu_custom_call.1} parent=1 // pred_check_branch
      %14 = sbr.rel (0) target = $region9
    $region8: #{tpu_custom_call.1} parent=1 // pred_region
      _
    $region9: #{tpu_custom_call.1} parent=1 // pred_fallthru
      _
    // Predicated region
    $region10: #{tpu_custom_call.1} parent=1 // pred_check
      _
    $region11: #{tpu_custom_call.1} parent=1 // pred_check_branch
      %16 = sbr.rel (0) target = $region13
    $region12: #{tpu_custom_call.1} parent=1 // pred_region
      _
    $region13: #{tpu_custom_call.1} parent=1 // pred_fallthru
      _
    // Predicated region
    $region14: #{tpu_custom_call.1} parent=1 // pred_check
      _
    $region15: #{tpu_custom_call.1} parent=1 // pred_check_branch
      %18 = sbr.rel (0) target = $region17
    $region16: #{tpu_custom_call.1} parent=1 // pred_region
      _
    $region17: #{tpu_custom_call.1} parent=1 // pred_fallthru
      _
    // Predicated region
    $region18: #{tpu_custom_call.1} parent=1 // pred_check
      _
    $region19: #{tpu_custom_call.1} parent=1 // pred_check_branch
      %20 = sbr.rel (0) target = $region21
    $region20: #{tpu_custom_call.1} parent=1 // pred_region
      _
    $region21: #{tpu_custom_call.1} parent=1 // pred_fallthru
      _
    %v21 = vld [vmem:[%s0] sm:$0xff]
    %v22 = vld [vmem:[%s0 + $0x8] sm:$0xff]
    %v23 = vld [vmem:[%s0 + $0x10] sm:$0xff]
    %v24 = vld [vmem:[%s0 + $0x18] sm:$0xff]
    %v25 = vld [vmem:[%s1] sm:$0xff]
    %v26 = vld [vmem:[%s1 + $0x8] sm:$0xff]
    %v27 = vld [vmem:[%s1 + $0x10] sm:$0xff]
    %v28 = vld [vmem:[%s1 + $0x18] sm:$0xff]
    %v29 = vld [vmem:[%s1 + $0x20] sm:$0xff]
    %v30 = vld [vmem:[%s1 + $0x28] sm:$0xff]
    %v31 = vld [vmem:[%s1 + $0x30] sm:$0xff]
    %v32 = vld [vmem:[%s1 + $0x38] sm:$0xff]
    %v33 = vld [vmem:[%s1 + $0x40] sm:$0xff]
    %v34 = vld [vmem:[%s1 + $0x48] sm:$0xff]
    %v35 = vld [vmem:[%s1 + $0x50] sm:$0xff]
    %v36 = vld [vmem:[%s1 + $0x58] sm:$0xff]
    %v37 = vld [vmem:[%s1 + $0x60] sm:$0xff]
    %v38 = vld [vmem:[%s1 + $0x68] sm:$0xff]
    %v39 = vld [vmem:[%s1 + $0x70] sm:$0xff]
    %v40 = vld [vmem:[%s1 + $0x78] sm:$0xff]
    %v41 = vld [vmem:[%s1 + $0x80] sm:$0xff]
    %v42 = vld [vmem:[%s1 + $0x88] sm:$0xff]
    %v43 = vld [vmem:[%s1 + $0x90] sm:$0xff]
    %v44 = vld [vmem:[%s1 + $0x98] sm:$0xff]
    %v45 = vld [vmem:[%s1 + $0xa0] sm:$0xff]
    %v46 = vld [vmem:[%s1 + $0xa8] sm:$0xff]
    %v47 = vld [vmem:[%s1 + $0xb0] sm:$0xff]
    %v48 = vld [vmem:[%s1 + $0xb8] sm:$0xff]
    %v49 = vld [vmem:[%s1 + $0xc0] sm:$0xff]
    %v50 = vld [vmem:[%s1 + $0xc8] sm:$0xff]
    %v51 = vld [vmem:[%s1 + $0xd0] sm:$0xff]
    %v52 = vld [vmem:[%s1 + $0xd8] sm:$0xff]
    %v53 = vld [vmem:[%s1 + $0xe0] sm:$0xff]
    %v54 = vld [vmem:[%s1 + $0xe8] sm:$0xff]
    %v55 = vld [vmem:[%s1 + $0xf0] sm:$0xff]
    %v56 = vld [vmem:[%s1 + $0xf8] sm:$0xff]
    %v57 = vld [vmem:[%s1 + $0x100] sm:$0xff]
    %v58 = vld [vmem:[%s1 + $0x108] sm:$0xff]
    %v59 = vld [vmem:[%s1 + $0x110] sm:$0xff]
    %v60 = vld [vmem:[%s1 + $0x118] sm:$0xff]
    %v61 = vld [vmem:[%s1 + $0x120] sm:$0xff]
    %v62 = vld [vmem:[%s1 + $0x128] sm:$0xff]
    %v63 = vld [vmem:[%s1 + $0x130] sm:$0xff]
    %v64 = vld [vmem:[%s1 + $0x138] sm:$0xff]
    %v65 = vld [vmem:[%s1 + $0x140] sm:$0xff]
    %v66 = vld [vmem:[%s1 + $0x148] sm:$0xff]
    %v67 = vld [vmem:[%s1 + $0x150] sm:$0xff]
    %v68 = vld [vmem:[%s1 + $0x158] sm:$0xff]
    %v69 = vld [vmem:[%s1 + $0x160] sm:$0xff]
    %v70 = vld [vmem:[%s1 + $0x168] sm:$0xff]
    %v71 = vld [vmem:[%s1 + $0x170] sm:$0xff]
    %v72 = vld [vmem:[%s1 + $0x178] sm:$0xff]
    %v73 = vld [vmem:[%s1 + $0x180] sm:$0xff]
    %v74 = vld [vmem:[%s1 + $0x188] sm:$0xff]
    %v75 = vld [vmem:[%s1 + $0x190] sm:$0xff]
    %v76 = vld [vmem:[%s1 + $0x198] sm:$0xff]
    %v77 = vld [vmem:[%s1 + $0x1a0] sm:$0xff]
    %v78 = vld [vmem:[%s1 + $0x1a8] sm:$0xff]
    %v79 = vld [vmem:[%s1 + $0x1b0] sm:$0xff]
    %v80 = vld [vmem:[%s1 + $0x1b8] sm:$0xff]
    %v81 = vld [vmem:[%s1 + $0x1c0] sm:$0xff]
    %v82 = vld [vmem:[%s1 + $0x1c8] sm:$0xff]
    %v83 = vld [vmem:[%s1 + $0x1d0] sm:$0xff]
    %v84 = vld [vmem:[%s1 + $0x1d8] sm:$0xff]
    %v85 = vld [vmem:[%s1 + $0x1e0] sm:$0xff]
    %v86 = vld [vmem:[%s1 + $0x1e8] sm:$0xff]
    %v87 = vld [vmem:[%s1 + $0x1f0] sm:$0xff]
    %v88 = vld [vmem:[%s1 + $0x1f8] sm:$0xff]
    %v89 = vld [vmem:[%s1 + $0x200] sm:$0xff]
    %v90 = vld [vmem:[%s1 + $0x208] sm:$0xff]
    %v91 = vld [vmem:[%s1 + $0x210] sm:$0xff]
    %v92 = vld [vmem:[%s1 + $0x218] sm:$0xff]
    %v93 = vld [vmem:[%s1 + $0x220] sm:$0xff]
    %v94 = vld [vmem:[%s1 + $0x228] sm:$0xff]
    %v95 = vld [vmem:[%s1 + $0x230] sm:$0xff]
    %v96 = vld [vmem:[%s1 + $0x238] sm:$0xff]
    %v97 = vld [vmem:[%s1 + $0x240] sm:$0xff]
    %v98 = vld [vmem:[%s1 + $0x248] sm:$0xff]
    %v99 = vld [vmem:[%s1 + $0x250] sm:$0xff]
    %v100 = vld [vmem:[%s1 + $0x258] sm:$0xff]
    %v101 = vld [vmem:[%s1 + $0x260] sm:$0xff]
    %v102 = vld [vmem:[%s1 + $0x268] sm:$0xff]
    %v103 = vld [vmem:[%s1 + $0x270] sm:$0xff]
    %v104 = vld [vmem:[%s1 + $0x278] sm:$0xff]
    %v105 = vld [vmem:[%s1 + $0x280] sm:$0xff]
    %v106 = vld [vmem:[%s1 + $0x288] sm:$0xff]
    %v107 = vld [vmem:[%s1 + $0x290] sm:$0xff]
    %v108 = vld [vmem:[%s1 + $0x298] sm:$0xff]
    %v109 = vld [vmem:[%s1 + $0x2a0] sm:$0xff]
    %v110 = vld [vmem:[%s1 + $0x2a8] sm:$0xff]
    %v111 = vld [vmem:[%s1 + $0x2b0] sm:$0xff]
    %v112 = vld [vmem:[%s1 + $0x2b8] sm:$0xff]
    %v113 = vld [vmem:[%s1 + $0x2c0] sm:$0xff]
    %v114 = vld [vmem:[%s1 + $0x2c8] sm:$0xff]
    %v115 = vld [vmem:[%s1 + $0x2d0] sm:$0xff]
    %v116 = vld [vmem:[%s1 + $0x2d8] sm:$0xff]
    %v117 = vld [vmem:[%s1 + $0x2e0] sm:$0xff]
    %v118 = vld [vmem:[%s1 + $0x2e8] sm:$0xff]
    %v119 = vld [vmem:[%s1 + $0x2f0] sm:$0xff]
    %v120 = vld [vmem:[%s1 + $0x2f8] sm:$0xff]
    %v121 = vld [vmem:[%s1 + $0x300] sm:$0xff]
    %v122 = vld [vmem:[%s1 + $0x308] sm:$0xff]
    %v123 = vld [vmem:[%s1 + $0x310] sm:$0xff]
    %v124 = vld [vmem:[%s1 + $0x318] sm:$0xff]
    %v125 = vld [vmem:[%s1 + $0x320] sm:$0xff]
    %v126 = vld [vmem:[%s1 + $0x328] sm:$0xff]
    %v127 = vld [vmem:[%s1 + $0x330] sm:$0xff]
    %v128 = vld [vmem:[%s1 + $0x338] sm:$0xff]
    %v129 = vld [vmem:[%s1 + $0x340] sm:$0xff]
    %v130 = vld [vmem:[%s1 + $0x348] sm:$0xff]
    %v131 = vld [vmem:[%s1 + $0x350] sm:$0xff]
    %v132 = vld [vmem:[%s1 + $0x358] sm:$0xff]
    %vm133 = vcmask 392192
    %v135 = vsel %vm133, %v21, 0
    %v138 = vsel %vm133, %v22, 0
    %v141 = vsel %vm133, %v23, 0
    %v144 = vsel %vm133, %v24, 0
    %146 = vmatprep.subr.mxu0 0.0
    %147 = vmatpush1.msra.mxu0 0.0
    %148 = vmatprep.subr.mxu0 0.0
    %149 = vmatpush1.msra.mxu0 0.0
    %150 = vmatprep.subr.mxu0 0.0
    %151 = vmatpush1.msra.mxu0 0.0
    %152 = vmatprep.subr.mxu0 0.0
    %153 = vmatpush1.msra.mxu0 0.0
    %154 = vmatprep.subr.mxu0 0.0
    %155 = vmatpush1.msra.mxu0 0.0
    %156 = vmatprep.subr.mxu0 0.0
    %157 = vmatpush1.msra.mxu0 0.0
    %158 = vmatprep.subr.mxu0 0.0
    %159 = vmatpush1.msra.mxu0 0.0
    %160 = vmatprep.subr.mxu0 0.0
    %161 = vmatpush1.msra.mxu0 0.0
    %162 = vmatprep.subr.mxu0 0.0
    %163 = vmatpush1.msra.mxu0 0.0
    %164 = vmatprep.subr.mxu0 0.0
    %165 = vmatpush1.msra.mxu0 0.0
    %166 = vmatprep.subr.mxu0 0.0
    %167 = vmatpush1.msra.mxu0 %v30
    %168 = vmatprep.subr.mxu0 0.0
    %169 = vmatpush1.msra.mxu0 %v29
    %170 = vmatprep.subr.mxu0 0.0
    %171 = vmatpush1.msra.mxu0 %v28
    %172 = vmatprep.subr.mxu0 0.0
    %173 = vmatpush1.msra.mxu0 %v27
    %174 = vmatprep.subr.mxu0 0.0
    %175 = vmatpush1.msra.mxu0 %v26
    %176 = vmatprep.subr.mxu0 0.0
    %177 = vmatpush1.msra.mxu0 %v25
    %178 = vmatprep.subr.mxu0 0.0
    %179 = vmatpush2.msra.mxu0 0.0
    %180 = vmatprep.subr.mxu0 0.0
    %181 = vmatpush2.msra.mxu0 0.0
    %182 = vmatprep.subr.mxu0 0.0
    %183 = vmatpush2.msra.mxu0 0.0
    %184 = vmatprep.subr.mxu0 0.0
    %185 = vmatpush2.msra.mxu0 0.0
    %186 = vmatprep.subr.mxu0 0.0
    %187 = vmatpush2.msra.mxu0 0.0
    %188 = vmatprep.subr.mxu0 0.0
    %189 = vmatpush2.msra.mxu0 0.0
    %190 = vmatprep.subr.mxu0 0.0
    %191 = vmatpush2.msra.mxu0 0.0
    %192 = vmatprep.subr.mxu0 0.0
    %193 = vmatpush2.msra.mxu0 0.0
    %194 = vmatprep.subr.mxu0 0.0
    %195 = vmatpush2.msra.mxu0 0.0
    %196 = vmatprep.subr.mxu0 0.0
    %197 = vmatpush2.msra.mxu0 0.0
    %198 = vmatprep.subr.mxu0 0.0
    %199 = vmatpush2.msra.mxu0 0.0
    %200 = vmatprep.subr.mxu0 0.0
    %201 = vmatpush2.msra.mxu0 0.0
    %202 = vmatprep.subr.mxu0 0.0
    %203 = vmatpush2.msra.mxu0 0.0
    %204 = vmatprep.subr.mxu0 0.0
    %205 = vmatpush2.msra.mxu0 0.0
    %206 = vmatprep.subr.mxu0 0.0
    %207 = vmatpush2.msra.mxu0 0.0
    %208 = vmatprep.subr.mxu0 0.0
    %209 = vmatpush2.msra.mxu0 0.0
    %210 = vmatprep.mubr.f32.mxu0 0.0
    %211 = vmatmul.mubr.f32.gmra.mxu0 %v135
    %v212 = vpop.f32.mrf.mxu0
    %v213 = vadd.f32 0.0, %v212
    %v214 = vpop.f32.mrf.mxu0
    %215 = vmatprep.mubr.f32.mxu0 0.0
    %216 = vmatmul.mubr.f32.gmra.mxu0 %v138
    %v217 = vpop.f32.mrf.mxu0
    %v218 = vadd.f32 0.0, %v217
    %v219 = vpop.f32.mrf.mxu0
    %220 = vmatprep.mubr.f32.mxu0 0.0
    %221 = vmatmul.mubr.f32.gmra.mxu0 %v141
    %v222 = vpop.f32.mrf.mxu0
    %v223 = vadd.f32 0.0, %v222
    %v224 = vpop.f32.mrf.mxu0
    %225 = vmatprep.mubr.f32.mxu0 0.0
    %226 = vmatmul.mubr.f32.gmra.mxu0 %v144
    %v227 = vpop.f32.mrf.mxu0
    %v228 = vadd.f32 0.0, %v227
    %v229 = vpop.f32.mrf.mxu0
    %230 = vdwg.mxu0
    %231 = vmatprep.subr.mxu0 0.0
    %232 = vmatpush1.msra.mxu0 0.0
    %233 = vmatprep.subr.mxu0 0.0
    %234 = vmatpush1.msra.mxu0 0.0
    %235 = vmatprep.subr.mxu0 0.0
    %236 = vmatpush1.msra.mxu0 0.0
    %237 = vmatprep.subr.mxu0 0.0
    %238 = vmatpush1.msra.mxu0 0.0
    %239 = vmatprep.subr.mxu0 0.0
    %240 = vmatpush1.msra.mxu0 0.0
    %241 = vmatprep.subr.mxu0 0.0
    %242 = vmatpush1.msra.mxu0 0.0
    %243 = vmatprep.subr.mxu0 0.0
    %244 = vmatpush1.msra.mxu0 0.0
    %245 = vmatprep.subr.mxu0 0.0
    %246 = vmatpush1.msra.mxu0 0.0
    %247 = vmatprep.subr.mxu0 0.0
    %248 = vmatpush1.msra.mxu0 0.0
    %249 = vmatprep.subr.mxu0 0.0
    %250 = vmatpush1.msra.mxu0 0.0
    %251 = vmatprep.subr.mxu0 0.0
    %252 = vmatpush1.msra.mxu0 %v36
    %253 = vmatprep.subr.mxu0 0.0
    %254 = vmatpush1.msra.mxu0 %v35
    %255 = vmatprep.subr.mxu0 0.0
    %256 = vmatpush1.msra.mxu0 %v34
    %257 = vmatprep.subr.mxu0 0.0
    %258 = vmatpush1.msra.mxu0 %v33
    %259 = vmatprep.subr.mxu0 0.0
    %260 = vmatpush1.msra.mxu0 %v32
    %261 = vmatprep.subr.mxu0 0.0
    %262 = vmatpush1.msra.mxu0 %v31
    %263 = vmatprep.subr.mxu0 0.0
    %264 = vmatpush2.msra.mxu0 0.0
    %265 = vmatprep.subr.mxu0 0.0
    %266 = vmatpush2.msra.mxu0 0.0
    %267 = vmatprep.subr.mxu0 0.0
    %268 = vmatpush2.msra.mxu0 0.0
    %269 = vmatprep.subr.mxu0 0.0
    %270 = vmatpush2.msra.mxu0 0.0
    %271 = vmatprep.subr.mxu0 0.0
    %272 = vmatpush2.msra.mxu0 0.0
    %273 = vmatprep.subr.mxu0 0.0
    %274 = vmatpush2.msra.mxu0 0.0
    %275 = vmatprep.subr.mxu0 0.0
    %276 = vmatpush2.msra.mxu0 0.0
    %277 = vmatprep.subr.mxu0 0.0
    %278 = vmatpush2.msra.mxu0 0.0
    %279 = vmatprep.subr.mxu0 0.0
    %280 = vmatpush2.msra.mxu0 0.0
    %281 = vmatprep.subr.mxu0 0.0
    %282 = vmatpush2.msra.mxu0 0.0
    %283 = vmatprep.subr.mxu0 0.0
    %284 = vmatpush2.msra.mxu0 0.0
    %285 = vmatprep.subr.mxu0 0.0
    %286 = vmatpush2.msra.mxu0 0.0
    %287 = vmatprep.subr.mxu0 0.0
    %288 = vmatpush2.msra.mxu0 0.0
    %289 = vmatprep.subr.mxu0 0.0
    %290 = vmatpush2.msra.mxu0 0.0
    %291 = vmatprep.subr.mxu0 0.0
    %292 = vmatpush2.msra.mxu0 0.0
    %293 = vmatprep.subr.mxu0 0.0
    %294 = vmatpush2.msra.mxu0 0.0
    %295 = vmatprep.mubr.f32.mxu0 0.0
    %296 = vmatmul.mubr.f32.gmra.mxu0 %v135
    %v297 = vpop.f32.mrf.mxu0
    %v298 = vadd.f32 0.0, %v297
    %v299 = vpop.f32.mrf.mxu0
    %300 = vmatprep.mubr.f32.mxu0 0.0
    %301 = vmatmul.mubr.f32.gmra.mxu0 %v138
    %v302 = vpop.f32.mrf.mxu0
    %v303 = vadd.f32 0.0, %v302
    %v304 = vpop.f32.mrf.mxu0
    %305 = vmatprep.mubr.f32.mxu0 0.0
    %306 = vmatmul.mubr.f32.gmra.mxu0 %v141
    %v307 = vpop.f32.mrf.mxu0
    %v308 = vadd.f32 0.0, %v307
    %v309 = vpop.f32.mrf.mxu0
    %310 = vmatprep.mubr.f32.mxu0 0.0
    %311 = vmatmul.mubr.f32.gmra.mxu0 %v144
    %v312 = vpop.f32.mrf.mxu0
    %v313 = vadd.f32 0.0, %v312
    %v314 = vpop.f32.mrf.mxu0
    %315 = vdwg.mxu0
    %316 = vmatprep.subr.mxu0 0.0
    %317 = vmatpush1.msra.mxu0 0.0
    %318 = vmatprep.subr.mxu0 0.0
    %319 = vmatpush1.msra.mxu0 0.0
    %320 = vmatprep.subr.mxu0 0.0
    %321 = vmatpush1.msra.mxu0 0.0
    %322 = vmatprep.subr.mxu0 0.0
    %323 = vmatpush1.msra.mxu0 0.0
    %324 = vmatprep.subr.mxu0 0.0
    %325 = vmatpush1.msra.mxu0 0.0
    %326 = vmatprep.subr.mxu0 0.0
    %327 = vmatpush1.msra.mxu0 0.0
    %328 = vmatprep.subr.mxu0 0.0
    %329 = vmatpush1.msra.mxu0 0.0
    %330 = vmatprep.subr.mxu0 0.0
    %331 = vmatpush1.msra.mxu0 0.0
    %332 = vmatprep.subr.mxu0 0.0
    %333 = vmatpush1.msra.mxu0 0.0
    %334 = vmatprep.subr.mxu0 0.0
    %335 = vmatpush1.msra.mxu0 0.0
    %336 = vmatprep.subr.mxu0 0.0
    %337 = vmatpush1.msra.mxu0 %v42
    %338 = vmatprep.subr.mxu0 0.0
    %339 = vmatpush1.msra.mxu0 %v41
    %340 = vmatprep.subr.mxu0 0.0
    %341 = vmatpush1.msra.mxu0 %v40
    %342 = vmatprep.subr.mxu0 0.0
    %343 = vmatpush1.msra.mxu0 %v39
    %344 = vmatprep.subr.mxu0 0.0
    %345 = vmatpush1.msra.mxu0 %v38
    %346 = vmatprep.subr.mxu0 0.0
    %347 = vmatpush1.msra.mxu0 %v37
    %348 = vmatprep.subr.mxu0 0.0
    %349 = vmatpush2.msra.mxu0 0.0
    %350 = vmatprep.subr.mxu0 0.0
    %351 = vmatpush2.msra.mxu0 0.0
    %352 = vmatprep.subr.mxu0 0.0
    %353 = vmatpush2.msra.mxu0 0.0
    %354 = vmatprep.subr.mxu0 0.0
    %355 = vmatpush2.msra.mxu0 0.0
    %356 = vmatprep.subr.mxu0 0.0
    %357 = vmatpush2.msra.mxu0 0.0
    %358 = vmatprep.subr.mxu0 0.0
    %359 = vmatpush2.msra.mxu0 0.0
    %360 = vmatprep.subr.mxu0 0.0
    %361 = vmatpush2.msra.mxu0 0.0
    %362 = vmatprep.subr.mxu0 0.0
    %363 = vmatpush2.msra.mxu0 0.0
    %364 = vmatprep.subr.mxu0 0.0
    %365 = vmatpush2.msra.mxu0 0.0
    %366 = vmatprep.subr.mxu0 0.0
    %367 = vmatpush2.msra.mxu0 0.0
    %368 = vmatprep.subr.mxu0 0.0
    %369 = vmatpush2.msra.mxu0 0.0
    %370 = vmatprep.subr.mxu0 0.0
    %371 = vmatpush2.msra.mxu0 0.0
    %372 = vmatprep.subr.mxu0 0.0
    %373 = vmatpush2.msra.mxu0 0.0
    %374 = vmatprep.subr.mxu0 0.0
    %375 = vmatpush2.msra.mxu0 0.0
    %376 = vmatprep.subr.mxu0 0.0
    %377 = vmatpush2.msra.mxu0 0.0
    %378 = vmatprep.subr.mxu0 0.0
    %379 = vmatpush2.msra.mxu0 0.0
    %380 = vmatprep.mubr.f32.mxu0 0.0
    %381 = vmatmul.mubr.f32.gmra.mxu0 %v135
    %v382 = vpop.f32.mrf.mxu0
    %v383 = vadd.f32 0.0, %v382
    %v384 = vpop.f32.mrf.mxu0
    %385 = vmatprep.mubr.f32.mxu0 0.0
    %386 = vmatmul.mubr.f32.gmra.mxu0 %v138
    %v387 = vpop.f32.mrf.mxu0
    %v388 = vadd.f32 0.0, %v387
    %v389 = vpop.f32.mrf.mxu0
    %390 = vmatprep.mubr.f32.mxu0 0.0
    %391 = vmatmul.mubr.f32.gmra.mxu0 %v141
    %v392 = vpop.f32.mrf.mxu0
    %v393 = vadd.f32 0.0, %v392
    %v394 = vpop.f32.mrf.mxu0
    %395 = vmatprep.mubr.f32.mxu0 0.0
    %396 = vmatmul.mubr.f32.gmra.mxu0 %v144
    %v397 = vpop.f32.mrf.mxu0
    %v398 = vadd.f32 0.0, %v397
    %v399 = vpop.f32.mrf.mxu0
    %400 = vdwg.mxu0
    %401 = vmatprep.subr.mxu0 0.0
    %402 = vmatpush1.msra.mxu0 0.0
    %403 = vmatprep.subr.mxu0 0.0
    %404 = vmatpush1.msra.mxu0 0.0
    %405 = vmatprep.subr.mxu0 0.0
    %406 = vmatpush1.msra.mxu0 0.0
    %407 = vmatprep.subr.mxu0 0.0
    %408 = vmatpush1.msra.mxu0 0.0
    %409 = vmatprep.subr.mxu0 0.0
    %410 = vmatpush1.msra.mxu0 0.0
    %411 = vmatprep.subr.mxu0 0.0
    %412 = vmatpush1.msra.mxu0 0.0
    %413 = vmatprep.subr.mxu0 0.0
    %414 = vmatpush1.msra.mxu0 0.0
    %415 = vmatprep.subr.mxu0 0.0
    %416 = vmatpush1.msra.mxu0 0.0
    %417 = vmatprep.subr.mxu0 0.0
    %418 = vmatpush1.msra.mxu0 0.0
    %419 = vmatprep.subr.mxu0 0.0
    %420 = vmatpush1.msra.mxu0 0.0
    %421 = vmatprep.subr.mxu0 0.0
    %422 = vmatpush1.msra.mxu0 %v48
    %423 = vmatprep.subr.mxu0 0.0
    %424 = vmatpush1.msra.mxu0 %v47
    %425 = vmatprep.subr.mxu0 0.0
    %426 = vmatpush1.msra.mxu0 %v46
    %427 = vmatprep.subr.mxu0 0.0
    %428 = vmatpush1.msra.mxu0 %v45
    %429 = vmatprep.subr.mxu0 0.0
    %430 = vmatpush1.msra.mxu0 %v44
    %431 = vmatprep.subr.mxu0 0.0
    %432 = vmatpush1.msra.mxu0 %v43
    %433 = vmatprep.subr.mxu0 0.0
    %434 = vmatpush2.msra.mxu0 0.0
    %435 = vmatprep.subr.mxu0 0.0
    %436 = vmatpush2.msra.mxu0 0.0
    %437 = vmatprep.subr.mxu0 0.0
    %438 = vmatpush2.msra.mxu0 0.0
    %439 = vmatprep.subr.mxu0 0.0
    %440 = vmatpush2.msra.mxu0 0.0
    %441 = vmatprep.subr.mxu0 0.0
    %442 = vmatpush2.msra.mxu0 0.0
    %443 = vmatprep.subr.mxu0 0.0
    %444 = vmatpush2.msra.mxu0 0.0
    %445 = vmatprep.subr.mxu0 0.0
    %446 = vmatpush2.msra.mxu0 0.0
    %447 = vmatprep.subr.mxu0 0.0
    %448 = vmatpush2.msra.mxu0 0.0
    %449 = vmatprep.subr.mxu0 0.0
    %450 = vmatpush2.msra.mxu0 0.0
    %451 = vmatprep.subr.mxu0 0.0
    %452 = vmatpush2.msra.mxu0 0.0
    %453 = vmatprep.subr.mxu0 0.0
    %454 = vmatpush2.msra.mxu0 0.0
    %455 = vmatprep.subr.mxu0 0.0
    %456 = vmatpush2.msra.mxu0 0.0
    %457 = vmatprep.subr.mxu0 0.0
    %458 = vmatpush2.msra.mxu0 0.0
    %459 = vmatprep.subr.mxu0 0.0
    %460 = vmatpush2.msra.mxu0 0.0
    %461 = vmatprep.subr.mxu0 0.0
    %462 = vmatpush2.msra.mxu0 0.0
    %463 = vmatprep.subr.mxu0 0.0
    %464 = vmatpush2.msra.mxu0 0.0
    %465 = vmatprep.mubr.f32.mxu0 0.0
    %466 = vmatmul.mubr.f32.gmra.mxu0 %v135
    %v467 = vpop.f32.mrf.mxu0
    %v468 = vadd.f32 0.0, %v467
    %v469 = vpop.f32.mrf.mxu0
    %470 = vmatprep.mubr.f32.mxu0 0.0
    %471 = vmatmul.mubr.f32.gmra.mxu0 %v138
    %v472 = vpop.f32.mrf.mxu0
    %v473 = vadd.f32 0.0, %v472
    %v474 = vpop.f32.mrf.mxu0
    %475 = vmatprep.mubr.f32.mxu0 0.0
    %476 = vmatmul.mubr.f32.gmra.mxu0 %v141
    %v477 = vpop.f32.mrf.mxu0
    %v478 = vadd.f32 0.0, %v477
    %v479 = vpop.f32.mrf.mxu0
    %480 = vmatprep.mubr.f32.mxu0 0.0
    %481 = vmatmul.mubr.f32.gmra.mxu0 %v144
    %v482 = vpop.f32.mrf.mxu0
    %v483 = vadd.f32 0.0, %v482
    %v484 = vpop.f32.mrf.mxu0
    %485 = vdwg.mxu0
    %486 = vmatprep.subr.mxu0 0.0
    %487 = vmatpush1.msra.mxu0 0.0
    %488 = vmatprep.subr.mxu0 0.0
    %489 = vmatpush1.msra.mxu0 0.0
    %490 = vmatprep.subr.mxu0 0.0
    %491 = vmatpush1.msra.mxu0 0.0
    %492 = vmatprep.subr.mxu0 0.0
    %493 = vmatpush1.msra.mxu0 0.0
    %494 = vmatprep.subr.mxu0 0.0
    %495 = vmatpush1.msra.mxu0 0.0
    %496 = vmatprep.subr.mxu0 0.0
    %497 = vmatpush1.msra.mxu0 0.0
    %498 = vmatprep.subr.mxu0 0.0
    %499 = vmatpush1.msra.mxu0 0.0
    %500 = vmatprep.subr.mxu0 0.0
    %501 = vmatpush1.msra.mxu0 0.0
    %502 = vmatprep.subr.mxu0 0.0
    %503 = vmatpush1.msra.mxu0 0.0
    %504 = vmatprep.subr.mxu0 0.0
    %505 = vmatpush1.msra.mxu0 0.0
    %506 = vmatprep.subr.mxu0 0.0
    %507 = vmatpush1.msra.mxu0 %v54
    %508 = vmatprep.subr.mxu0 0.0
    %509 = vmatpush1.msra.mxu0 %v53
    %510 = vmatprep.subr.mxu0 0.0
    %511 = vmatpush1.msra.mxu0 %v52
    %512 = vmatprep.subr.mxu0 0.0
    %513 = vmatpush1.msra.mxu0 %v51
    %514 = vmatprep.subr.mxu0 0.0
    %515 = vmatpush1.msra.mxu0 %v50
    %516 = vmatprep.subr.mxu0 0.0
    %517 = vmatpush1.msra.mxu0 %v49
    %518 = vmatprep.subr.mxu0 0.0
    %519 = vmatpush2.msra.mxu0 0.0
    %520 = vmatprep.subr.mxu0 0.0
    %521 = vmatpush2.msra.mxu0 0.0
    %522 = vmatprep.subr.mxu0 0.0
    %523 = vmatpush2.msra.mxu0 0.0
    %524 = vmatprep.subr.mxu0 0.0
    %525 = vmatpush2.msra.mxu0 0.0
    %526 = vmatprep.subr.mxu0 0.0
    %527 = vmatpush2.msra.mxu0 0.0
    %528 = vmatprep.subr.mxu0 0.0
    %529 = vmatpush2.msra.mxu0 0.0
    %530 = vmatprep.subr.mxu0 0.0
    %531 = vmatpush2.msra.mxu0 0.0
    %532 = vmatprep.subr.mxu0 0.0
    %533 = vmatpush2.msra.mxu0 0.0
    %534 = vmatprep.subr.mxu0 0.0
    %535 = vmatpush2.msra.mxu0 0.0
    %536 = vmatprep.subr.mxu0 0.0
    %537 = vmatpush2.msra.mxu0 0.0
    %538 = vmatprep.subr.mxu0 0.0
    %539 = vmatpush2.msra.mxu0 0.0
    %540 = vmatprep.subr.mxu0 0.0
    %541 = vmatpush2.msra.mxu0 0.0
    %542 = vmatprep.subr.mxu0 0.0
    %543 = vmatpush2.msra.mxu0 0.0
    %544 = vmatprep.subr.mxu0 0.0
    %545 = vmatpush2.msra.mxu0 0.0
    %546 = vmatprep.subr.mxu0 0.0
    %547 = vmatpush2.msra.mxu0 0.0
    %548 = vmatprep.subr.mxu0 0.0
    %549 = vmatpush2.msra.mxu0 0.0
    %550 = vmatprep.mubr.f32.mxu0 0.0
    %551 = vmatmul.mubr.f32.gmra.mxu0 %v135
    %v552 = vpop.f32.mrf.mxu0
    %v553 = vadd.f32 0.0, %v552
    %v554 = vpop.f32.mrf.mxu0
    %555 = vmatprep.mubr.f32.mxu0 0.0
    %556 = vmatmul.mubr.f32.gmra.mxu0 %v138
    %v557 = vpop.f32.mrf.mxu0
    %v558 = vadd.f32 0.0, %v557
    %v559 = vpop.f32.mrf.mxu0
    %560 = vmatprep.mubr.f32.mxu0 0.0
    %561 = vmatmul.mubr.f32.gmra.mxu0 %v141
    %v562 = vpop.f32.mrf.mxu0
    %v563 = vadd.f32 0.0, %v562
    %v564 = vpop.f32.mrf.mxu0
    %565 = vmatprep.mubr.f32.mxu0 0.0
    %566 = vmatmul.mubr.f32.gmra.mxu0 %v144
    %v567 = vpop.f32.mrf.mxu0
    %v568 = vadd.f32 0.0, %v567
    %v569 = vpop.f32.mrf.mxu0
    %570 = vdwg.mxu0
    %571 = vmatprep.subr.mxu0 0.0
    %572 = vmatpush1.msra.mxu0 0.0
    %573 = vmatprep.subr.mxu0 0.0
    %574 = vmatpush1.msra.mxu0 0.0
    %575 = vmatprep.subr.mxu0 0.0
    %576 = vmatpush1.msra.mxu0 0.0
    %577 = vmatprep.subr.mxu0 0.0
    %578 = vmatpush1.msra.mxu0 0.0
    %579 = vmatprep.subr.mxu0 0.0
    %580 = vmatpush1.msra.mxu0 0.0
    %581 = vmatprep.subr.mxu0 0.0
    %582 = vmatpush1.msra.mxu0 0.0
    %583 = vmatprep.subr.mxu0 0.0
    %584 = vmatpush1.msra.mxu0 0.0
    %585 = vmatprep.subr.mxu0 0.0
    %586 = vmatpush1.msra.mxu0 0.0
    %587 = vmatprep.subr.mxu0 0.0
    %588 = vmatpush1.msra.mxu0 0.0
    %589 = vmatprep.subr.mxu0 0.0
    %590 = vmatpush1.msra.mxu0 0.0
    %591 = vmatprep.subr.mxu0 0.0
    %592 = vmatpush1.msra.mxu0 %v60
    %593 = vmatprep.subr.mxu0 0.0
    %594 = vmatpush1.msra.mxu0 %v59
    %595 = vmatprep.subr.mxu0 0.0
    %596 = vmatpush1.msra.mxu0 %v58
    %597 = vmatprep.subr.mxu0 0.0
    %598 = vmatpush1.msra.mxu0 %v57
    %599 = vmatprep.subr.mxu0 0.0
    %600 = vmatpush1.msra.mxu0 %v56
    %601 = vmatprep.subr.mxu0 0.0
    %602 = vmatpush1.msra.mxu0 %v55
    %603 = vmatprep.subr.mxu0 0.0
    %604 = vmatpush2.msra.mxu0 0.0
    %605 = vmatprep.subr.mxu0 0.0
    %606 = vmatpush2.msra.mxu0 0.0
    %607 = vmatprep.subr.mxu0 0.0
    %608 = vmatpush2.msra.mxu0 0.0
    %609 = vmatprep.subr.mxu0 0.0
    %610 = vmatpush2.msra.mxu0 0.0
    %611 = vmatprep.subr.mxu0 0.0
    %612 = vmatpush2.msra.mxu0 0.0
    %613 = vmatprep.subr.mxu0 0.0
    %614 = vmatpush2.msra.mxu0 0.0
    %615 = vmatprep.subr.mxu0 0.0
    %616 = vmatpush2.msra.mxu0 0.0
    %617 = vmatprep.subr.mxu0 0.0
    %618 = vmatpush2.msra.mxu0 0.0
    %619 = vmatprep.subr.mxu0 0.0
    %620 = vmatpush2.msra.mxu0 0.0
    %621 = vmatprep.subr.mxu0 0.0
    %622 = vmatpush2.msra.mxu0 0.0
    %623 = vmatprep.subr.mxu0 0.0
    %624 = vmatpush2.msra.mxu0 0.0
    %625 = vmatprep.subr.mxu0 0.0
    %626 = vmatpush2.msra.mxu0 0.0
    %627 = vmatprep.subr.mxu0 0.0
    %628 = vmatpush2.msra.mxu0 0.0
    %629 = vmatprep.subr.mxu0 0.0
    %630 = vmatpush2.msra.mxu0 0.0
    %631 = vmatprep.subr.mxu0 0.0
    %632 = vmatpush2.msra.mxu0 0.0
    %633 = vmatprep.subr.mxu0 0.0
    %634 = vmatpush2.msra.mxu0 0.0
    %635 = vmatprep.mubr.f32.mxu0 0.0
    %636 = vmatmul.mubr.f32.gmra.mxu0 %v135
    %v637 = vpop.f32.mrf.mxu0
    %v638 = vadd.f32 0.0, %v637
    %v639 = vpop.f32.mrf.mxu0
    %640 = vmatprep.mubr.f32.mxu0 0.0
    %641 = vmatmul.mubr.f32.gmra.mxu0 %v138
    %v642 = vpop.f32.mrf.mxu0
    %v643 = vadd.f32 0.0, %v642
    %v644 = vpop.f32.mrf.mxu0
    %645 = vmatprep.mubr.f32.mxu0 0.0
    %646 = vmatmul.mubr.f32.gmra.mxu0 %v141
    %v647 = vpop.f32.mrf.mxu0
    %v648 = vadd.f32 0.0, %v647
    %v649 = vpop.f32.mrf.mxu0
    %650 = vmatprep.mubr.f32.mxu0 0.0
    %651 = vmatmul.mubr.f32.gmra.mxu0 %v144
    %v652 = vpop.f32.mrf.mxu0
    %v653 = vadd.f32 0.0, %v652
    %v654 = vpop.f32.mrf.mxu0
    %655 = vdwg.mxu0
    %656 = vmatprep.subr.mxu0 0.0
    %657 = vmatpush1.msra.mxu0 0.0
    %658 = vmatprep.subr.mxu0 0.0
    %659 = vmatpush1.msra.mxu0 0.0
    %660 = vmatprep.subr.mxu0 0.0
    %661 = vmatpush1.msra.mxu0 0.0
    %662 = vmatprep.subr.mxu0 0.0
    %663 = vmatpush1.msra.mxu0 0.0
    %664 = vmatprep.subr.mxu0 0.0
    %665 = vmatpush1.msra.mxu0 0.0
    %666 = vmatprep.subr.mxu0 0.0
    %667 = vmatpush1.msra.mxu0 0.0
    %668 = vmatprep.subr.mxu0 0.0
    %669 = vmatpush1.msra.mxu0 0.0
    %670 = vmatprep.subr.mxu0 0.0
    %671 = vmatpush1.msra.mxu0 0.0
    %672 = vmatprep.subr.mxu0 0.0
    %673 = vmatpush1.msra.mxu0 0.0
    %674 = vmatprep.subr.mxu0 0.0
    %675 = vmatpush1.msra.mxu0 0.0
    %676 = vmatprep.subr.mxu0 0.0
    %677 = vmatpush1.msra.mxu0 %v66
    %678 = vmatprep.subr.mxu0 0.0
    %679 = vmatpush1.msra.mxu0 %v65
    %680 = vmatprep.subr.mxu0 0.0
    %681 = vmatpush1.msra.mxu0 %v64
    %682 = vmatprep.subr.mxu0 0.0
    %683 = vmatpush1.msra.mxu0 %v63
    %684 = vmatprep.subr.mxu0 0.0
    %685 = vmatpush1.msra.mxu0 %v62
    %686 = vmatprep.subr.mxu0 0.0
    %687 = vmatpush1.msra.mxu0 %v61
    %688 = vmatprep.subr.mxu0 0.0
    %689 = vmatpush2.msra.mxu0 0.0
    %690 = vmatprep.subr.mxu0 0.0
    %691 = vmatpush2.msra.mxu0 0.0
    %692 = vmatprep.subr.mxu0 0.0
    %693 = vmatpush2.msra.mxu0 0.0
    %694 = vmatprep.subr.mxu0 0.0
    %695 = vmatpush2.msra.mxu0 0.0
    %696 = vmatprep.subr.mxu0 0.0
    %697 = vmatpush2.msra.mxu0 0.0
    %698 = vmatprep.subr.mxu0 0.0
    %699 = vmatpush2.msra.mxu0 0.0
    %700 = vmatprep.subr.mxu0 0.0
    %701 = vmatpush2.msra.mxu0 0.0
    %702 = vmatprep.subr.mxu0 0.0
    %703 = vmatpush2.msra.mxu0 0.0
    %704 = vmatprep.subr.mxu0 0.0
    %705 = vmatpush2.msra.mxu0 0.0
    %706 = vmatprep.subr.mxu0 0.0
    %707 = vmatpush2.msra.mxu0 0.0
    %708 = vmatprep.subr.mxu0 0.0
    %709 = vmatpush2.msra.mxu0 0.0
    %710 = vmatprep.subr.mxu0 0.0
    %711 = vmatpush2.msra.mxu0 0.0
    %712 = vmatprep.subr.mxu0 0.0
    %713 = vmatpush2.msra.mxu0 0.0
    %714 = vmatprep.subr.mxu0 0.0
    %715 = vmatpush2.msra.mxu0 0.0
    %716 = vmatprep.subr.mxu0 0.0
    %717 = vmatpush2.msra.mxu0 0.0
    %718 = vmatprep.subr.mxu0 0.0
    %719 = vmatpush2.msra.mxu0 0.0
    %720 = vmatprep.mubr.f32.mxu0 0.0
    %721 = vmatmul.mubr.f32.gmra.mxu0 %v135
    %v722 = vpop.f32.mrf.mxu0
    %v723 = vadd.f32 0.0, %v722
    %v724 = vpop.f32.mrf.mxu0
    %725 = vmatprep.mubr.f32.mxu0 0.0
    %726 = vmatmul.mubr.f32.gmra.mxu0 %v138
    %v727 = vpop.f32.mrf.mxu0
    %v728 = vadd.f32 0.0, %v727
    %v729 = vpop.f32.mrf.mxu0
    %730 = vmatprep.mubr.f32.mxu0 0.0
    %731 = vmatmul.mubr.f32.gmra.mxu0 %v141
    %v732 = vpop.f32.mrf.mxu0
    %v733 = vadd.f32 0.0, %v732
    %v734 = vpop.f32.mrf.mxu0
    %735 = vmatprep.mubr.f32.mxu0 0.0
    %736 = vmatmul.mubr.f32.gmra.mxu0 %v144
    %v737 = vpop.f32.mrf.mxu0
    %v738 = vadd.f32 0.0, %v737
    %v739 = vpop.f32.mrf.mxu0
    %740 = vdwg.mxu0
    %741 = vmatprep.subr.mxu0 0.0
    %742 = vmatpush1.msra.mxu0 0.0
    %743 = vmatprep.subr.mxu0 0.0
    %744 = vmatpush1.msra.mxu0 0.0
    %745 = vmatprep.subr.mxu0 0.0
    %746 = vmatpush1.msra.mxu0 0.0
    %747 = vmatprep.subr.mxu0 0.0
    %748 = vmatpush1.msra.mxu0 0.0
    %749 = vmatprep.subr.mxu0 0.0
    %750 = vmatpush1.msra.mxu0 0.0
    %751 = vmatprep.subr.mxu0 0.0
    %752 = vmatpush1.msra.mxu0 0.0
    %753 = vmatprep.subr.mxu0 0.0
    %754 = vmatpush1.msra.mxu0 0.0
    %755 = vmatprep.subr.mxu0 0.0
    %756 = vmatpush1.msra.mxu0 0.0
    %757 = vmatprep.subr.mxu0 0.0
    %758 = vmatpush1.msra.mxu0 0.0
    %759 = vmatprep.subr.mxu0 0.0
    %760 = vmatpush1.msra.mxu0 0.0
    %761 = vmatprep.subr.mxu0 0.0
    %762 = vmatpush1.msra.mxu0 %v72
    %763 = vmatprep.subr.mxu0 0.0
    %764 = vmatpush1.msra.mxu0 %v71
    %765 = vmatprep.subr.mxu0 0.0
    %766 = vmatpush1.msra.mxu0 %v70
    %767 = vmatprep.subr.mxu0 0.0
    %768 = vmatpush1.msra.mxu0 %v69
    %769 = vmatprep.subr.mxu0 0.0
    %770 = vmatpush1.msra.mxu0 %v68
    %771 = vmatprep.subr.mxu0 0.0
    %772 = vmatpush1.msra.mxu0 %v67
    %773 = vmatprep.subr.mxu0 0.0
    %774 = vmatpush2.msra.mxu0 0.0
    %775 = vmatprep.subr.mxu0 0.0
    %776 = vmatpush2.msra.mxu0 0.0
    %777 = vmatprep.subr.mxu0 0.0
    %778 = vmatpush2.msra.mxu0 0.0
    %779 = vmatprep.subr.mxu0 0.0
    %780 = vmatpush2.msra.mxu0 0.0
    %781 = vmatprep.subr.mxu0 0.0
    %782 = vmatpush2.msra.mxu0 0.0
    %783 = vmatprep.subr.mxu0 0.0
    %784 = vmatpush2.msra.mxu0 0.0
    %785 = vmatprep.subr.mxu0 0.0
    %786 = vmatpush2.msra.mxu0 0.0
    %787 = vmatprep.subr.mxu0 0.0
    %788 = vmatpush2.msra.mxu0 0.0
    %789 = vmatprep.subr.mxu0 0.0
    %790 = vmatpush2.msra.mxu0 0.0
    %791 = vmatprep.subr.mxu0 0.0
    %792 = vmatpush2.msra.mxu0 0.0
    %793 = vmatprep.subr.mxu0 0.0
    %794 = vmatpush2.msra.mxu0 0.0
    %795 = vmatprep.subr.mxu0 0.0
    %796 = vmatpush2.msra.mxu0 0.0
    %797 = vmatprep.subr.mxu0 0.0
    %798 = vmatpush2.msra.mxu0 0.0
    %799 = vmatprep.subr.mxu0 0.0
    %800 = vmatpush2.msra.mxu0 0.0
    %801 = vmatprep.subr.mxu0 0.0
    %802 = vmatpush2.msra.mxu0 0.0
    %803 = vmatprep.subr.mxu0 0.0
    %804 = vmatpush2.msra.mxu0 0.0
    %805 = vmatprep.mubr.f32.mxu0 0.0
    %806 = vmatmul.mubr.f32.gmra.mxu0 %v135
    %v807 = vpop.f32.mrf.mxu0
    %v808 = vadd.f32 0.0, %v807
    %v809 = vpop.f32.mrf.mxu0
    %810 = vmatprep.mubr.f32.mxu0 0.0
    %811 = vmatmul.mubr.f32.gmra.mxu0 %v138
    %v812 = vpop.f32.mrf.mxu0
    %v813 = vadd.f32 0.0, %v812
    %v814 = vpop.f32.mrf.mxu0
    %815 = vmatprep.mubr.f32.mxu0 0.0
    %816 = vmatmul.mubr.f32.gmra.mxu0 %v141
    %v817 = vpop.f32.mrf.mxu0
    %v818 = vadd.f32 0.0, %v817
    %v819 = vpop.f32.mrf.mxu0
    %820 = vmatprep.mubr.f32.mxu0 0.0
    %821 = vmatmul.mubr.f32.gmra.mxu0 %v144
    %v822 = vpop.f32.mrf.mxu0
    %v823 = vadd.f32 0.0, %v822
    %v824 = vpop.f32.mrf.mxu0
    %825 = vdwg.mxu0
    %826 = vmatprep.subr.mxu0 0.0
    %827 = vmatpush1.msra.mxu0 0.0
    %828 = vmatprep.subr.mxu0 0.0
    %829 = vmatpush1.msra.mxu0 0.0
    %830 = vmatprep.subr.mxu0 0.0
    %831 = vmatpush1.msra.mxu0 0.0
    %832 = vmatprep.subr.mxu0 0.0
    %833 = vmatpush1.msra.mxu0 0.0
    %834 = vmatprep.subr.mxu0 0.0
    %835 = vmatpush1.msra.mxu0 0.0
    %836 = vmatprep.subr.mxu0 0.0
    %837 = vmatpush1.msra.mxu0 0.0
    %838 = vmatprep.subr.mxu0 0.0
    %839 = vmatpush1.msra.mxu0 0.0
    %840 = vmatprep.subr.mxu0 0.0
    %841 = vmatpush1.msra.mxu0 0.0
    %842 = vmatprep.subr.mxu0 0.0
    %843 = vmatpush1.msra.mxu0 0.0
    %844 = vmatprep.subr.mxu0 0.0
    %845 = vmatpush1.msra.mxu0 0.0
    %846 = vmatprep.subr.mxu0 0.0
    %847 = vmatpush1.msra.mxu0 %v78
    %848 = vmatprep.subr.mxu0 0.0
    %849 = vmatpush1.msra.mxu0 %v77
    %850 = vmatprep.subr.mxu0 0.0
    %851 = vmatpush1.msra.mxu0 %v76
    %852 = vmatprep.subr.mxu0 0.0
    %853 = vmatpush1.msra.mxu0 %v75
    %854 = vmatprep.subr.mxu0 0.0
    %855 = vmatpush1.msra.mxu0 %v74
    %856 = vmatprep.subr.mxu0 0.0
    %857 = vmatpush1.msra.mxu0 %v73
    %858 = vmatprep.subr.mxu0 0.0
    %859 = vmatpush2.msra.mxu0 0.0
    %860 = vmatprep.subr.mxu0 0.0
    %861 = vmatpush2.msra.mxu0 0.0
    %862 = vmatprep.subr.mxu0 0.0
    %863 = vmatpush2.msra.mxu0 0.0
    %864 = vmatprep.subr.mxu0 0.0
    %865 = vmatpush2.msra.mxu0 0.0
    %866 = vmatprep.subr.mxu0 0.0
    %867 = vmatpush2.msra.mxu0 0.0
    %868 = vmatprep.subr.mxu0 0.0
    %869 = vmatpush2.msra.mxu0 0.0
    %870 = vmatprep.subr.mxu0 0.0
    %871 = vmatpush2.msra.mxu0 0.0
    %872 = vmatprep.subr.mxu0 0.0
    %873 = vmatpush2.msra.mxu0 0.0
    %874 = vmatprep.subr.mxu0 0.0
    %875 = vmatpush2.msra.mxu0 0.0
    %876 = vmatprep.subr.mxu0 0.0
    %877 = vmatpush2.msra.mxu0 0.0
    %878 = vmatprep.subr.mxu0 0.0
    %879 = vmatpush2.msra.mxu0 0.0
    %880 = vmatprep.subr.mxu0 0.0
    %881 = vmatpush2.msra.mxu0 0.0
    %882 = vmatprep.subr.mxu0 0.0
    %883 = vmatpush2.msra.mxu0 0.0
    %884 = vmatprep.subr.mxu0 0.0
    %885 = vmatpush2.msra.mxu0 0.0
    %886 = vmatprep.subr.mxu0 0.0
    %887 = vmatpush2.msra.mxu0 0.0
    %888 = vmatprep.subr.mxu0 0.0
    %889 = vmatpush2.msra.mxu0 0.0
    %890 = vmatprep.mubr.f32.mxu0 0.0
    %891 = vmatmul.mubr.f32.gmra.mxu0 %v135
    %v892 = vpop.f32.mrf.mxu0
    %v893 = vadd.f32 0.0, %v892
    %v894 = vpop.f32.mrf.mxu0
    %895 = vmatprep.mubr.f32.mxu0 0.0
    %896 = vmatmul.mubr.f32.gmra.mxu0 %v138
    %v897 = vpop.f32.mrf.mxu0
    %v898 = vadd.f32 0.0, %v897
    %v899 = vpop.f32.mrf.mxu0
    %900 = vmatprep.mubr.f32.mxu0 0.0
    %901 = vmatmul.mubr.f32.gmra.mxu0 %v141
    %v902 = vpop.f32.mrf.mxu0
    %v903 = vadd.f32 0.0, %v902
    %v904 = vpop.f32.mrf.mxu0
    %905 = vmatprep.mubr.f32.mxu0 0.0
    %906 = vmatmul.mubr.f32.gmra.mxu0 %v144
    %v907 = vpop.f32.mrf.mxu0
    %v908 = vadd.f32 0.0, %v907
    %v909 = vpop.f32.mrf.mxu0
    %910 = vdwg.mxu0
    %911 = vmatprep.subr.mxu0 0.0
    %912 = vmatpush1.msra.mxu0 0.0
    %913 = vmatprep.subr.mxu0 0.0
    %914 = vmatpush1.msra.mxu0 0.0
    %915 = vmatprep.subr.mxu0 0.0
    %916 = vmatpush1.msra.mxu0 0.0
    %917 = vmatprep.subr.mxu0 0.0
    %918 = vmatpush1.msra.mxu0 0.0
    %919 = vmatprep.subr.mxu0 0.0
    %920 = vmatpush1.msra.mxu0 0.0
    %921 = vmatprep.subr.mxu0 0.0
    %922 = vmatpush1.msra.mxu0 0.0
    %923 = vmatprep.subr.mxu0 0.0
    %924 = vmatpush1.msra.mxu0 0.0
    %925 = vmatprep.subr.mxu0 0.0
    %926 = vmatpush1.msra.mxu0 0.0
    %927 = vmatprep.subr.mxu0 0.0
    %928 = vmatpush1.msra.mxu0 0.0
    %929 = vmatprep.subr.mxu0 0.0
    %930 = vmatpush1.msra.mxu0 0.0
    %931 = vmatprep.subr.mxu0 0.0
    %932 = vmatpush1.msra.mxu0 %v84
    %933 = vmatprep.subr.mxu0 0.0
    %934 = vmatpush1.msra.mxu0 %v83
    %935 = vmatprep.subr.mxu0 0.0
    %936 = vmatpush1.msra.mxu0 %v82
    %937 = vmatprep.subr.mxu0 0.0
    %938 = vmatpush1.msra.mxu0 %v81
    %939 = vmatprep.subr.mxu0 0.0
    %940 = vmatpush1.msra.mxu0 %v80
    %941 = vmatprep.subr.mxu0 0.0
    %942 = vmatpush1.msra.mxu0 %v79
    %943 = vmatprep.subr.mxu0 0.0
    %944 = vmatpush2.msra.mxu0 0.0
    %945 = vmatprep.subr.mxu0 0.0
    %946 = vmatpush2.msra.mxu0 0.0
    %947 = vmatprep.subr.mxu0 0.0
    %948 = vmatpush2.msra.mxu0 0.0
    %949 = vmatprep.subr.mxu0 0.0
    %950 = vmatpush2.msra.mxu0 0.0
    %951 = vmatprep.subr.mxu0 0.0
    %952 = vmatpush2.msra.mxu0 0.0
    %953 = vmatprep.subr.mxu0 0.0
    %954 = vmatpush2.msra.mxu0 0.0
    %955 = vmatprep.subr.mxu0 0.0
    %956 = vmatpush2.msra.mxu0 0.0
    %957 = vmatprep.subr.mxu0 0.0
    %958 = vmatpush2.msra.mxu0 0.0
    %959 = vmatprep.subr.mxu0 0.0
    %960 = vmatpush2.msra.mxu0 0.0
    %961 = vmatprep.subr.mxu0 0.0
    %962 = vmatpush2.msra.mxu0 0.0
    %963 = vmatprep.subr.mxu0 0.0
    %964 = vmatpush2.msra.mxu0 0.0
    %965 = vmatprep.subr.mxu0 0.0
    %966 = vmatpush2.msra.mxu0 0.0
    %967 = vmatprep.subr.mxu0 0.0
    %968 = vmatpush2.msra.mxu0 0.0
    %969 = vmatprep.subr.mxu0 0.0
    %970 = vmatpush2.msra.mxu0 0.0
    %971 = vmatprep.subr.mxu0 0.0
    %972 = vmatpush2.msra.mxu0 0.0
    %973 = vmatprep.subr.mxu0 0.0
    %974 = vmatpush2.msra.mxu0 0.0
    %975 = vmatprep.mubr.f32.mxu0 0.0
    %976 = vmatmul.mubr.f32.gmra.mxu0 %v135
    %v977 = vpop.f32.mrf.mxu0
    %v978 = vadd.f32 0.0, %v977
    %v979 = vpop.f32.mrf.mxu0
    %980 = vmatprep.mubr.f32.mxu0 0.0
    %981 = vmatmul.mubr.f32.gmra.mxu0 %v138
    %v982 = vpop.f32.mrf.mxu0
    %v983 = vadd.f32 0.0, %v982
    %v984 = vpop.f32.mrf.mxu0
    %985 = vmatprep.mubr.f32.mxu0 0.0
    %986 = vmatmul.mubr.f32.gmra.mxu0 %v141
    %v987 = vpop.f32.mrf.mxu0
    %v988 = vadd.f32 0.0, %v987
    %v989 = vpop.f32.mrf.mxu0
    %990 = vmatprep.mubr.f32.mxu0 0.0
    %991 = vmatmul.mubr.f32.gmra.mxu0 %v144
    %v992 = vpop.f32.mrf.mxu0
    %v993 = vadd.f32 0.0, %v992
    %v994 = vpop.f32.mrf.mxu0
    %995 = vdwg.mxu0
    %996 = vmatprep.subr.mxu0 0.0
    %997 = vmatpush1.msra.mxu0 0.0
    %998 = vmatprep.subr.mxu0 0.0
    %999 = vmatpush1.msra.mxu0 0.0
    %1000 = vmatprep.subr.mxu0 0.0
    %1001 = vmatpush1.msra.mxu0 0.0
    %1002 = vmatprep.subr.mxu0 0.0
    %1003 = vmatpush1.msra.mxu0 0.0
    %1004 = vmatprep.subr.mxu0 0.0
    %1005 = vmatpush1.msra.mxu0 0.0
    %1006 = vmatprep.subr.mxu0 0.0
    %1007 = vmatpush1.msra.mxu0 0.0
    %1008 = vmatprep.subr.mxu0 0.0
    %1009 = vmatpush1.msra.mxu0 0.0
    %1010 = vmatprep.subr.mxu0 0.0
    %1011 = vmatpush1.msra.mxu0 0.0
    %1012 = vmatprep.subr.mxu0 0.0
    %1013 = vmatpush1.msra.mxu0 0.0
    %1014 = vmatprep.subr.mxu0 0.0
    %1015 = vmatpush1.msra.mxu0 0.0
    %1016 = vmatprep.subr.mxu0 0.0
    %1017 = vmatpush1.msra.mxu0 %v90
    %1018 = vmatprep.subr.mxu0 0.0
    %1019 = vmatpush1.msra.mxu0 %v89
    %1020 = vmatprep.subr.mxu0 0.0
    %1021 = vmatpush1.msra.mxu0 %v88
    %1022 = vmatprep.subr.mxu0 0.0
    %1023 = vmatpush1.msra.mxu0 %v87
    %1024 = vmatprep.subr.mxu0 0.0
    %1025 = vmatpush1.msra.mxu0 %v86
    %1026 = vmatprep.subr.mxu0 0.0
    %1027 = vmatpush1.msra.mxu0 %v85
    %1028 = vmatprep.subr.mxu0 0.0
    %1029 = vmatpush2.msra.mxu0 0.0
    %1030 = vmatprep.subr.mxu0 0.0
    %1031 = vmatpush2.msra.mxu0 0.0
    %1032 = vmatprep.subr.mxu0 0.0
    %1033 = vmatpush2.msra.mxu0 0.0
    %1034 = vmatprep.subr.mxu0 0.0
    %1035 = vmatpush2.msra.mxu0 0.0
    %1036 = vmatprep.subr.mxu0 0.0
    %1037 = vmatpush2.msra.mxu0 0.0
    %1038 = vmatprep.subr.mxu0 0.0
    %1039 = vmatpush2.msra.mxu0 0.0
    %1040 = vmatprep.subr.mxu0 0.0
    %1041 = vmatpush2.msra.mxu0 0.0
    %1042 = vmatprep.subr.mxu0 0.0
    %1043 = vmatpush2.msra.mxu0 0.0
    %1044 = vmatprep.subr.mxu0 0.0
    %1045 = vmatpush2.msra.mxu0 0.0
    %1046 = vmatprep.subr.mxu0 0.0
    %1047 = vmatpush2.msra.mxu0 0.0
    %1048 = vmatprep.subr.mxu0 0.0
    %1049 = vmatpush2.msra.mxu0 0.0
    %1050 = vmatprep.subr.mxu0 0.0
    %1051 = vmatpush2.msra.mxu0 0.0
    %1052 = vmatprep.subr.mxu0 0.0
    %1053 = vmatpush2.msra.mxu0 0.0
    %1054 = vmatprep.subr.mxu0 0.0
    %1055 = vmatpush2.msra.mxu0 0.0
    %1056 = vmatprep.subr.mxu0 0.0
    %1057 = vmatpush2.msra.mxu0 0.0
    %1058 = vmatprep.subr.mxu0 0.0
    %1059 = vmatpush2.msra.mxu0 0.0
    %1060 = vmatprep.mubr.f32.mxu0 0.0
    %1061 = vmatmul.mubr.f32.gmra.mxu0 %v135
    %v1062 = vpop.f32.mrf.mxu0
    %v1063 = vadd.f32 0.0, %v1062
    %v1064 = vpop.f32.mrf.mxu0
    %1065 = vmatprep.mubr.f32.mxu0 0.0
    %1066 = vmatmul.mubr.f32.gmra.mxu0 %v138
    %v1067 = vpop.f32.mrf.mxu0
    %v1068 = vadd.f32 0.0, %v1067
    %v1069 = vpop.f32.mrf.mxu0
    %1070 = vmatprep.mubr.f32.mxu0 0.0
    %1071 = vmatmul.mubr.f32.gmra.mxu0 %v141
    %v1072 = vpop.f32.mrf.mxu0
    %v1073 = vadd.f32 0.0, %v1072
    %v1074 = vpop.f32.mrf.mxu0
    %1075 = vmatprep.mubr.f32.mxu0 0.0
    %1076 = vmatmul.mubr.f32.gmra.mxu0 %v144
    %v1077 = vpop.f32.mrf.mxu0
    %v1078 = vadd.f32 0.0, %v1077
    %v1079 = vpop.f32.mrf.mxu0
    %1080 = vdwg.mxu0
    %1081 = vmatprep.subr.mxu0 0.0
    %1082 = vmatpush1.msra.mxu0 0.0
    %1083 = vmatprep.subr.mxu0 0.0
    %1084 = vmatpush1.msra.mxu0 0.0
    %1085 = vmatprep.subr.mxu0 0.0
    %1086 = vmatpush1.msra.mxu0 0.0
    %1087 = vmatprep.subr.mxu0 0.0
    %1088 = vmatpush1.msra.mxu0 0.0
    %1089 = vmatprep.subr.mxu0 0.0
    %1090 = vmatpush1.msra.mxu0 0.0
    %1091 = vmatprep.subr.mxu0 0.0
    %1092 = vmatpush1.msra.mxu0 0.0
    %1093 = vmatprep.subr.mxu0 0.0
    %1094 = vmatpush1.msra.mxu0 0.0
    %1095 = vmatprep.subr.mxu0 0.0
    %1096 = vmatpush1.msra.mxu0 0.0
    %1097 = vmatprep.subr.mxu0 0.0
    %1098 = vmatpush1.msra.mxu0 0.0
    %1099 = vmatprep.subr.mxu0 0.0
    %1100 = vmatpush1.msra.mxu0 0.0
    %1101 = vmatprep.subr.mxu0 0.0
    %1102 = vmatpush1.msra.mxu0 %v96
    %1103 = vmatprep.subr.mxu0 0.0
    %1104 = vmatpush1.msra.mxu0 %v95
    %1105 = vmatprep.subr.mxu0 0.0
    %1106 = vmatpush1.msra.mxu0 %v94
    %1107 = vmatprep.subr.mxu0 0.0
    %1108 = vmatpush1.msra.mxu0 %v93
    %1109 = vmatprep.subr.mxu0 0.0
    %1110 = vmatpush1.msra.mxu0 %v92
    %1111 = vmatprep.subr.mxu0 0.0
    %1112 = vmatpush1.msra.mxu0 %v91
    %1113 = vmatprep.subr.mxu0 0.0
    %1114 = vmatpush2.msra.mxu0 0.0
    %1115 = vmatprep.subr.mxu0 0.0
    %1116 = vmatpush2.msra.mxu0 0.0
    %1117 = vmatprep.subr.mxu0 0.0
    %1118 = vmatpush2.msra.mxu0 0.0
    %1119 = vmatprep.subr.mxu0 0.0
    %1120 = vmatpush2.msra.mxu0 0.0
    %1121 = vmatprep.subr.mxu0 0.0
    %1122 = vmatpush2.msra.mxu0 0.0
    %1123 = vmatprep.subr.mxu0 0.0
    %1124 = vmatpush2.msra.mxu0 0.0
    %1125 = vmatprep.subr.mxu0 0.0
    %1126 = vmatpush2.msra.mxu0 0.0
    %1127 = vmatprep.subr.mxu0 0.0
    %1128 = vmatpush2.msra.mxu0 0.0
    %1129 = vmatprep.subr.mxu0 0.0
    %1130 = vmatpush2.msra.mxu0 0.0
    %1131 = vmatprep.subr.mxu0 0.0
    %1132 = vmatpush2.msra.mxu0 0.0
    %1133 = vmatprep.subr.mxu0 0.0
    %1134 = vmatpush2.msra.mxu0 0.0
    %1135 = vmatprep.subr.mxu0 0.0
    %1136 = vmatpush2.msra.mxu0 0.0
    %1137 = vmatprep.subr.mxu0 0.0
    %1138 = vmatpush2.msra.mxu0 0.0
    %1139 = vmatprep.subr.mxu0 0.0
    %1140 = vmatpush2.msra.mxu0 0.0
    %1141 = vmatprep.subr.mxu0 0.0
    %1142 = vmatpush2.msra.mxu0 0.0
    %1143 = vmatprep.subr.mxu0 0.0
    %1144 = vmatpush2.msra.mxu0 0.0
    %1145 = vmatprep.mubr.f32.mxu0 0.0
    %1146 = vmatmul.mubr.f32.gmra.mxu0 %v135
    %v1147 = vpop.f32.mrf.mxu0
    %v1148 = vadd.f32 0.0, %v1147
    %v1149 = vpop.f32.mrf.mxu0
    %1150 = vmatprep.mubr.f32.mxu0 0.0
    %1151 = vmatmul.mubr.f32.gmra.mxu0 %v138
    %v1152 = vpop.f32.mrf.mxu0
    %v1153 = vadd.f32 0.0, %v1152
    %v1154 = vpop.f32.mrf.mxu0
    %1155 = vmatprep.mubr.f32.mxu0 0.0
    %1156 = vmatmul.mubr.f32.gmra.mxu0 %v141
    %v1157 = vpop.f32.mrf.mxu0
    %v1158 = vadd.f32 0.0, %v1157
    %v1159 = vpop.f32.mrf.mxu0
    %1160 = vmatprep.mubr.f32.mxu0 0.0
    %1161 = vmatmul.mubr.f32.gmra.mxu0 %v144
    %v1162 = vpop.f32.mrf.mxu0
    %v1163 = vadd.f32 0.0, %v1162
    %v1164 = vpop.f32.mrf.mxu0
    %1165 = vdwg.mxu0
    %1166 = vmatprep.subr.mxu0 0.0
    %1167 = vmatpush1.msra.mxu0 0.0
    %1168 = vmatprep.subr.mxu0 0.0
    %1169 = vmatpush1.msra.mxu0 0.0
    %1170 = vmatprep.subr.mxu0 0.0
    %1171 = vmatpush1.msra.mxu0 0.0
    %1172 = vmatprep.subr.mxu0 0.0
    %1173 = vmatpush1.msra.mxu0 0.0
    %1174 = vmatprep.subr.mxu0 0.0
    %1175 = vmatpush1.msra.mxu0 0.0
    %1176 = vmatprep.subr.mxu0 0.0
    %1177 = vmatpush1.msra.mxu0 0.0
    %1178 = vmatprep.subr.mxu0 0.0
    %1179 = vmatpush1.msra.mxu0 0.0
    %1180 = vmatprep.subr.mxu0 0.0
    %1181 = vmatpush1.msra.mxu0 0.0
    %1182 = vmatprep.subr.mxu0 0.0
    %1183 = vmatpush1.msra.mxu0 0.0
    %1184 = vmatprep.subr.mxu0 0.0
    %1185 = vmatpush1.msra.mxu0 0.0
    %1186 = vmatprep.subr.mxu0 0.0
    %1187 = vmatpush1.msra.mxu0 %v102
    %1188 = vmatprep.subr.mxu0 0.0
    %1189 = vmatpush1.msra.mxu0 %v101
    %1190 = vmatprep.subr.mxu0 0.0
    %1191 = vmatpush1.msra.mxu0 %v100
    %1192 = vmatprep.subr.mxu0 0.0
    %1193 = vmatpush1.msra.mxu0 %v99
    %1194 = vmatprep.subr.mxu0 0.0
    %1195 = vmatpush1.msra.mxu0 %v98
    %1196 = vmatprep.subr.mxu0 0.0
    %1197 = vmatpush1.msra.mxu0 %v97
    %1198 = vmatprep.subr.mxu0 0.0
    %1199 = vmatpush2.msra.mxu0 0.0
    %1200 = vmatprep.subr.mxu0 0.0
    %1201 = vmatpush2.msra.mxu0 0.0
    %1202 = vmatprep.subr.mxu0 0.0
    %1203 = vmatpush2.msra.mxu0 0.0
    %1204 = vmatprep.subr.mxu0 0.0
    %1205 = vmatpush2.msra.mxu0 0.0
    %1206 = vmatprep.subr.mxu0 0.0
    %1207 = vmatpush2.msra.mxu0 0.0
    %1208 = vmatprep.subr.mxu0 0.0
    %1209 = vmatpush2.msra.mxu0 0.0
    %1210 = vmatprep.subr.mxu0 0.0
    %1211 = vmatpush2.msra.mxu0 0.0
    %1212 = vmatprep.subr.mxu0 0.0
    %1213 = vmatpush2.msra.mxu0 0.0
    %1214 = vmatprep.subr.mxu0 0.0
    %1215 = vmatpush2.msra.mxu0 0.0
    %1216 = vmatprep.subr.mxu0 0.0
    %1217 = vmatpush2.msra.mxu0 0.0
    %1218 = vmatprep.subr.mxu0 0.0
    %1219 = vmatpush2.msra.mxu0 0.0
    %1220 = vmatprep.subr.mxu0 0.0
    %1221 = vmatpush2.msra.mxu0 0.0
    %1222 = vmatprep.subr.mxu0 0.0
    %1223 = vmatpush2.msra.mxu0 0.0
    %1224 = vmatprep.subr.mxu0 0.0
    %1225 = vmatpush2.msra.mxu0 0.0
    %1226 = vmatprep.subr.mxu0 0.0
    %1227 = vmatpush2.msra.mxu0 0.0
    %1228 = vmatprep.subr.mxu0 0.0
    %1229 = vmatpush2.msra.mxu0 0.0
    %1230 = vmatprep.mubr.f32.mxu0 0.0
    %1231 = vmatmul.mubr.f32.gmra.mxu0 %v135
    %v1232 = vpop.f32.mrf.mxu0
    %v1233 = vadd.f32 0.0, %v1232
    %v1234 = vpop.f32.mrf.mxu0
    %1235 = vmatprep.mubr.f32.mxu0 0.0
    %1236 = vmatmul.mubr.f32.gmra.mxu0 %v138
    %v1237 = vpop.f32.mrf.mxu0
    %v1238 = vadd.f32 0.0, %v1237
    %v1239 = vpop.f32.mrf.mxu0
    %1240 = vmatprep.mubr.f32.mxu0 0.0
    %1241 = vmatmul.mubr.f32.gmra.mxu0 %v141
    %v1242 = vpop.f32.mrf.mxu0
    %v1243 = vadd.f32 0.0, %v1242
    %v1244 = vpop.f32.mrf.mxu0
    %1245 = vmatprep.mubr.f32.mxu0 0.0
    %1246 = vmatmul.mubr.f32.gmra.mxu0 %v144
    %v1247 = vpop.f32.mrf.mxu0
    %v1248 = vadd.f32 0.0, %v1247
    %v1249 = vpop.f32.mrf.mxu0
    %1250 = vdwg.mxu0
    %1251 = vmatprep.subr.mxu0 0.0
    %1252 = vmatpush1.msra.mxu0 0.0
    %1253 = vmatprep.subr.mxu0 0.0
    %1254 = vmatpush1.msra.mxu0 0.0
    %1255 = vmatprep.subr.mxu0 0.0
    %1256 = vmatpush1.msra.mxu0 0.0
    %1257 = vmatprep.subr.mxu0 0.0
    %1258 = vmatpush1.msra.mxu0 0.0
    %1259 = vmatprep.subr.mxu0 0.0
    %1260 = vmatpush1.msra.mxu0 0.0
    %1261 = vmatprep.subr.mxu0 0.0
    %1262 = vmatpush1.msra.mxu0 0.0
    %1263 = vmatprep.subr.mxu0 0.0
    %1264 = vmatpush1.msra.mxu0 0.0
    %1265 = vmatprep.subr.mxu0 0.0
    %1266 = vmatpush1.msra.mxu0 0.0
    %1267 = vmatprep.subr.mxu0 0.0
    %1268 = vmatpush1.msra.mxu0 0.0
    %1269 = vmatprep.subr.mxu0 0.0
    %1270 = vmatpush1.msra.mxu0 0.0
    %1271 = vmatprep.subr.mxu0 0.0
    %1272 = vmatpush1.msra.mxu0 %v108
    %1273 = vmatprep.subr.mxu0 0.0
    %1274 = vmatpush1.msra.mxu0 %v107
    %1275 = vmatprep.subr.mxu0 0.0
    %1276 = vmatpush1.msra.mxu0 %v106
    %1277 = vmatprep.subr.mxu0 0.0
    %1278 = vmatpush1.msra.mxu0 %v105
    %1279 = vmatprep.subr.mxu0 0.0
    %1280 = vmatpush1.msra.mxu0 %v104
    %1281 = vmatprep.subr.mxu0 0.0
    %1282 = vmatpush1.msra.mxu0 %v103
    %1283 = vmatprep.subr.mxu0 0.0
    %1284 = vmatpush2.msra.mxu0 0.0
    %1285 = vmatprep.subr.mxu0 0.0
    %1286 = vmatpush2.msra.mxu0 0.0
    %1287 = vmatprep.subr.mxu0 0.0
    %1288 = vmatpush2.msra.mxu0 0.0
    %1289 = vmatprep.subr.mxu0 0.0
    %1290 = vmatpush2.msra.mxu0 0.0
    %1291 = vmatprep.subr.mxu0 0.0
    %1292 = vmatpush2.msra.mxu0 0.0
    %1293 = vmatprep.subr.mxu0 0.0
    %1294 = vmatpush2.msra.mxu0 0.0
    %1295 = vmatprep.subr.mxu0 0.0
    %1296 = vmatpush2.msra.mxu0 0.0
    %1297 = vmatprep.subr.mxu0 0.0
    %1298 = vmatpush2.msra.mxu0 0.0
    %1299 = vmatprep.subr.mxu0 0.0
    %1300 = vmatpush2.msra.mxu0 0.0
    %1301 = vmatprep.subr.mxu0 0.0
    %1302 = vmatpush2.msra.mxu0 0.0
    %1303 = vmatprep.subr.mxu0 0.0
    %1304 = vmatpush2.msra.mxu0 0.0
    %1305 = vmatprep.subr.mxu0 0.0
    %1306 = vmatpush2.msra.mxu0 0.0
    %1307 = vmatprep.subr.mxu0 0.0
    %1308 = vmatpush2.msra.mxu0 0.0
    %1309 = vmatprep.subr.mxu0 0.0
    %1310 = vmatpush2.msra.mxu0 0.0
    %1311 = vmatprep.subr.mxu0 0.0
    %1312 = vmatpush2.msra.mxu0 0.0
    %1313 = vmatprep.subr.mxu0 0.0
    %1314 = vmatpush2.msra.mxu0 0.0
    %1315 = vmatprep.mubr.f32.mxu0 0.0
    %1316 = vmatmul.mubr.f32.gmra.mxu0 %v135
    %v1317 = vpop.f32.mrf.mxu0
    %v1318 = vadd.f32 0.0, %v1317
    %v1319 = vpop.f32.mrf.mxu0
    %1320 = vmatprep.mubr.f32.mxu0 0.0
    %1321 = vmatmul.mubr.f32.gmra.mxu0 %v138
    %v1322 = vpop.f32.mrf.mxu0
    %v1323 = vadd.f32 0.0, %v1322
    %v1324 = vpop.f32.mrf.mxu0
    %1325 = vmatprep.mubr.f32.mxu0 0.0
    %1326 = vmatmul.mubr.f32.gmra.mxu0 %v141
    %v1327 = vpop.f32.mrf.mxu0
    %v1328 = vadd.f32 0.0, %v1327
    %v1329 = vpop.f32.mrf.mxu0
    %1330 = vmatprep.mubr.f32.mxu0 0.0
    %1331 = vmatmul.mubr.f32.gmra.mxu0 %v144
    %v1332 = vpop.f32.mrf.mxu0
    %v1333 = vadd.f32 0.0, %v1332
    %v1334 = vpop.f32.mrf.mxu0
    %1335 = vdwg.mxu0
    %1336 = vmatprep.subr.mxu0 0.0
    %1337 = vmatpush1.msra.mxu0 0.0
    %1338 = vmatprep.subr.mxu0 0.0
    %1339 = vmatpush1.msra.mxu0 0.0
    %1340 = vmatprep.subr.mxu0 0.0
    %1341 = vmatpush1.msra.mxu0 0.0
    %1342 = vmatprep.subr.mxu0 0.0
    %1343 = vmatpush1.msra.mxu0 0.0
    %1344 = vmatprep.subr.mxu0 0.0
    %1345 = vmatpush1.msra.mxu0 0.0
    %1346 = vmatprep.subr.mxu0 0.0
    %1347 = vmatpush1.msra.mxu0 0.0
    %1348 = vmatprep.subr.mxu0 0.0
    %1349 = vmatpush1.msra.mxu0 0.0
    %1350 = vmatprep.subr.mxu0 0.0
    %1351 = vmatpush1.msra.mxu0 0.0
    %1352 = vmatprep.subr.mxu0 0.0
    %1353 = vmatpush1.msra.mxu0 0.0
    %1354 = vmatprep.subr.mxu0 0.0
    %1355 = vmatpush1.msra.mxu0 0.0
    %1356 = vmatprep.subr.mxu0 0.0
    %1357 = vmatpush1.msra.mxu0 %v114
    %1358 = vmatprep.subr.mxu0 0.0
    %1359 = vmatpush1.msra.mxu0 %v113
    %1360 = vmatprep.subr.mxu0 0.0
    %1361 = vmatpush1.msra.mxu0 %v112
    %1362 = vmatprep.subr.mxu0 0.0
    %1363 = vmatpush1.msra.mxu0 %v111
    %1364 = vmatprep.subr.mxu0 0.0
    %1365 = vmatpush1.msra.mxu0 %v110
    %1366 = vmatprep.subr.mxu0 0.0
    %1367 = vmatpush1.msra.mxu0 %v109
    %1368 = vmatprep.subr.mxu0 0.0
    %1369 = vmatpush2.msra.mxu0 0.0
    %1370 = vmatprep.subr.mxu0 0.0
    %1371 = vmatpush2.msra.mxu0 0.0
    %1372 = vmatprep.subr.mxu0 0.0
    %1373 = vmatpush2.msra.mxu0 0.0
    %1374 = vmatprep.subr.mxu0 0.0
    %1375 = vmatpush2.msra.mxu0 0.0
    %1376 = vmatprep.subr.mxu0 0.0
    %1377 = vmatpush2.msra.mxu0 0.0
    %1378 = vmatprep.subr.mxu0 0.0
    %1379 = vmatpush2.msra.mxu0 0.0
    %1380 = vmatprep.subr.mxu0 0.0
    %1381 = vmatpush2.msra.mxu0 0.0
    %1382 = vmatprep.subr.mxu0 0.0
    %1383 = vmatpush2.msra.mxu0 0.0
    %1384 = vmatprep.subr.mxu0 0.0
    %1385 = vmatpush2.msra.mxu0 0.0
    %1386 = vmatprep.subr.mxu0 0.0
    %1387 = vmatpush2.msra.mxu0 0.0
    %1388 = vmatprep.subr.mxu0 0.0
    %1389 = vmatpush2.msra.mxu0 0.0
    %1390 = vmatprep.subr.mxu0 0.0
    %1391 = vmatpush2.msra.mxu0 0.0
    %1392 = vmatprep.subr.mxu0 0.0
    %1393 = vmatpush2.msra.mxu0 0.0
    %1394 = vmatprep.subr.mxu0 0.0
    %1395 = vmatpush2.msra.mxu0 0.0
    %1396 = vmatprep.subr.mxu0 0.0
    %1397 = vmatpush2.msra.mxu0 0.0
    %1398 = vmatprep.subr.mxu0 0.0
    %1399 = vmatpush2.msra.mxu0 0.0
    %1400 = vmatprep.mubr.f32.mxu0 0.0
    %1401 = vmatmul.mubr.f32.gmra.mxu0 %v135
    %v1402 = vpop.f32.mrf.mxu0
    %v1403 = vadd.f32 0.0, %v1402
    %v1404 = vpop.f32.mrf.mxu0
    %1405 = vmatprep.mubr.f32.mxu0 0.0
    %1406 = vmatmul.mubr.f32.gmra.mxu0 %v138
    %v1407 = vpop.f32.mrf.mxu0
    %v1408 = vadd.f32 0.0, %v1407
    %v1409 = vpop.f32.mrf.mxu0
    %1410 = vmatprep.mubr.f32.mxu0 0.0
    %1411 = vmatmul.mubr.f32.gmra.mxu0 %v141
    %v1412 = vpop.f32.mrf.mxu0
    %v1413 = vadd.f32 0.0, %v1412
    %v1414 = vpop.f32.mrf.mxu0
    %1415 = vmatprep.mubr.f32.mxu0 0.0
    %1416 = vmatmul.mubr.f32.gmra.mxu0 %v144
    %v1417 = vpop.f32.mrf.mxu0
    %v1418 = vadd.f32 0.0, %v1417
    %v1419 = vpop.f32.mrf.mxu0
    %1420 = vdwg.mxu0
    %1421 = vmatprep.subr.mxu0 0.0
    %1422 = vmatpush1.msra.mxu0 0.0
    %1423 = vmatprep.subr.mxu0 0.0
    %1424 = vmatpush1.msra.mxu0 0.0
    %1425 = vmatprep.subr.mxu0 0.0
    %1426 = vmatpush1.msra.mxu0 0.0
    %1427 = vmatprep.subr.mxu0 0.0
    %1428 = vmatpush1.msra.mxu0 0.0
    %1429 = vmatprep.subr.mxu0 0.0
    %1430 = vmatpush1.msra.mxu0 0.0
    %1431 = vmatprep.subr.mxu0 0.0
    %1432 = vmatpush1.msra.mxu0 0.0
    %1433 = vmatprep.subr.mxu0 0.0
    %1434 = vmatpush1.msra.mxu0 0.0
    %1435 = vmatprep.subr.mxu0 0.0
    %1436 = vmatpush1.msra.mxu0 0.0
    %1437 = vmatprep.subr.mxu0 0.0
    %1438 = vmatpush1.msra.mxu0 0.0
    %1439 = vmatprep.subr.mxu0 0.0
    %1440 = vmatpush1.msra.mxu0 0.0
    %1441 = vmatprep.subr.mxu0 0.0
    %1442 = vmatpush1.msra.mxu0 %v120
    %1443 = vmatprep.subr.mxu0 0.0
    %1444 = vmatpush1.msra.mxu0 %v119
    %1445 = vmatprep.subr.mxu0 0.0
    %1446 = vmatpush1.msra.mxu0 %v118
    %1447 = vmatprep.subr.mxu0 0.0
    %1448 = vmatpush1.msra.mxu0 %v117
    %1449 = vmatprep.subr.mxu0 0.0
    %1450 = vmatpush1.msra.mxu0 %v116
    %1451 = vmatprep.subr.mxu0 0.0
    %1452 = vmatpush1.msra.mxu0 %v115
    %1453 = vmatprep.subr.mxu0 0.0
    %1454 = vmatpush2.msra.mxu0 0.0
    %1455 = vmatprep.subr.mxu0 0.0
    %1456 = vmatpush2.msra.mxu0 0.0
    %1457 = vmatprep.subr.mxu0 0.0
    %1458 = vmatpush2.msra.mxu0 0.0
    %1459 = vmatprep.subr.mxu0 0.0
    %1460 = vmatpush2.msra.mxu0 0.0
    %1461 = vmatprep.subr.mxu0 0.0
    %1462 = vmatpush2.msra.mxu0 0.0
    %1463 = vmatprep.subr.mxu0 0.0
    %1464 = vmatpush2.msra.mxu0 0.0
    %1465 = vmatprep.subr.mxu0 0.0
    %1466 = vmatpush2.msra.mxu0 0.0
    %1467 = vmatprep.subr.mxu0 0.0
    %1468 = vmatpush2.msra.mxu0 0.0
    %1469 = vmatprep.subr.mxu0 0.0
    %1470 = vmatpush2.msra.mxu0 0.0
    %1471 = vmatprep.subr.mxu0 0.0
    %1472 = vmatpush2.msra.mxu0 0.0
    %1473 = vmatprep.subr.mxu0 0.0
    %1474 = vmatpush2.msra.mxu0 0.0
    %1475 = vmatprep.subr.mxu0 0.0
    %1476 = vmatpush2.msra.mxu0 0.0
    %1477 = vmatprep.subr.mxu0 0.0
    %1478 = vmatpush2.msra.mxu0 0.0
    %1479 = vmatprep.subr.mxu0 0.0
    %1480 = vmatpush2.msra.mxu0 0.0
    %1481 = vmatprep.subr.mxu0 0.0
    %1482 = vmatpush2.msra.mxu0 0.0
    %1483 = vmatprep.subr.mxu0 0.0
    %1484 = vmatpush2.msra.mxu0 0.0
    %1485 = vmatprep.mubr.f32.mxu0 0.0
    %1486 = vmatmul.mubr.f32.gmra.mxu0 %v135
    %v1487 = vpop.f32.mrf.mxu0
    %v1488 = vadd.f32 0.0, %v1487
    %v1489 = vpop.f32.mrf.mxu0
    %1490 = vmatprep.mubr.f32.mxu0 0.0
    %1491 = vmatmul.mubr.f32.gmra.mxu0 %v138
    %v1492 = vpop.f32.mrf.mxu0
    %v1493 = vadd.f32 0.0, %v1492
    %v1494 = vpop.f32.mrf.mxu0
    %1495 = vmatprep.mubr.f32.mxu0 0.0
    %1496 = vmatmul.mubr.f32.gmra.mxu0 %v141
    %v1497 = vpop.f32.mrf.mxu0
    %v1498 = vadd.f32 0.0, %v1497
    %v1499 = vpop.f32.mrf.mxu0
    %1500 = vmatprep.mubr.f32.mxu0 0.0
    %1501 = vmatmul.mubr.f32.gmra.mxu0 %v144
    %v1502 = vpop.f32.mrf.mxu0
    %v1503 = vadd.f32 0.0, %v1502
    %v1504 = vpop.f32.mrf.mxu0
    %1505 = vdwg.mxu0
    %1506 = vmatprep.subr.mxu0 0.0
    %1507 = vmatpush1.msra.mxu0 0.0
    %1508 = vmatprep.subr.mxu0 0.0
    %1509 = vmatpush1.msra.mxu0 0.0
    %1510 = vmatprep.subr.mxu0 0.0
    %1511 = vmatpush1.msra.mxu0 0.0
    %1512 = vmatprep.subr.mxu0 0.0
    %1513 = vmatpush1.msra.mxu0 0.0
    %1514 = vmatprep.subr.mxu0 0.0
    %1515 = vmatpush1.msra.mxu0 0.0
    %1516 = vmatprep.subr.mxu0 0.0
    %1517 = vmatpush1.msra.mxu0 0.0
    %1518 = vmatprep.subr.mxu0 0.0
    %1519 = vmatpush1.msra.mxu0 0.0
    %1520 = vmatprep.subr.mxu0 0.0
    %1521 = vmatpush1.msra.mxu0 0.0
    %1522 = vmatprep.subr.mxu0 0.0
    %1523 = vmatpush1.msra.mxu0 0.0
    %1524 = vmatprep.subr.mxu0 0.0
    %1525 = vmatpush1.msra.mxu0 0.0
    %1526 = vmatprep.subr.mxu0 0.0
    %1527 = vmatpush1.msra.mxu0 %v126
    %1528 = vmatprep.subr.mxu0 0.0
    %1529 = vmatpush1.msra.mxu0 %v125
    %1530 = vmatprep.subr.mxu0 0.0
    %1531 = vmatpush1.msra.mxu0 %v124
    %1532 = vmatprep.subr.mxu0 0.0
    %1533 = vmatpush1.msra.mxu0 %v123
    %1534 = vmatprep.subr.mxu0 0.0
    %1535 = vmatpush1.msra.mxu0 %v122
    %1536 = vmatprep.subr.mxu0 0.0
    %1537 = vmatpush1.msra.mxu0 %v121
    %1538 = vmatprep.subr.mxu0 0.0
    %1539 = vmatpush2.msra.mxu0 0.0
    %1540 = vmatprep.subr.mxu0 0.0
    %1541 = vmatpush2.msra.mxu0 0.0
    %1542 = vmatprep.subr.mxu0 0.0
    %1543 = vmatpush2.msra.mxu0 0.0
    %1544 = vmatprep.subr.mxu0 0.0
    %1545 = vmatpush2.msra.mxu0 0.0
    %1546 = vmatprep.subr.mxu0 0.0
    %1547 = vmatpush2.msra.mxu0 0.0
    %1548 = vmatprep.subr.mxu0 0.0
    %1549 = vmatpush2.msra.mxu0 0.0
    %1550 = vmatprep.subr.mxu0 0.0
    %1551 = vmatpush2.msra.mxu0 0.0
    %1552 = vmatprep.subr.mxu0 0.0
    %1553 = vmatpush2.msra.mxu0 0.0
    %1554 = vmatprep.subr.mxu0 0.0
    %1555 = vmatpush2.msra.mxu0 0.0
    %1556 = vmatprep.subr.mxu0 0.0
    %1557 = vmatpush2.msra.mxu0 0.0
    %1558 = vmatprep.subr.mxu0 0.0
    %1559 = vmatpush2.msra.mxu0 0.0
    %1560 = vmatprep.subr.mxu0 0.0
    %1561 = vmatpush2.msra.mxu0 0.0
    %1562 = vmatprep.subr.mxu0 0.0
    %1563 = vmatpush2.msra.mxu0 0.0
    %1564 = vmatprep.subr.mxu0 0.0
    %1565 = vmatpush2.msra.mxu0 0.0
    %1566 = vmatprep.subr.mxu0 0.0
    %1567 = vmatpush2.msra.mxu0 0.0
    %1568 = vmatprep.subr.mxu0 0.0
    %1569 = vmatpush2.msra.mxu0 0.0
    %1570 = vmatprep.mubr.f32.mxu0 0.0
    %1571 = vmatmul.mubr.f32.gmra.mxu0 %v135
    %v1572 = vpop.f32.mrf.mxu0
    %v1573 = vadd.f32 0.0, %v1572
    %v1574 = vpop.f32.mrf.mxu0
    %1575 = vmatprep.mubr.f32.mxu0 0.0
    %1576 = vmatmul.mubr.f32.gmra.mxu0 %v138
    %v1577 = vpop.f32.mrf.mxu0
    %v1578 = vadd.f32 0.0, %v1577
    %v1579 = vpop.f32.mrf.mxu0
    %1580 = vmatprep.mubr.f32.mxu0 0.0
    %1581 = vmatmul.mubr.f32.gmra.mxu0 %v141
    %v1582 = vpop.f32.mrf.mxu0
    %v1583 = vadd.f32 0.0, %v1582
    %v1584 = vpop.f32.mrf.mxu0
    %1585 = vmatprep.mubr.f32.mxu0 0.0
    %1586 = vmatmul.mubr.f32.gmra.mxu0 %v144
    %v1587 = vpop.f32.mrf.mxu0
    %v1588 = vadd.f32 0.0, %v1587
    %v1589 = vpop.f32.mrf.mxu0
    %1590 = vdwg.mxu0
    %1591 = vmatprep.subr.mxu0 0.0
    %1592 = vmatpush1.msra.mxu0 0.0
    %1593 = vmatprep.subr.mxu0 0.0
    %1594 = vmatpush1.msra.mxu0 0.0
    %1595 = vmatprep.subr.mxu0 0.0
    %1596 = vmatpush1.msra.mxu0 0.0
    %1597 = vmatprep.subr.mxu0 0.0
    %1598 = vmatpush1.msra.mxu0 0.0
    %1599 = vmatprep.subr.mxu0 0.0
    %1600 = vmatpush1.msra.mxu0 0.0
    %1601 = vmatprep.subr.mxu0 0.0
    %1602 = vmatpush1.msra.mxu0 0.0
    %1603 = vmatprep.subr.mxu0 0.0
    %1604 = vmatpush1.msra.mxu0 0.0
    %1605 = vmatprep.subr.mxu0 0.0
    %1606 = vmatpush1.msra.mxu0 0.0
    %1607 = vmatprep.subr.mxu0 0.0
    %1608 = vmatpush1.msra.mxu0 0.0
    %1609 = vmatprep.subr.mxu0 0.0
    %1610 = vmatpush1.msra.mxu0 0.0
    %1611 = vmatprep.subr.mxu0 0.0
    %1612 = vmatpush1.msra.mxu0 %v132
    %1613 = vmatprep.subr.mxu0 0.0
    %1614 = vmatpush1.msra.mxu0 %v131
    %1615 = vmatprep.subr.mxu0 0.0
    %1616 = vmatpush1.msra.mxu0 %v130
    %1617 = vmatprep.subr.mxu0 0.0
    %1618 = vmatpush1.msra.mxu0 %v129
    %1619 = vmatprep.subr.mxu0 0.0
    %1620 = vmatpush1.msra.mxu0 %v128
    %1621 = vmatprep.subr.mxu0 0.0
    %1622 = vmatpush1.msra.mxu0 %v127
    %1623 = vmatprep.subr.mxu0 0.0
    %1624 = vmatpush2.msra.mxu0 0.0
    %1625 = vmatprep.subr.mxu0 0.0
    %1626 = vmatpush2.msra.mxu0 0.0
    %1627 = vmatprep.subr.mxu0 0.0
    %1628 = vmatpush2.msra.mxu0 0.0
    %1629 = vmatprep.subr.mxu0 0.0
    %1630 = vmatpush2.msra.mxu0 0.0
    %1631 = vmatprep.subr.mxu0 0.0
    %1632 = vmatpush2.msra.mxu0 0.0
    %1633 = vmatprep.subr.mxu0 0.0
    %1634 = vmatpush2.msra.mxu0 0.0
    %1635 = vmatprep.subr.mxu0 0.0
    %1636 = vmatpush2.msra.mxu0 0.0
    %1637 = vmatprep.subr.mxu0 0.0
    %1638 = vmatpush2.msra.mxu0 0.0
    %1639 = vmatprep.subr.mxu0 0.0
    %1640 = vmatpush2.msra.mxu0 0.0
    %1641 = vmatprep.subr.mxu0 0.0
    %1642 = vmatpush2.msra.mxu0 0.0
    %1643 = vmatprep.subr.mxu0 0.0
    %1644 = vmatpush2.msra.mxu0 0.0
    %1645 = vmatprep.subr.mxu0 0.0
    %1646 = vmatpush2.msra.mxu0 0.0
    %1647 = vmatprep.subr.mxu0 0.0
    %1648 = vmatpush2.msra.mxu0 0.0
    %1649 = vmatprep.subr.mxu0 0.0
    %1650 = vmatpush2.msra.mxu0 0.0
    %1651 = vmatprep.subr.mxu0 0.0
    %1652 = vmatpush2.msra.mxu0 0.0
    %1653 = vmatprep.subr.mxu0 0.0
    %1654 = vmatpush2.msra.mxu0 0.0
    %1655 = vmatprep.mubr.f32.mxu0 0.0
    %1656 = vmatmul.mubr.f32.gmra.mxu0 %v135
    %v1657 = vpop.f32.mrf.mxu0
    %v1658 = vadd.f32 0.0, %v1657
    %v1659 = vpop.f32.mrf.mxu0
    %1660 = vmatprep.mubr.f32.mxu0 0.0
    %1661 = vmatmul.mubr.f32.gmra.mxu0 %v138
    %v1662 = vpop.f32.mrf.mxu0
    %v1663 = vadd.f32 0.0, %v1662
    %v1664 = vpop.f32.mrf.mxu0
    %1665 = vmatprep.mubr.f32.mxu0 0.0
    %1666 = vmatmul.mubr.f32.gmra.mxu0 %v141
    %v1667 = vpop.f32.mrf.mxu0
    %v1668 = vadd.f32 0.0, %v1667
    %v1669 = vpop.f32.mrf.mxu0
    %1670 = vmatprep.mubr.f32.mxu0 0.0
    %1671 = vmatmul.mubr.f32.gmra.mxu0 %v144
    %v1672 = vpop.f32.mrf.mxu0
    %v1673 = vadd.f32 0.0, %v1672
    %v1674 = vpop.f32.mrf.mxu0
    %1675 = vdwg.mxu0
    %v1676 = vld [vmem:[%s4] sm:$0xff]
    %v1677 = vld [vmem:[%s4 + $0x8] sm:$0xff]
    %v1678 = vld [vmem:[%s4 + $0x10] sm:$0xff]
    %v1679 = vld [vmem:[%s4 + $0x18] sm:$0xff]
    %vm1680 = vcmask 64512
    %v1682 = vsel %vm1680, %v213, 0
    %v1685 = vsel %vm1680, %v218, 0
    %v1688 = vsel %vm1680, %v223, 0
    %v1691 = vsel %vm1680, %v228, 0
    %v1694 = vsel %vm1680, %v723, 0
    %v1697 = vsel %vm1680, %v728, 0
    %v1700 = vsel %vm1680, %v733, 0
    %v1703 = vsel %vm1680, %v738, 0
    %1705 = vmatprep.subr.mxu0 0.0
    %1706 = vmatpush1.xpose.msra.mxu0 0.0
    %1707 = vmatprep.subr.mxu0 0.0
    %1708 = vmatpush1.xpose.msra.mxu0 0.0
    %1709 = vmatprep.subr.mxu0 0.0
    %1710 = vmatpush1.xpose.msra.mxu0 0.0
    %1711 = vmatprep.subr.mxu0 0.0
    %1712 = vmatpush1.xpose.msra.mxu0 0.0
    %1713 = vmatprep.subr.mxu0 0.0
    %1714 = vmatpush1.xpose.msra.mxu0 0.0
    %1715 = vmatprep.subr.mxu0 0.0
    %1716 = vmatpush1.xpose.msra.mxu0 0.0
    %1717 = vmatprep.subr.mxu0 0.0
    %1718 = vmatpush1.xpose.msra.mxu0 0.0
    %1719 = vmatprep.subr.mxu0 0.0
    %1720 = vmatpush1.xpose.msra.mxu0 0.0
    %1721 = vmatprep.subr.mxu0 0.0
    %1722 = vmatpush1.xpose.msra.mxu0 0.0
    %1723 = vmatprep.subr.mxu0 0.0
    %1724 = vmatpush1.xpose.msra.mxu0 0.0
    %1725 = vmatprep.subr.mxu0 0.0
    %1726 = vmatpush1.xpose.msra.mxu0 0.0
    %1727 = vmatprep.subr.mxu0 0.0
    %1728 = vmatpush1.xpose.msra.mxu0 0.0
    %1729 = vmatprep.subr.mxu0 0.0
    %1730 = vmatpush1.xpose.msra.mxu0 %v1703
    %1731 = vmatprep.subr.mxu0 0.0
    %1732 = vmatpush1.xpose.msra.mxu0 %v1700
    %1733 = vmatprep.subr.mxu0 0.0
    %1734 = vmatpush1.xpose.msra.mxu0 %v1697
    %1735 = vmatprep.subr.mxu0 0.0
    %1736 = vmatpush1.xpose.msra.mxu0 %v1694
    %1737 = vmatprep.subr.mxu0 0.0
    %1738 = vmatpush2.xpose.msra.mxu0 0.0
    %1739 = vmatprep.subr.mxu0 0.0
    %1740 = vmatpush2.xpose.msra.mxu0 0.0
    %1741 = vmatprep.subr.mxu0 0.0
    %1742 = vmatpush2.xpose.msra.mxu0 0.0
    %1743 = vmatprep.subr.mxu0 0.0
    %1744 = vmatpush2.xpose.msra.mxu0 0.0
    %1745 = vmatprep.subr.mxu0 0.0
    %1746 = vmatpush2.xpose.msra.mxu0 0.0
    %1747 = vmatprep.subr.mxu0 0.0
    %1748 = vmatpush2.xpose.msra.mxu0 0.0
    %1749 = vmatprep.subr.mxu0 0.0
    %1750 = vmatpush2.xpose.msra.mxu0 0.0
    %1751 = vmatprep.subr.mxu0 0.0
    %1752 = vmatpush2.xpose.msra.mxu0 0.0
    %1753 = vmatprep.subr.mxu0 0.0
    %1754 = vmatpush2.xpose.msra.mxu0 0.0
    %1755 = vmatprep.subr.mxu0 0.0
    %1756 = vmatpush2.xpose.msra.mxu0 0.0
    %1757 = vmatprep.subr.mxu0 0.0
    %1758 = vmatpush2.xpose.msra.mxu0 0.0
    %1759 = vmatprep.subr.mxu0 0.0
    %1760 = vmatpush2.xpose.msra.mxu0 0.0
    %1761 = vmatprep.subr.mxu0 0.0
    %1762 = vmatpush2.xpose.msra.mxu0 0.0
    %1763 = vmatprep.subr.mxu0 0.0
    %1764 = vmatpush2.xpose.msra.mxu0 0.0
    %1765 = vmatprep.subr.mxu0 0.0
    %1766 = vmatpush2.xpose.msra.mxu0 0.0
    %1767 = vmatprep.subr.mxu0 0.0
    %1768 = vmatpush2.xpose.msra.mxu0 0.0
    %1769 = vmatprep.mubr.f32.mxu0 0.0
    %1770 = vmatmul.mubr.f32.gmra.mxu0 %v1682
    %v1771 = vpop.f32.mrf.mxu0
    %v1772 = vadd.f32 %v1676, %v1771
    %v1773 = vpop.f32.mrf.mxu0
    %1774 = vmatprep.mubr.f32.mxu0 0.0
    %1775 = vmatmul.mubr.f32.gmra.mxu0 %v1685
    %v1776 = vpop.f32.mrf.mxu0
    %v1777 = vadd.f32 %v1677, %v1776
    %v1778 = vpop.f32.mrf.mxu0
    %1779 = vmatprep.mubr.f32.mxu0 0.0
    %1780 = vmatmul.mubr.f32.gmra.mxu0 %v1688
    %v1781 = vpop.f32.mrf.mxu0
    %v1782 = vadd.f32 %v1678, %v1781
    %v1783 = vpop.f32.mrf.mxu0
    %1784 = vmatprep.mubr.f32.mxu0 0.0
    %1785 = vmatmul.mubr.f32.gmra.mxu0 %v1691
    %v1786 = vpop.f32.mrf.mxu0
    %v1787 = vadd.f32 %v1679, %v1786
    %v1788 = vpop.f32.mrf.mxu0
    %1789 = vdwg.mxu0
    %v1791 = vsel %vm1680, %v298, 0
    %v1794 = vsel %vm1680, %v303, 0
    %v1797 = vsel %vm1680, %v308, 0
    %v1800 = vsel %vm1680, %v313, 0
    %v1803 = vsel %vm1680, %v808, 0
    %v1806 = vsel %vm1680, %v813, 0
    %v1809 = vsel %vm1680, %v818, 0
    %v1812 = vsel %vm1680, %v823, 0
    %1814 = vmatprep.subr.mxu0 0.0
    %1815 = vmatpush1.xpose.msra.mxu0 0.0
    %1816 = vmatprep.subr.mxu0 0.0
    %1817 = vmatpush1.xpose.msra.mxu0 0.0
    %1818 = vmatprep.subr.mxu0 0.0
    %1819 = vmatpush1.xpose.msra.mxu0 0.0
    %1820 = vmatprep.subr.mxu0 0.0
    %1821 = vmatpush1.xpose.msra.mxu0 0.0
    %1822 = vmatprep.subr.mxu0 0.0
    %1823 = vmatpush1.xpose.msra.mxu0 0.0
    %1824 = vmatprep.subr.mxu0 0.0
    %1825 = vmatpush1.xpose.msra.mxu0 0.0
    %1826 = vmatprep.subr.mxu0 0.0
    %1827 = vmatpush1.xpose.msra.mxu0 0.0
    %1828 = vmatprep.subr.mxu0 0.0
    %1829 = vmatpush1.xpose.msra.mxu0 0.0
    %1830 = vmatprep.subr.mxu0 0.0
    %1831 = vmatpush1.xpose.msra.mxu0 0.0
    %1832 = vmatprep.subr.mxu0 0.0
    %1833 = vmatpush1.xpose.msra.mxu0 0.0
    %1834 = vmatprep.subr.mxu0 0.0
    %1835 = vmatpush1.xpose.msra.mxu0 0.0
    %1836 = vmatprep.subr.mxu0 0.0
    %1837 = vmatpush1.xpose.msra.mxu0 0.0
    %1838 = vmatprep.subr.mxu0 0.0
    %1839 = vmatpush1.xpose.msra.mxu0 %v1812
    %1840 = vmatprep.subr.mxu0 0.0
    %1841 = vmatpush1.xpose.msra.mxu0 %v1809
    %1842 = vmatprep.subr.mxu0 0.0
    %1843 = vmatpush1.xpose.msra.mxu0 %v1806
    %1844 = vmatprep.subr.mxu0 0.0
    %1845 = vmatpush1.xpose.msra.mxu0 %v1803
    %1846 = vmatprep.subr.mxu0 0.0
    %1847 = vmatpush2.xpose.msra.mxu0 0.0
    %1848 = vmatprep.subr.mxu0 0.0
    %1849 = vmatpush2.xpose.msra.mxu0 0.0
    %1850 = vmatprep.subr.mxu0 0.0
    %1851 = vmatpush2.xpose.msra.mxu0 0.0
    %1852 = vmatprep.subr.mxu0 0.0
    %1853 = vmatpush2.xpose.msra.mxu0 0.0
    %1854 = vmatprep.subr.mxu0 0.0
    %1855 = vmatpush2.xpose.msra.mxu0 0.0
    %1856 = vmatprep.subr.mxu0 0.0
    %1857 = vmatpush2.xpose.msra.mxu0 0.0
    %1858 = vmatprep.subr.mxu0 0.0
    %1859 = vmatpush2.xpose.msra.mxu0 0.0
    %1860 = vmatprep.subr.mxu0 0.0
    %1861 = vmatpush2.xpose.msra.mxu0 0.0
    %1862 = vmatprep.subr.mxu0 0.0
    %1863 = vmatpush2.xpose.msra.mxu0 0.0
    %1864 = vmatprep.subr.mxu0 0.0
    %1865 = vmatpush2.xpose.msra.mxu0 0.0
    %1866 = vmatprep.subr.mxu0 0.0
    %1867 = vmatpush2.xpose.msra.mxu0 0.0
    %1868 = vmatprep.subr.mxu0 0.0
    %1869 = vmatpush2.xpose.msra.mxu0 0.0
    %1870 = vmatprep.subr.mxu0 0.0
    %1871 = vmatpush2.xpose.msra.mxu0 0.0
    %1872 = vmatprep.subr.mxu0 0.0
    %1873 = vmatpush2.xpose.msra.mxu0 0.0
    %1874 = vmatprep.subr.mxu0 0.0
    %1875 = vmatpush2.xpose.msra.mxu0 0.0
    %1876 = vmatprep.subr.mxu0 0.0
    %1877 = vmatpush2.xpose.msra.mxu0 0.0
    %1878 = vmatprep.mubr.f32.mxu0 0.0
    %1879 = vmatmul.mubr.f32.gmra.mxu0 %v1791
    %v1880 = vpop.f32.mrf.mxu0
    %v1881 = vadd.f32 %v1676, %v1880
    %v1882 = vpop.f32.mrf.mxu0
    %1883 = vmatprep.mubr.f32.mxu0 0.0
    %1884 = vmatmul.mubr.f32.gmra.mxu0 %v1794
    %v1885 = vpop.f32.mrf.mxu0
    %v1886 = vadd.f32 %v1677, %v1885
    %v1887 = vpop.f32.mrf.mxu0
    %1888 = vmatprep.mubr.f32.mxu0 0.0
    %1889 = vmatmul.mubr.f32.gmra.mxu0 %v1797
    %v1890 = vpop.f32.mrf.mxu0
    %v1891 = vadd.f32 %v1678, %v1890
    %v1892 = vpop.f32.mrf.mxu0
    %1893 = vmatprep.mubr.f32.mxu0 0.0
    %1894 = vmatmul.mubr.f32.gmra.mxu0 %v1800
    %v1895 = vpop.f32.mrf.mxu0
    %v1896 = vadd.f32 %v1679, %v1895
    %v1897 = vpop.f32.mrf.mxu0
    %1898 = vdwg.mxu0
    %v1900 = vsel %vm1680, %v383, 0
    %v1903 = vsel %vm1680, %v388, 0
    %v1906 = vsel %vm1680, %v393, 0
    %v1909 = vsel %vm1680, %v398, 0
    %v1912 = vsel %vm1680, %v893, 0
    %v1915 = vsel %vm1680, %v898, 0
    %v1918 = vsel %vm1680, %v903, 0
    %v1921 = vsel %vm1680, %v908, 0
    %1923 = vmatprep.subr.mxu0 0.0
    %1924 = vmatpush1.xpose.msra.mxu0 0.0
    %1925 = vmatprep.subr.mxu0 0.0
    %1926 = vmatpush1.xpose.msra.mxu0 0.0
    %1927 = vmatprep.subr.mxu0 0.0
    %1928 = vmatpush1.xpose.msra.mxu0 0.0
    %1929 = vmatprep.subr.mxu0 0.0
    %1930 = vmatpush1.xpose.msra.mxu0 0.0
    %1931 = vmatprep.subr.mxu0 0.0
    %1932 = vmatpush1.xpose.msra.mxu0 0.0
    %1933 = vmatprep.subr.mxu0 0.0
    %1934 = vmatpush1.xpose.msra.mxu0 0.0
    %1935 = vmatprep.subr.mxu0 0.0
    %1936 = vmatpush1.xpose.msra.mxu0 0.0
    %1937 = vmatprep.subr.mxu0 0.0
    %1938 = vmatpush1.xpose.msra.mxu0 0.0
    %1939 = vmatprep.subr.mxu0 0.0
    %1940 = vmatpush1.xpose.msra.mxu0 0.0
    %1941 = vmatprep.subr.mxu0 0.0
    %1942 = vmatpush1.xpose.msra.mxu0 0.0
    %1943 = vmatprep.subr.mxu0 0.0
    %1944 = vmatpush1.xpose.msra.mxu0 0.0
    %1945 = vmatprep.subr.mxu0 0.0
    %1946 = vmatpush1.xpose.msra.mxu0 0.0
    %1947 = vmatprep.subr.mxu0 0.0
    %1948 = vmatpush1.xpose.msra.mxu0 %v1921
    %1949 = vmatprep.subr.mxu0 0.0
    %1950 = vmatpush1.xpose.msra.mxu0 %v1918
    %1951 = vmatprep.subr.mxu0 0.0
    %1952 = vmatpush1.xpose.msra.mxu0 %v1915
    %1953 = vmatprep.subr.mxu0 0.0
    %1954 = vmatpush1.xpose.msra.mxu0 %v1912
    %1955 = vmatprep.subr.mxu0 0.0
    %1956 = vmatpush2.xpose.msra.mxu0 0.0
    %1957 = vmatprep.subr.mxu0 0.0
    %1958 = vmatpush2.xpose.msra.mxu0 0.0
    %1959 = vmatprep.subr.mxu0 0.0
    %1960 = vmatpush2.xpose.msra.mxu0 0.0
    %1961 = vmatprep.subr.mxu0 0.0
    %1962 = vmatpush2.xpose.msra.mxu0 0.0
    %1963 = vmatprep.subr.mxu0 0.0
    %1964 = vmatpush2.xpose.msra.mxu0 0.0
    %1965 = vmatprep.subr.mxu0 0.0
    %1966 = vmatpush2.xpose.msra.mxu0 0.0
    %1967 = vmatprep.subr.mxu0 0.0
    %1968 = vmatpush2.xpose.msra.mxu0 0.0
    %1969 = vmatprep.subr.mxu0 0.0
    %1970 = vmatpush2.xpose.msra.mxu0 0.0
    %1971 = vmatprep.subr.mxu0 0.0
    %1972 = vmatpush2.xpose.msra.mxu0 0.0
    %1973 = vmatprep.subr.mxu0 0.0
    %1974 = vmatpush2.xpose.msra.mxu0 0.0
    %1975 = vmatprep.subr.mxu0 0.0
    %1976 = vmatpush2.xpose.msra.mxu0 0.0
    %1977 = vmatprep.subr.mxu0 0.0
    %1978 = vmatpush2.xpose.msra.mxu0 0.0
    %1979 = vmatprep.subr.mxu0 0.0
    %1980 = vmatpush2.xpose.msra.mxu0 0.0
    %1981 = vmatprep.subr.mxu0 0.0
    %1982 = vmatpush2.xpose.msra.mxu0 0.0
    %1983 = vmatprep.subr.mxu0 0.0
    %1984 = vmatpush2.xpose.msra.mxu0 0.0
    %1985 = vmatprep.subr.mxu0 0.0
    %1986 = vmatpush2.xpose.msra.mxu0 0.0
    %1987 = vmatprep.mubr.f32.mxu0 0.0
    %1988 = vmatmul.mubr.f32.gmra.mxu0 %v1900
    %v1989 = vpop.f32.mrf.mxu0
    %v1990 = vadd.f32 %v1676, %v1989
    %v1991 = vpop.f32.mrf.mxu0
    %1992 = vmatprep.mubr.f32.mxu0 0.0
    %1993 = vmatmul.mubr.f32.gmra.mxu0 %v1903
    %v1994 = vpop.f32.mrf.mxu0
    %v1995 = vadd.f32 %v1677, %v1994
    %v1996 = vpop.f32.mrf.mxu0
    %1997 = vmatprep.mubr.f32.mxu0 0.0
    %1998 = vmatmul.mubr.f32.gmra.mxu0 %v1906
    %v1999 = vpop.f32.mrf.mxu0
    %v2000 = vadd.f32 %v1678, %v1999
    %v2001 = vpop.f32.mrf.mxu0
    %2002 = vmatprep.mubr.f32.mxu0 0.0
    %2003 = vmatmul.mubr.f32.gmra.mxu0 %v1909
    %v2004 = vpop.f32.mrf.mxu0
    %v2005 = vadd.f32 %v1679, %v2004
    %v2006 = vpop.f32.mrf.mxu0
    %2007 = vdwg.mxu0
    %v2009 = vsel %vm1680, %v468, 0
    %v2012 = vsel %vm1680, %v473, 0
    %v2015 = vsel %vm1680, %v478, 0
    %v2018 = vsel %vm1680, %v483, 0
    %v2021 = vsel %vm1680, %v978, 0
    %v2024 = vsel %vm1680, %v983, 0
    %v2027 = vsel %vm1680, %v988, 0
    %v2030 = vsel %vm1680, %v993, 0
    %2032 = vmatprep.subr.mxu0 0.0
    %2033 = vmatpush1.xpose.msra.mxu0 0.0
    %2034 = vmatprep.subr.mxu0 0.0
    %2035 = vmatpush1.xpose.msra.mxu0 0.0
    %2036 = vmatprep.subr.mxu0 0.0
    %2037 = vmatpush1.xpose.msra.mxu0 0.0
    %2038 = vmatprep.subr.mxu0 0.0
    %2039 = vmatpush1.xpose.msra.mxu0 0.0
    %2040 = vmatprep.subr.mxu0 0.0
    %2041 = vmatpush1.xpose.msra.mxu0 0.0
    %2042 = vmatprep.subr.mxu0 0.0
    %2043 = vmatpush1.xpose.msra.mxu0 0.0
    %2044 = vmatprep.subr.mxu0 0.0
    %2045 = vmatpush1.xpose.msra.mxu0 0.0
    %2046 = vmatprep.subr.mxu0 0.0
    %2047 = vmatpush1.xpose.msra.mxu0 0.0
    %2048 = vmatprep.subr.mxu0 0.0
    %2049 = vmatpush1.xpose.msra.mxu0 0.0
    %2050 = vmatprep.subr.mxu0 0.0
    %2051 = vmatpush1.xpose.msra.mxu0 0.0
    %2052 = vmatprep.subr.mxu0 0.0
    %2053 = vmatpush1.xpose.msra.mxu0 0.0
    %2054 = vmatprep.subr.mxu0 0.0
    %2055 = vmatpush1.xpose.msra.mxu0 0.0
    %2056 = vmatprep.subr.mxu0 0.0
    %2057 = vmatpush1.xpose.msra.mxu0 %v2030
    %2058 = vmatprep.subr.mxu0 0.0
    %2059 = vmatpush1.xpose.msra.mxu0 %v2027
    %2060 = vmatprep.subr.mxu0 0.0
    %2061 = vmatpush1.xpose.msra.mxu0 %v2024
    %2062 = vmatprep.subr.mxu0 0.0
    %2063 = vmatpush1.xpose.msra.mxu0 %v2021
    %2064 = vmatprep.subr.mxu0 0.0
    %2065 = vmatpush2.xpose.msra.mxu0 0.0
    %2066 = vmatprep.subr.mxu0 0.0
    %2067 = vmatpush2.xpose.msra.mxu0 0.0
    %2068 = vmatprep.subr.mxu0 0.0
    %2069 = vmatpush2.xpose.msra.mxu0 0.0
    %2070 = vmatprep.subr.mxu0 0.0
    %2071 = vmatpush2.xpose.msra.mxu0 0.0
    %2072 = vmatprep.subr.mxu0 0.0
    %2073 = vmatpush2.xpose.msra.mxu0 0.0
    %2074 = vmatprep.subr.mxu0 0.0
    %2075 = vmatpush2.xpose.msra.mxu0 0.0
    %2076 = vmatprep.subr.mxu0 0.0
    %2077 = vmatpush2.xpose.msra.mxu0 0.0
    %2078 = vmatprep.subr.mxu0 0.0
    %2079 = vmatpush2.xpose.msra.mxu0 0.0
    %2080 = vmatprep.subr.mxu0 0.0
    %2081 = vmatpush2.xpose.msra.mxu0 0.0
    %2082 = vmatprep.subr.mxu0 0.0
    %2083 = vmatpush2.xpose.msra.mxu0 0.0
    %2084 = vmatprep.subr.mxu0 0.0
    %2085 = vmatpush2.xpose.msra.mxu0 0.0
    %2086 = vmatprep.subr.mxu0 0.0
    %2087 = vmatpush2.xpose.msra.mxu0 0.0
    %2088 = vmatprep.subr.mxu0 0.0
    %2089 = vmatpush2.xpose.msra.mxu0 0.0
    %2090 = vmatprep.subr.mxu0 0.0
    %2091 = vmatpush2.xpose.msra.mxu0 0.0
    %2092 = vmatprep.subr.mxu0 0.0
    %2093 = vmatpush2.xpose.msra.mxu0 0.0
    %2094 = vmatprep.subr.mxu0 0.0
    %2095 = vmatpush2.xpose.msra.mxu0 0.0
    %2096 = vmatprep.mubr.f32.mxu0 0.0
    %2097 = vmatmul.mubr.f32.gmra.mxu0 %v2009
    %v2098 = vpop.f32.mrf.mxu0
    %v2099 = vadd.f32 %v1676, %v2098
    %v2100 = vpop.f32.mrf.mxu0
    %2101 = vmatprep.mubr.f32.mxu0 0.0
    %2102 = vmatmul.mubr.f32.gmra.mxu0 %v2012
    %v2103 = vpop.f32.mrf.mxu0
    %v2104 = vadd.f32 %v1677, %v2103
    %v2105 = vpop.f32.mrf.mxu0
    %2106 = vmatprep.mubr.f32.mxu0 0.0
    %2107 = vmatmul.mubr.f32.gmra.mxu0 %v2015
    %v2108 = vpop.f32.mrf.mxu0
    %v2109 = vadd.f32 %v1678, %v2108
    %v2110 = vpop.f32.mrf.mxu0
    %2111 = vmatprep.mubr.f32.mxu0 0.0
    %2112 = vmatmul.mubr.f32.gmra.mxu0 %v2018
    %v2113 = vpop.f32.mrf.mxu0
    %v2114 = vadd.f32 %v1679, %v2113
    %v2115 = vpop.f32.mrf.mxu0
    %2116 = vdwg.mxu0
    %v2118 = vsel %vm1680, %v553, 0
    %v2121 = vsel %vm1680, %v558, 0
    %v2124 = vsel %vm1680, %v563, 0
    %v2127 = vsel %vm1680, %v568, 0
    %v2130 = vsel %vm1680, %v1063, 0
    %v2133 = vsel %vm1680, %v1068, 0
    %v2136 = vsel %vm1680, %v1073, 0
    %v2139 = vsel %vm1680, %v1078, 0
    %2141 = vmatprep.subr.mxu0 0.0
    %2142 = vmatpush1.xpose.msra.mxu0 0.0
    %2143 = vmatprep.subr.mxu0 0.0
    %2144 = vmatpush1.xpose.msra.mxu0 0.0
    %2145 = vmatprep.subr.mxu0 0.0
    %2146 = vmatpush1.xpose.msra.mxu0 0.0
    %2147 = vmatprep.subr.mxu0 0.0
    %2148 = vmatpush1.xpose.msra.mxu0 0.0
    %2149 = vmatprep.subr.mxu0 0.0
    %2150 = vmatpush1.xpose.msra.mxu0 0.0
    %2151 = vmatprep.subr.mxu0 0.0
    %2152 = vmatpush1.xpose.msra.mxu0 0.0
    %2153 = vmatprep.subr.mxu0 0.0
    %2154 = vmatpush1.xpose.msra.mxu0 0.0
    %2155 = vmatprep.subr.mxu0 0.0
    %2156 = vmatpush1.xpose.msra.mxu0 0.0
    %2157 = vmatprep.subr.mxu0 0.0
    %2158 = vmatpush1.xpose.msra.mxu0 0.0
    %2159 = vmatprep.subr.mxu0 0.0
    %2160 = vmatpush1.xpose.msra.mxu0 0.0
    %2161 = vmatprep.subr.mxu0 0.0
    %2162 = vmatpush1.xpose.msra.mxu0 0.0
    %2163 = vmatprep.subr.mxu0 0.0
    %2164 = vmatpush1.xpose.msra.mxu0 0.0
    %2165 = vmatprep.subr.mxu0 0.0
    %2166 = vmatpush1.xpose.msra.mxu0 %v2139
    %2167 = vmatprep.subr.mxu0 0.0
    %2168 = vmatpush1.xpose.msra.mxu0 %v2136
    %2169 = vmatprep.subr.mxu0 0.0
    %2170 = vmatpush1.xpose.msra.mxu0 %v2133
    %2171 = vmatprep.subr.mxu0 0.0
    %2172 = vmatpush1.xpose.msra.mxu0 %v2130
    %2173 = vmatprep.subr.mxu0 0.0
    %2174 = vmatpush2.xpose.msra.mxu0 0.0
    %2175 = vmatprep.subr.mxu0 0.0
    %2176 = vmatpush2.xpose.msra.mxu0 0.0
    %2177 = vmatprep.subr.mxu0 0.0
    %2178 = vmatpush2.xpose.msra.mxu0 0.0
    %2179 = vmatprep.subr.mxu0 0.0
    %2180 = vmatpush2.xpose.msra.mxu0 0.0
    %2181 = vmatprep.subr.mxu0 0.0
    %2182 = vmatpush2.xpose.msra.mxu0 0.0
    %2183 = vmatprep.subr.mxu0 0.0
    %2184 = vmatpush2.xpose.msra.mxu0 0.0
    %2185 = vmatprep.subr.mxu0 0.0
    %2186 = vmatpush2.xpose.msra.mxu0 0.0
    %2187 = vmatprep.subr.mxu0 0.0
    %2188 = vmatpush2.xpose.msra.mxu0 0.0
    %2189 = vmatprep.subr.mxu0 0.0
    %2190 = vmatpush2.xpose.msra.mxu0 0.0
    %2191 = vmatprep.subr.mxu0 0.0
    %2192 = vmatpush2.xpose.msra.mxu0 0.0
    %2193 = vmatprep.subr.mxu0 0.0
    %2194 = vmatpush2.xpose.msra.mxu0 0.0
    %2195 = vmatprep.subr.mxu0 0.0
    %2196 = vmatpush2.xpose.msra.mxu0 0.0
    %2197 = vmatprep.subr.mxu0 0.0
    %2198 = vmatpush2.xpose.msra.mxu0 0.0
    %2199 = vmatprep.subr.mxu0 0.0
    %2200 = vmatpush2.xpose.msra.mxu0 0.0
    %2201 = vmatprep.subr.mxu0 0.0
    %2202 = vmatpush2.xpose.msra.mxu0 0.0
    %2203 = vmatprep.subr.mxu0 0.0
    %2204 = vmatpush2.xpose.msra.mxu0 0.0
    %2205 = vmatprep.mubr.f32.mxu0 0.0
    %2206 = vmatmul.mubr.f32.gmra.mxu0 %v2118
    %v2207 = vpop.f32.mrf.mxu0
    %v2208 = vadd.f32 %v1676, %v2207
    %v2209 = vpop.f32.mrf.mxu0
    %2210 = vmatprep.mubr.f32.mxu0 0.0
    %2211 = vmatmul.mubr.f32.gmra.mxu0 %v2121
    %v2212 = vpop.f32.mrf.mxu0
    %v2213 = vadd.f32 %v1677, %v2212
    %v2214 = vpop.f32.mrf.mxu0
    %2215 = vmatprep.mubr.f32.mxu0 0.0
    %2216 = vmatmul.mubr.f32.gmra.mxu0 %v2124
    %v2217 = vpop.f32.mrf.mxu0
    %v2218 = vadd.f32 %v1678, %v2217
    %v2219 = vpop.f32.mrf.mxu0
    %2220 = vmatprep.mubr.f32.mxu0 0.0
    %2221 = vmatmul.mubr.f32.gmra.mxu0 %v2127
    %v2222 = vpop.f32.mrf.mxu0
    %v2223 = vadd.f32 %v1679, %v2222
    %v2224 = vpop.f32.mrf.mxu0
    %2225 = vdwg.mxu0
    %v2227 = vsel %vm1680, %v638, 0
    %v2230 = vsel %vm1680, %v643, 0
    %v2233 = vsel %vm1680, %v648, 0
    %v2236 = vsel %vm1680, %v653, 0
    %v2239 = vsel %vm1680, %v1148, 0
    %v2242 = vsel %vm1680, %v1153, 0
    %v2245 = vsel %vm1680, %v1158, 0
    %v2248 = vsel %vm1680, %v1163, 0
    %2250 = vmatprep.subr.mxu0 0.0
    %2251 = vmatpush1.xpose.msra.mxu0 0.0
    %2252 = vmatprep.subr.mxu0 0.0
    %2253 = vmatpush1.xpose.msra.mxu0 0.0
    %2254 = vmatprep.subr.mxu0 0.0
    %2255 = vmatpush1.xpose.msra.mxu0 0.0
    %2256 = vmatprep.subr.mxu0 0.0
    %2257 = vmatpush1.xpose.msra.mxu0 0.0
    %2258 = vmatprep.subr.mxu0 0.0
    %2259 = vmatpush1.xpose.msra.mxu0 0.0
    %2260 = vmatprep.subr.mxu0 0.0
    %2261 = vmatpush1.xpose.msra.mxu0 0.0
    %2262 = vmatprep.subr.mxu0 0.0
    %2263 = vmatpush1.xpose.msra.mxu0 0.0
    %2264 = vmatprep.subr.mxu0 0.0
    %2265 = vmatpush1.xpose.msra.mxu0 0.0
    %2266 = vmatprep.subr.mxu0 0.0
    %2267 = vmatpush1.xpose.msra.mxu0 0.0
    %2268 = vmatprep.subr.mxu0 0.0
    %2269 = vmatpush1.xpose.msra.mxu0 0.0
    %2270 = vmatprep.subr.mxu0 0.0
    %2271 = vmatpush1.xpose.msra.mxu0 0.0
    %2272 = vmatprep.subr.mxu0 0.0
    %2273 = vmatpush1.xpose.msra.mxu0 0.0
    %2274 = vmatprep.subr.mxu0 0.0
    %2275 = vmatpush1.xpose.msra.mxu0 %v2248
    %2276 = vmatprep.subr.mxu0 0.0
    %2277 = vmatpush1.xpose.msra.mxu0 %v2245
    %2278 = vmatprep.subr.mxu0 0.0
    %2279 = vmatpush1.xpose.msra.mxu0 %v2242
    %2280 = vmatprep.subr.mxu0 0.0
    %2281 = vmatpush1.xpose.msra.mxu0 %v2239
    %2282 = vmatprep.subr.mxu0 0.0
    %2283 = vmatpush2.xpose.msra.mxu0 0.0
    %2284 = vmatprep.subr.mxu0 0.0
    %2285 = vmatpush2.xpose.msra.mxu0 0.0
    %2286 = vmatprep.subr.mxu0 0.0
    %2287 = vmatpush2.xpose.msra.mxu0 0.0
    %2288 = vmatprep.subr.mxu0 0.0
    %2289 = vmatpush2.xpose.msra.mxu0 0.0
    %2290 = vmatprep.subr.mxu0 0.0
    %2291 = vmatpush2.xpose.msra.mxu0 0.0
    %2292 = vmatprep.subr.mxu0 0.0
    %2293 = vmatpush2.xpose.msra.mxu0 0.0
    %2294 = vmatprep.subr.mxu0 0.0
    %2295 = vmatpush2.xpose.msra.mxu0 0.0
    %2296 = vmatprep.subr.mxu0 0.0
    %2297 = vmatpush2.xpose.msra.mxu0 0.0
    %2298 = vmatprep.subr.mxu0 0.0
    %2299 = vmatpush2.xpose.msra.mxu0 0.0
    %2300 = vmatprep.subr.mxu0 0.0
    %2301 = vmatpush2.xpose.msra.mxu0 0.0
    %2302 = vmatprep.subr.mxu0 0.0
    %2303 = vmatpush2.xpose.msra.mxu0 0.0
    %2304 = vmatprep.subr.mxu0 0.0
    %2305 = vmatpush2.xpose.msra.mxu0 0.0
    %2306 = vmatprep.subr.mxu0 0.0
    %2307 = vmatpush2.xpose.msra.mxu0 0.0
    %2308 = vmatprep.subr.mxu0 0.0
    %2309 = vmatpush2.xpose.msra.mxu0 0.0
    %2310 = vmatprep.subr.mxu0 0.0
    %2311 = vmatpush2.xpose.msra.mxu0 0.0
    %2312 = vmatprep.subr.mxu0 0.0
    %2313 = vmatpush2.xpose.msra.mxu0 0.0
    %2314 = vmatprep.mubr.f32.mxu0 0.0
    %2315 = vmatmul.mubr.f32.gmra.mxu0 %v2227
    %v2316 = vpop.f32.mrf.mxu0
    %v2317 = vadd.f32 %v1676, %v2316
    %v2318 = vpop.f32.mrf.mxu0
    %2319 = vmatprep.mubr.f32.mxu0 0.0
    %2320 = vmatmul.mubr.f32.gmra.mxu0 %v2230
    %v2321 = vpop.f32.mrf.mxu0
    %v2322 = vadd.f32 %v1677, %v2321
    %v2323 = vpop.f32.mrf.mxu0
    %2324 = vmatprep.mubr.f32.mxu0 0.0
    %2325 = vmatmul.mubr.f32.gmra.mxu0 %v2233
    %v2326 = vpop.f32.mrf.mxu0
    %v2327 = vadd.f32 %v1678, %v2326
    %v2328 = vpop.f32.mrf.mxu0
    %2329 = vmatprep.mubr.f32.mxu0 0.0
    %2330 = vmatmul.mubr.f32.gmra.mxu0 %v2236
    %v2331 = vpop.f32.mrf.mxu0
    %v2332 = vadd.f32 %v1679, %v2331
    %v2333 = vpop.f32.mrf.mxu0
    %2334 = vdwg.mxu0
    %vm2335 = vcmask 261120
    %v2336 = vsel %vm2335, %v1772, -inf
    %2337 = vmax.xlane.f32.xlu0 %v2336
    %v2338 = vpop.xlane.xlu0 %2337
    %v2339 = vsel %vm2335, %v1777, -inf
    %2340 = vmax.xlane.f32.xlu0 %v2339
    %v2341 = vpop.xlane.xlu0 %2340
    %v2342 = vsel %vm2335, %v1782, -inf
    %2343 = vmax.xlane.f32.xlu0 %v2342
    %v2344 = vpop.xlane.xlu0 %2343
    %v2345 = vsel %vm2335, %v1787, -inf
    %2346 = vmax.xlane.f32.xlu0 %v2345
    %v2347 = vpop.xlane.xlu0 %2346
    %v2348 = vsel %vm2335, %v1881, -inf
    %2349 = vmax.xlane.f32.xlu0 %v2348
    %v2350 = vpop.xlane.xlu0 %2349
    %v2351 = vsel %vm2335, %v1886, -inf
    %2352 = vmax.xlane.f32.xlu0 %v2351
    %v2353 = vpop.xlane.xlu0 %2352
    %v2354 = vsel %vm2335, %v1891, -inf
    %2355 = vmax.xlane.f32.xlu0 %v2354
    %v2356 = vpop.xlane.xlu0 %2355
    %v2357 = vsel %vm2335, %v1896, -inf
    %2358 = vmax.xlane.f32.xlu0 %v2357
    %v2359 = vpop.xlane.xlu0 %2358
    %v2360 = vsel %vm2335, %v1990, -inf
    %2361 = vmax.xlane.f32.xlu0 %v2360
    %v2362 = vpop.xlane.xlu0 %2361
    %v2363 = vsel %vm2335, %v1995, -inf
    %2364 = vmax.xlane.f32.xlu0 %v2363
    %v2365 = vpop.xlane.xlu0 %2364
    %v2366 = vsel %vm2335, %v2000, -inf
    %2367 = vmax.xlane.f32.xlu0 %v2366
    %v2368 = vpop.xlane.xlu0 %2367
    %v2369 = vsel %vm2335, %v2005, -inf
    %2370 = vmax.xlane.f32.xlu0 %v2369
    %v2371 = vpop.xlane.xlu0 %2370
    %v2372 = vsel %vm2335, %v2099, -inf
    %2373 = vmax.xlane.f32.xlu0 %v2372
    %v2374 = vpop.xlane.xlu0 %2373
    %v2375 = vsel %vm2335, %v2104, -inf
    %2376 = vmax.xlane.f32.xlu0 %v2375
    %v2377 = vpop.xlane.xlu0 %2376
    %v2378 = vsel %vm2335, %v2109, -inf
    %2379 = vmax.xlane.f32.xlu0 %v2378
    %v2380 = vpop.xlane.xlu0 %2379
    %v2381 = vsel %vm2335, %v2114, -inf
    %2382 = vmax.xlane.f32.xlu0 %v2381
    %v2383 = vpop.xlane.xlu0 %2382
    %v2384 = vsel %vm2335, %v2208, -inf
    %2385 = vmax.xlane.f32.xlu0 %v2384
    %v2386 = vpop.xlane.xlu0 %2385
    %v2387 = vsel %vm2335, %v2213, -inf
    %2388 = vmax.xlane.f32.xlu0 %v2387
    %v2389 = vpop.xlane.xlu0 %2388
    %v2390 = vsel %vm2335, %v2218, -inf
    %2391 = vmax.xlane.f32.xlu0 %v2390
    %v2392 = vpop.xlane.xlu0 %2391
    %v2393 = vsel %vm2335, %v2223, -inf
    %2394 = vmax.xlane.f32.xlu0 %v2393
    %v2395 = vpop.xlane.xlu0 %2394
    %v2396 = vsel %vm2335, %v2317, -inf
    %2397 = vmax.xlane.f32.xlu0 %v2396
    %v2398 = vpop.xlane.xlu0 %2397
    %v2399 = vsel %vm2335, %v2322, -inf
    %2400 = vmax.xlane.f32.xlu0 %v2399
    %v2401 = vpop.xlane.xlu0 %2400
    %v2402 = vsel %vm2335, %v2327, -inf
    %2403 = vmax.xlane.f32.xlu0 %v2402
    %v2404 = vpop.xlane.xlu0 %2403
    %v2405 = vsel %vm2335, %v2332, -inf
    %2406 = vmax.xlane.f32.xlu0 %v2405
    %v2407 = vpop.xlane.xlu0 %2406
    %v2408 = vsub.f32 %v1772, %v2338
    %v2409 = vsub.f32 %v1777, %v2341
    %v2410 = vsub.f32 %v1782, %v2344
    %v2411 = vsub.f32 %v1787, %v2347
    %v2412 = vsub.f32 %v1881, %v2350
    %v2413 = vsub.f32 %v1886, %v2353
    %v2414 = vsub.f32 %v1891, %v2356
    %v2415 = vsub.f32 %v1896, %v2359
    %v2416 = vsub.f32 %v1990, %v2362
    %v2417 = vsub.f32 %v1995, %v2365
    %v2418 = vsub.f32 %v2000, %v2368
    %v2419 = vsub.f32 %v2005, %v2371
    %v2420 = vsub.f32 %v2099, %v2374
    %v2421 = vsub.f32 %v2104, %v2377
    %v2422 = vsub.f32 %v2109, %v2380
    %v2423 = vsub.f32 %v2114, %v2383
    %v2424 = vsub.f32 %v2208, %v2386
    %v2425 = vsub.f32 %v2213, %v2389
    %v2426 = vsub.f32 %v2218, %v2392
    %v2427 = vsub.f32 %v2223, %v2395
    %v2428 = vsub.f32 %v2317, %v2398
    %v2429 = vsub.f32 %v2322, %v2401
    %v2430 = vsub.f32 %v2327, %v2404
    %v2431 = vsub.f32 %v2332, %v2407
    %v2432 = vmul.f32 %v2408, 1.442695
    %v2433 = vpow.pop %v2432
    %v2434 = vmul.f32 %v2409, 1.442695
    %v2435 = vpow.pop %v2434
    %v2436 = vmul.f32 %v2410, 1.442695
    %v2437 = vpow.pop %v2436
    %v2438 = vmul.f32 %v2411, 1.442695
    %v2439 = vpow.pop %v2438
    %v2440 = vmul.f32 %v2412, 1.442695
    %v2441 = vpow.pop %v2440
    %v2442 = vmul.f32 %v2413, 1.442695
    %v2443 = vpow.pop %v2442
    %v2444 = vmul.f32 %v2414, 1.442695
    %v2445 = vpow.pop %v2444
    %v2446 = vmul.f32 %v2415, 1.442695
    %v2447 = vpow.pop %v2446
    %v2448 = vmul.f32 %v2416, 1.442695
    %v2449 = vpow.pop %v2448
    %v2450 = vmul.f32 %v2417, 1.442695
    %v2451 = vpow.pop %v2450
    %v2452 = vmul.f32 %v2418, 1.442695
    %v2453 = vpow.pop %v2452
    %v2454 = vmul.f32 %v2419, 1.442695
    %v2455 = vpow.pop %v2454
    %v2456 = vmul.f32 %v2420, 1.442695
    %v2457 = vpow.pop %v2456
    %v2458 = vmul.f32 %v2421, 1.442695
    %v2459 = vpow.pop %v2458
    %v2460 = vmul.f32 %v2422, 1.442695
    %v2461 = vpow.pop %v2460
    %v2462 = vmul.f32 %v2423, 1.442695
    %v2463 = vpow.pop %v2462
    %v2464 = vmul.f32 %v2424, 1.442695
    %v2465 = vpow.pop %v2464
    %v2466 = vmul.f32 %v2425, 1.442695
    %v2467 = vpow.pop %v2466
    %v2468 = vmul.f32 %v2426, 1.442695
    %v2469 = vpow.pop %v2468
    %v2470 = vmul.f32 %v2427, 1.442695
    %v2471 = vpow.pop %v2470
    %v2472 = vmul.f32 %v2428, 1.442695
    %v2473 = vpow.pop %v2472
    %v2474 = vmul.f32 %v2429, 1.442695
    %v2475 = vpow.pop %v2474
    %v2476 = vmul.f32 %v2430, 1.442695
    %v2477 = vpow.pop %v2476
    %v2478 = vmul.f32 %v2431, 1.442695
    %v2479 = vpow.pop %v2478
    %v2480 = vsel %vm2335, %v2433, 0.0
    %2481 = vadd.xlane.f32.xlu0 %v2480
    %v2482 = vpop.xlane.xlu0 %2481
    %v2483 = vsel %vm2335, %v2435, 0.0
    %2484 = vadd.xlane.f32.xlu0 %v2483
    %v2485 = vpop.xlane.xlu0 %2484
    %v2486 = vsel %vm2335, %v2437, 0.0
    %2487 = vadd.xlane.f32.xlu0 %v2486
    %v2488 = vpop.xlane.xlu0 %2487
    %v2489 = vsel %vm2335, %v2439, 0.0
    %2490 = vadd.xlane.f32.xlu0 %v2489
    %v2491 = vpop.xlane.xlu0 %2490
    %v2492 = vsel %vm2335, %v2441, 0.0
    %2493 = vadd.xlane.f32.xlu0 %v2492
    %v2494 = vpop.xlane.xlu0 %2493
    %v2495 = vsel %vm2335, %v2443, 0.0
    %2496 = vadd.xlane.f32.xlu0 %v2495
    %v2497 = vpop.xlane.xlu0 %2496
    %v2498 = vsel %vm2335, %v2445, 0.0
    %2499 = vadd.xlane.f32.xlu0 %v2498
    %v2500 = vpop.xlane.xlu0 %2499
    %v2501 = vsel %vm2335, %v2447, 0.0
    %2502 = vadd.xlane.f32.xlu0 %v2501
    %v2503 = vpop.xlane.xlu0 %2502
    %v2504 = vsel %vm2335, %v2449, 0.0
    %2505 = vadd.xlane.f32.xlu0 %v2504
    %v2506 = vpop.xlane.xlu0 %2505
    %v2507 = vsel %vm2335, %v2451, 0.0
    %2508 = vadd.xlane.f32.xlu0 %v2507
    %v2509 = vpop.xlane.xlu0 %2508
    %v2510 = vsel %vm2335, %v2453, 0.0
    %2511 = vadd.xlane.f32.xlu0 %v2510
    %v2512 = vpop.xlane.xlu0 %2511
    %v2513 = vsel %vm2335, %v2455, 0.0
    %2514 = vadd.xlane.f32.xlu0 %v2513
    %v2515 = vpop.xlane.xlu0 %2514
    %v2516 = vsel %vm2335, %v2457, 0.0
    %2517 = vadd.xlane.f32.xlu0 %v2516
    %v2518 = vpop.xlane.xlu0 %2517
    %v2519 = vsel %vm2335, %v2459, 0.0
    %2520 = vadd.xlane.f32.xlu0 %v2519
    %v2521 = vpop.xlane.xlu0 %2520
    %v2522 = vsel %vm2335, %v2461, 0.0
    %2523 = vadd.xlane.f32.xlu0 %v2522
    %v2524 = vpop.xlane.xlu0 %2523
    %v2525 = vsel %vm2335, %v2463, 0.0
    %2526 = vadd.xlane.f32.xlu0 %v2525
    %v2527 = vpop.xlane.xlu0 %2526
    %v2528 = vsel %vm2335, %v2465, 0.0
    %2529 = vadd.xlane.f32.xlu0 %v2528
    %v2530 = vpop.xlane.xlu0 %2529
    %v2531 = vsel %vm2335, %v2467, 0.0
    %2532 = vadd.xlane.f32.xlu0 %v2531
    %v2533 = vpop.xlane.xlu0 %2532
    %v2534 = vsel %vm2335, %v2469, 0.0
    %2535 = vadd.xlane.f32.xlu0 %v2534
    %v2536 = vpop.xlane.xlu0 %2535
    %v2537 = vsel %vm2335, %v2471, 0.0
    %2538 = vadd.xlane.f32.xlu0 %v2537
    %v2539 = vpop.xlane.xlu0 %2538
    %v2540 = vsel %vm2335, %v2473, 0.0
    %2541 = vadd.xlane.f32.xlu0 %v2540
    %v2542 = vpop.xlane.xlu0 %2541
    %v2543 = vsel %vm2335, %v2475, 0.0
    %2544 = vadd.xlane.f32.xlu0 %v2543
    %v2545 = vpop.xlane.xlu0 %2544
    %v2546 = vsel %vm2335, %v2477, 0.0
    %2547 = vadd.xlane.f32.xlu0 %v2546
    %v2548 = vpop.xlane.xlu0 %2547
    %v2549 = vsel %vm2335, %v2479, 0.0
    %2550 = vadd.xlane.f32.xlu0 %v2549
    %v2551 = vpop.xlane.xlu0 %2550
    %v2552 = vrcp.pop %v2482
    %v2553 = vrcp.pop %v2485
    %v2554 = vrcp.pop %v2488
    %v2555 = vrcp.pop %v2491
    %v2556 = vrcp.pop %v2494
    %v2557 = vrcp.pop %v2497
    %v2558 = vrcp.pop %v2500
    %v2559 = vrcp.pop %v2503
    %v2560 = vrcp.pop %v2506
    %v2561 = vrcp.pop %v2509
    %v2562 = vrcp.pop %v2512
    %v2563 = vrcp.pop %v2515
    %v2564 = vrcp.pop %v2518
    %v2565 = vrcp.pop %v2521
    %v2566 = vrcp.pop %v2524
    %v2567 = vrcp.pop %v2527
    %v2568 = vrcp.pop %v2530
    %v2569 = vrcp.pop %v2533
    %v2570 = vrcp.pop %v2536
    %v2571 = vrcp.pop %v2539
    %v2572 = vrcp.pop %v2542
    %v2573 = vrcp.pop %v2545
    %v2574 = vrcp.pop %v2548
    %v2575 = vrcp.pop %v2551
    %v2576 = vmul.f32 %v2482, %v2552
    %v2577 = vmul.f32 %v2485, %v2553
    %v2578 = vmul.f32 %v2488, %v2554
    %v2579 = vmul.f32 %v2491, %v2555
    %v2580 = vmul.f32 %v2494, %v2556
    %v2581 = vmul.f32 %v2497, %v2557
    %v2582 = vmul.f32 %v2500, %v2558
    %v2583 = vmul.f32 %v2503, %v2559
    %v2584 = vmul.f32 %v2506, %v2560
    %v2585 = vmul.f32 %v2509, %v2561
    %v2586 = vmul.f32 %v2512, %v2562
    %v2587 = vmul.f32 %v2515, %v2563
    %v2588 = vmul.f32 %v2518, %v2564
    %v2589 = vmul.f32 %v2521, %v2565
    %v2590 = vmul.f32 %v2524, %v2566
    %v2591 = vmul.f32 %v2527, %v2567
    %v2592 = vmul.f32 %v2530, %v2568
    %v2593 = vmul.f32 %v2533, %v2569
    %v2594 = vmul.f32 %v2536, %v2570
    %v2595 = vmul.f32 %v2539, %v2571
    %v2596 = vmul.f32 %v2542, %v2572
    %v2597 = vmul.f32 %v2545, %v2573
    %v2598 = vmul.f32 %v2548, %v2574
    %v2599 = vmul.f32 %v2551, %v2575
    %v2600 = vsub.f32 2.0, %v2576
    %v2601 = vsub.f32 2.0, %v2577
    %v2602 = vsub.f32 2.0, %v2578
    %v2603 = vsub.f32 2.0, %v2579
    %v2604 = vsub.f32 2.0, %v2580
    %v2605 = vsub.f32 2.0, %v2581
    %v2606 = vsub.f32 2.0, %v2582
    %v2607 = vsub.f32 2.0, %v2583
    %v2608 = vsub.f32 2.0, %v2584
    %v2609 = vsub.f32 2.0, %v2585
    %v2610 = vsub.f32 2.0, %v2586
    %v2611 = vsub.f32 2.0, %v2587
    %v2612 = vsub.f32 2.0, %v2588
    %v2613 = vsub.f32 2.0, %v2589
    %v2614 = vsub.f32 2.0, %v2590
    %v2615 = vsub.f32 2.0, %v2591
    %v2616 = vsub.f32 2.0, %v2592
    %v2617 = vsub.f32 2.0, %v2593
    %v2618 = vsub.f32 2.0, %v2594
    %v2619 = vsub.f32 2.0, %v2595
    %v2620 = vsub.f32 2.0, %v2596
    %v2621 = vsub.f32 2.0, %v2597
    %v2622 = vsub.f32 2.0, %v2598
    %v2623 = vsub.f32 2.0, %v2599
    %v2624 = vmul.f32 %v2552, %v2600
    %v2625 = vmul.f32 %v2553, %v2601
    %v2626 = vmul.f32 %v2554, %v2602
    %v2627 = vmul.f32 %v2555, %v2603
    %v2628 = vmul.f32 %v2556, %v2604
    %v2629 = vmul.f32 %v2557, %v2605
    %v2630 = vmul.f32 %v2558, %v2606
    %v2631 = vmul.f32 %v2559, %v2607
    %v2632 = vmul.f32 %v2560, %v2608
    %v2633 = vmul.f32 %v2561, %v2609
    %v2634 = vmul.f32 %v2562, %v2610
    %v2635 = vmul.f32 %v2563, %v2611
    %v2636 = vmul.f32 %v2564, %v2612
    %v2637 = vmul.f32 %v2565, %v2613
    %v2638 = vmul.f32 %v2566, %v2614
    %v2639 = vmul.f32 %v2567, %v2615
    %v2640 = vmul.f32 %v2568, %v2616
    %v2641 = vmul.f32 %v2569, %v2617
    %v2642 = vmul.f32 %v2570, %v2618
    %v2643 = vmul.f32 %v2571, %v2619
    %v2644 = vmul.f32 %v2572, %v2620
    %v2645 = vmul.f32 %v2573, %v2621
    %v2646 = vmul.f32 %v2574, %v2622
    %v2647 = vmul.f32 %v2575, %v2623
    %v2648 = vmul.f32 %v2433, %v2624
    %v2649 = vmul.f32 %v2435, %v2625
    %v2650 = vmul.f32 %v2437, %v2626
    %v2651 = vmul.f32 %v2439, %v2627
    %v2652 = vmul.f32 %v2441, %v2628
    %v2653 = vmul.f32 %v2443, %v2629
    %v2654 = vmul.f32 %v2445, %v2630
    %v2655 = vmul.f32 %v2447, %v2631
    %v2656 = vmul.f32 %v2449, %v2632
    %v2657 = vmul.f32 %v2451, %v2633
    %v2658 = vmul.f32 %v2453, %v2634
    %v2659 = vmul.f32 %v2455, %v2635
    %v2660 = vmul.f32 %v2457, %v2636
    %v2661 = vmul.f32 %v2459, %v2637
    %v2662 = vmul.f32 %v2461, %v2638
    %v2663 = vmul.f32 %v2463, %v2639
    %v2664 = vmul.f32 %v2465, %v2640
    %v2665 = vmul.f32 %v2467, %v2641
    %v2666 = vmul.f32 %v2469, %v2642
    %v2667 = vmul.f32 %v2471, %v2643
    %v2668 = vmul.f32 %v2473, %v2644
    %v2669 = vmul.f32 %v2475, %v2645
    %v2670 = vmul.f32 %v2477, %v2646
    %v2671 = vmul.f32 %v2479, %v2647
    %v2673 = vsel %vm2335, %v2648, 0
    %v2676 = vsel %vm2335, %v2649, 0
    %v2679 = vsel %vm2335, %v2650, 0
    %v2682 = vsel %vm2335, %v2651, 0
    %2684 = vmatprep.subr.mxu0 0.0
    %2685 = vmatpush1.msra.mxu0 0.0
    %2686 = vmatprep.subr.mxu0 0.0
    %2687 = vmatpush1.msra.mxu0 0.0
    %2688 = vmatprep.subr.mxu0 0.0
    %2689 = vmatpush1.msra.mxu0 0.0
    %2690 = vmatprep.subr.mxu0 0.0
    %2691 = vmatpush1.msra.mxu0 0.0
    %2692 = vmatprep.subr.mxu0 0.0
    %2693 = vmatpush1.msra.mxu0 0.0
    %2694 = vmatprep.subr.mxu0 0.0
    %2695 = vmatpush1.msra.mxu0 0.0
    %2696 = vmatprep.subr.mxu0 0.0
    %2697 = vmatpush1.msra.mxu0 0.0
    %2698 = vmatprep.subr.mxu0 0.0
    %2699 = vmatpush1.msra.mxu0 0.0
    %2700 = vmatprep.subr.mxu0 0.0
    %2701 = vmatpush1.msra.mxu0 0.0
    %2702 = vmatprep.subr.mxu0 0.0
    %2703 = vmatpush1.msra.mxu0 0.0
    %2704 = vmatprep.subr.mxu0 0.0
    %2705 = vmatpush1.msra.mxu0 0.0
    %2706 = vmatprep.subr.mxu0 0.0
    %2707 = vmatpush1.msra.mxu0 0.0
    %2708 = vmatprep.subr.mxu0 0.0
    %2709 = vmatpush1.msra.mxu0 %v1248
    %2710 = vmatprep.subr.mxu0 0.0
    %2711 = vmatpush1.msra.mxu0 %v1243
    %2712 = vmatprep.subr.mxu0 0.0
    %2713 = vmatpush1.msra.mxu0 %v1238
    %2714 = vmatprep.subr.mxu0 0.0
    %2715 = vmatpush1.msra.mxu0 %v1233
    %2716 = vmatprep.subr.mxu0 0.0
    %2717 = vmatpush2.msra.mxu0 0.0
    %2718 = vmatprep.subr.mxu0 0.0
    %2719 = vmatpush2.msra.mxu0 0.0
    %2720 = vmatprep.subr.mxu0 0.0
    %2721 = vmatpush2.msra.mxu0 0.0
    %2722 = vmatprep.subr.mxu0 0.0
    %2723 = vmatpush2.msra.mxu0 0.0
    %2724 = vmatprep.subr.mxu0 0.0
    %2725 = vmatpush2.msra.mxu0 0.0
    %2726 = vmatprep.subr.mxu0 0.0
    %2727 = vmatpush2.msra.mxu0 0.0
    %2728 = vmatprep.subr.mxu0 0.0
    %2729 = vmatpush2.msra.mxu0 0.0
    %2730 = vmatprep.subr.mxu0 0.0
    %2731 = vmatpush2.msra.mxu0 0.0
    %2732 = vmatprep.subr.mxu0 0.0
    %2733 = vmatpush2.msra.mxu0 0.0
    %2734 = vmatprep.subr.mxu0 0.0
    %2735 = vmatpush2.msra.mxu0 0.0
    %2736 = vmatprep.subr.mxu0 0.0
    %2737 = vmatpush2.msra.mxu0 0.0
    %2738 = vmatprep.subr.mxu0 0.0
    %2739 = vmatpush2.msra.mxu0 0.0
    %2740 = vmatprep.subr.mxu0 0.0
    %2741 = vmatpush2.msra.mxu0 0.0
    %2742 = vmatprep.subr.mxu0 0.0
    %2743 = vmatpush2.msra.mxu0 0.0
    %2744 = vmatprep.subr.mxu0 0.0
    %2745 = vmatpush2.msra.mxu0 0.0
    %2746 = vmatprep.subr.mxu0 0.0
    %2747 = vmatpush2.msra.mxu0 0.0
    %2748 = vmatprep.mubr.f32.mxu0 0.0
    %2749 = vmatmul.mubr.f32.gmra.mxu0 %v2673
    %v2750 = vpop.f32.mrf.mxu0
    %v2751 = vadd.f32 0.0, %v2750
    %v2752 = vpop.f32.mrf.mxu0
    %2753 = vmatprep.mubr.f32.mxu0 0.0
    %2754 = vmatmul.mubr.f32.gmra.mxu0 %v2676
    %v2755 = vpop.f32.mrf.mxu0
    %v2756 = vadd.f32 0.0, %v2755
    %v2757 = vpop.f32.mrf.mxu0
    %2758 = vmatprep.mubr.f32.mxu0 0.0
    %2759 = vmatmul.mubr.f32.gmra.mxu0 %v2679
    %v2760 = vpop.f32.mrf.mxu0
    %v2761 = vadd.f32 0.0, %v2760
    %v2762 = vpop.f32.mrf.mxu0
    %2763 = vmatprep.mubr.f32.mxu0 0.0
    %2764 = vmatmul.mubr.f32.gmra.mxu0 %v2682
    %v2765 = vpop.f32.mrf.mxu0
    %v2766 = vadd.f32 0.0, %v2765
    %v2767 = vpop.f32.mrf.mxu0
    %2768 = vdwg.mxu0
    %v2770 = vsel %vm2335, %v2652, 0
    %v2773 = vsel %vm2335, %v2653, 0
    %v2776 = vsel %vm2335, %v2654, 0
    %v2779 = vsel %vm2335, %v2655, 0
    %2781 = vmatprep.subr.mxu0 0.0
    %2782 = vmatpush1.msra.mxu0 0.0
    %2783 = vmatprep.subr.mxu0 0.0
    %2784 = vmatpush1.msra.mxu0 0.0
    %2785 = vmatprep.subr.mxu0 0.0
    %2786 = vmatpush1.msra.mxu0 0.0
    %2787 = vmatprep.subr.mxu0 0.0
    %2788 = vmatpush1.msra.mxu0 0.0
    %2789 = vmatprep.subr.mxu0 0.0
    %2790 = vmatpush1.msra.mxu0 0.0
    %2791 = vmatprep.subr.mxu0 0.0
    %2792 = vmatpush1.msra.mxu0 0.0
    %2793 = vmatprep.subr.mxu0 0.0
    %2794 = vmatpush1.msra.mxu0 0.0
    %2795 = vmatprep.subr.mxu0 0.0
    %2796 = vmatpush1.msra.mxu0 0.0
    %2797 = vmatprep.subr.mxu0 0.0
    %2798 = vmatpush1.msra.mxu0 0.0
    %2799 = vmatprep.subr.mxu0 0.0
    %2800 = vmatpush1.msra.mxu0 0.0
    %2801 = vmatprep.subr.mxu0 0.0
    %2802 = vmatpush1.msra.mxu0 0.0
    %2803 = vmatprep.subr.mxu0 0.0
    %2804 = vmatpush1.msra.mxu0 0.0
    %2805 = vmatprep.subr.mxu0 0.0
    %2806 = vmatpush1.msra.mxu0 %v1333
    %2807 = vmatprep.subr.mxu0 0.0
    %2808 = vmatpush1.msra.mxu0 %v1328
    %2809 = vmatprep.subr.mxu0 0.0
    %2810 = vmatpush1.msra.mxu0 %v1323
    %2811 = vmatprep.subr.mxu0 0.0
    %2812 = vmatpush1.msra.mxu0 %v1318
    %2813 = vmatprep.subr.mxu0 0.0
    %2814 = vmatpush2.msra.mxu0 0.0
    %2815 = vmatprep.subr.mxu0 0.0
    %2816 = vmatpush2.msra.mxu0 0.0
    %2817 = vmatprep.subr.mxu0 0.0
    %2818 = vmatpush2.msra.mxu0 0.0
    %2819 = vmatprep.subr.mxu0 0.0
    %2820 = vmatpush2.msra.mxu0 0.0
    %2821 = vmatprep.subr.mxu0 0.0
    %2822 = vmatpush2.msra.mxu0 0.0
    %2823 = vmatprep.subr.mxu0 0.0
    %2824 = vmatpush2.msra.mxu0 0.0
    %2825 = vmatprep.subr.mxu0 0.0
    %2826 = vmatpush2.msra.mxu0 0.0
    %2827 = vmatprep.subr.mxu0 0.0
    %2828 = vmatpush2.msra.mxu0 0.0
    %2829 = vmatprep.subr.mxu0 0.0
    %2830 = vmatpush2.msra.mxu0 0.0
    %2831 = vmatprep.subr.mxu0 0.0
    %2832 = vmatpush2.msra.mxu0 0.0
    %2833 = vmatprep.subr.mxu0 0.0
    %2834 = vmatpush2.msra.mxu0 0.0
    %2835 = vmatprep.subr.mxu0 0.0
    %2836 = vmatpush2.msra.mxu0 0.0
    %2837 = vmatprep.subr.mxu0 0.0
    %2838 = vmatpush2.msra.mxu0 0.0
    %2839 = vmatprep.subr.mxu0 0.0
    %2840 = vmatpush2.msra.mxu0 0.0
    %2841 = vmatprep.subr.mxu0 0.0
    %2842 = vmatpush2.msra.mxu0 0.0
    %2843 = vmatprep.subr.mxu0 0.0
    %2844 = vmatpush2.msra.mxu0 0.0
    %2845 = vmatprep.mubr.f32.mxu0 0.0
    %2846 = vmatmul.mubr.f32.gmra.mxu0 %v2770
    %v2847 = vpop.f32.mrf.mxu0
    %v2848 = vadd.f32 0.0, %v2847
    %v2849 = vpop.f32.mrf.mxu0
    %2850 = vmatprep.mubr.f32.mxu0 0.0
    %2851 = vmatmul.mubr.f32.gmra.mxu0 %v2773
    %v2852 = vpop.f32.mrf.mxu0
    %v2853 = vadd.f32 0.0, %v2852
    %v2854 = vpop.f32.mrf.mxu0
    %2855 = vmatprep.mubr.f32.mxu0 0.0
    %2856 = vmatmul.mubr.f32.gmra.mxu0 %v2776
    %v2857 = vpop.f32.mrf.mxu0
    %v2858 = vadd.f32 0.0, %v2857
    %v2859 = vpop.f32.mrf.mxu0
    %2860 = vmatprep.mubr.f32.mxu0 0.0
    %2861 = vmatmul.mubr.f32.gmra.mxu0 %v2779
    %v2862 = vpop.f32.mrf.mxu0
    %v2863 = vadd.f32 0.0, %v2862
    %v2864 = vpop.f32.mrf.mxu0
    %2865 = vdwg.mxu0
    %v2867 = vsel %vm2335, %v2656, 0
    %v2870 = vsel %vm2335, %v2657, 0
    %v2873 = vsel %vm2335, %v2658, 0
    %v2876 = vsel %vm2335, %v2659, 0
    %2878 = vmatprep.subr.mxu0 0.0
    %2879 = vmatpush1.msra.mxu0 0.0
    %2880 = vmatprep.subr.mxu0 0.0
    %2881 = vmatpush1.msra.mxu0 0.0
    %2882 = vmatprep.subr.mxu0 0.0
    %2883 = vmatpush1.msra.mxu0 0.0
    %2884 = vmatprep.subr.mxu0 0.0
    %2885 = vmatpush1.msra.mxu0 0.0
    %2886 = vmatprep.subr.mxu0 0.0
    %2887 = vmatpush1.msra.mxu0 0.0
    %2888 = vmatprep.subr.mxu0 0.0
    %2889 = vmatpush1.msra.mxu0 0.0
    %2890 = vmatprep.subr.mxu0 0.0
    %2891 = vmatpush1.msra.mxu0 0.0
    %2892 = vmatprep.subr.mxu0 0.0
    %2893 = vmatpush1.msra.mxu0 0.0
    %2894 = vmatprep.subr.mxu0 0.0
    %2895 = vmatpush1.msra.mxu0 0.0
    %2896 = vmatprep.subr.mxu0 0.0
    %2897 = vmatpush1.msra.mxu0 0.0
    %2898 = vmatprep.subr.mxu0 0.0
    %2899 = vmatpush1.msra.mxu0 0.0
    %2900 = vmatprep.subr.mxu0 0.0
    %2901 = vmatpush1.msra.mxu0 0.0
    %2902 = vmatprep.subr.mxu0 0.0
    %2903 = vmatpush1.msra.mxu0 %v1418
    %2904 = vmatprep.subr.mxu0 0.0
    %2905 = vmatpush1.msra.mxu0 %v1413
    %2906 = vmatprep.subr.mxu0 0.0
    %2907 = vmatpush1.msra.mxu0 %v1408
    %2908 = vmatprep.subr.mxu0 0.0
    %2909 = vmatpush1.msra.mxu0 %v1403
    %2910 = vmatprep.subr.mxu0 0.0
    %2911 = vmatpush2.msra.mxu0 0.0
    %2912 = vmatprep.subr.mxu0 0.0
    %2913 = vmatpush2.msra.mxu0 0.0
    %2914 = vmatprep.subr.mxu0 0.0
    %2915 = vmatpush2.msra.mxu0 0.0
    %2916 = vmatprep.subr.mxu0 0.0
    %2917 = vmatpush2.msra.mxu0 0.0
    %2918 = vmatprep.subr.mxu0 0.0
    %2919 = vmatpush2.msra.mxu0 0.0
    %2920 = vmatprep.subr.mxu0 0.0
    %2921 = vmatpush2.msra.mxu0 0.0
    %2922 = vmatprep.subr.mxu0 0.0
    %2923 = vmatpush2.msra.mxu0 0.0
    %2924 = vmatprep.subr.mxu0 0.0
    %2925 = vmatpush2.msra.mxu0 0.0
    %2926 = vmatprep.subr.mxu0 0.0
    %2927 = vmatpush2.msra.mxu0 0.0
    %2928 = vmatprep.subr.mxu0 0.0
    %2929 = vmatpush2.msra.mxu0 0.0
    %2930 = vmatprep.subr.mxu0 0.0
    %2931 = vmatpush2.msra.mxu0 0.0
    %2932 = vmatprep.subr.mxu0 0.0
    %2933 = vmatpush2.msra.mxu0 0.0
    %2934 = vmatprep.subr.mxu0 0.0
    %2935 = vmatpush2.msra.mxu0 0.0
    %2936 = vmatprep.subr.mxu0 0.0
    %2937 = vmatpush2.msra.mxu0 0.0
    %2938 = vmatprep.subr.mxu0 0.0
    %2939 = vmatpush2.msra.mxu0 0.0
    %2940 = vmatprep.subr.mxu0 0.0
    %2941 = vmatpush2.msra.mxu0 0.0
    %2942 = vmatprep.mubr.f32.mxu0 0.0
    %2943 = vmatmul.mubr.f32.gmra.mxu0 %v2867
    %v2944 = vpop.f32.mrf.mxu0
    %v2945 = vadd.f32 0.0, %v2944
    %v2946 = vpop.f32.mrf.mxu0
    %2947 = vmatprep.mubr.f32.mxu0 0.0
    %2948 = vmatmul.mubr.f32.gmra.mxu0 %v2870
    %v2949 = vpop.f32.mrf.mxu0
    %v2950 = vadd.f32 0.0, %v2949
    %v2951 = vpop.f32.mrf.mxu0
    %2952 = vmatprep.mubr.f32.mxu0 0.0
    %2953 = vmatmul.mubr.f32.gmra.mxu0 %v2873
    %v2954 = vpop.f32.mrf.mxu0
    %v2955 = vadd.f32 0.0, %v2954
    %v2956 = vpop.f32.mrf.mxu0
    %2957 = vmatprep.mubr.f32.mxu0 0.0
    %2958 = vmatmul.mubr.f32.gmra.mxu0 %v2876
    %v2959 = vpop.f32.mrf.mxu0
    %v2960 = vadd.f32 0.0, %v2959
    %v2961 = vpop.f32.mrf.mxu0
    %2962 = vdwg.mxu0
    %v2964 = vsel %vm2335, %v2660, 0
    %v2967 = vsel %vm2335, %v2661, 0
    %v2970 = vsel %vm2335, %v2662, 0
    %v2973 = vsel %vm2335, %v2663, 0
    %2975 = vmatprep.subr.mxu0 0.0
    %2976 = vmatpush1.msra.mxu0 0.0
    %2977 = vmatprep.subr.mxu0 0.0
    %2978 = vmatpush1.msra.mxu0 0.0
    %2979 = vmatprep.subr.mxu0 0.0
    %2980 = vmatpush1.msra.mxu0 0.0
    %2981 = vmatprep.subr.mxu0 0.0
    %2982 = vmatpush1.msra.mxu0 0.0
    %2983 = vmatprep.subr.mxu0 0.0
    %2984 = vmatpush1.msra.mxu0 0.0
    %2985 = vmatprep.subr.mxu0 0.0
    %2986 = vmatpush1.msra.mxu0 0.0
    %2987 = vmatprep.subr.mxu0 0.0
    %2988 = vmatpush1.msra.mxu0 0.0
    %2989 = vmatprep.subr.mxu0 0.0
    %2990 = vmatpush1.msra.mxu0 0.0
    %2991 = vmatprep.subr.mxu0 0.0
    %2992 = vmatpush1.msra.mxu0 0.0
    %2993 = vmatprep.subr.mxu0 0.0
    %2994 = vmatpush1.msra.mxu0 0.0
    %2995 = vmatprep.subr.mxu0 0.0
    %2996 = vmatpush1.msra.mxu0 0.0
    %2997 = vmatprep.subr.mxu0 0.0
    %2998 = vmatpush1.msra.mxu0 0.0
    %2999 = vmatprep.subr.mxu0 0.0
    %3000 = vmatpush1.msra.mxu0 %v1503
    %3001 = vmatprep.subr.mxu0 0.0
    %3002 = vmatpush1.msra.mxu0 %v1498
    %3003 = vmatprep.subr.mxu0 0.0
    %3004 = vmatpush1.msra.mxu0 %v1493
    %3005 = vmatprep.subr.mxu0 0.0
    %3006 = vmatpush1.msra.mxu0 %v1488
    %3007 = vmatprep.subr.mxu0 0.0
    %3008 = vmatpush2.msra.mxu0 0.0
    %3009 = vmatprep.subr.mxu0 0.0
    %3010 = vmatpush2.msra.mxu0 0.0
    %3011 = vmatprep.subr.mxu0 0.0
    %3012 = vmatpush2.msra.mxu0 0.0
    %3013 = vmatprep.subr.mxu0 0.0
    %3014 = vmatpush2.msra.mxu0 0.0
    %3015 = vmatprep.subr.mxu0 0.0
    %3016 = vmatpush2.msra.mxu0 0.0
    %3017 = vmatprep.subr.mxu0 0.0
    %3018 = vmatpush2.msra.mxu0 0.0
    %3019 = vmatprep.subr.mxu0 0.0
    %3020 = vmatpush2.msra.mxu0 0.0
    %3021 = vmatprep.subr.mxu0 0.0
    %3022 = vmatpush2.msra.mxu0 0.0
    %3023 = vmatprep.subr.mxu0 0.0
    %3024 = vmatpush2.msra.mxu0 0.0
    %3025 = vmatprep.subr.mxu0 0.0
    %3026 = vmatpush2.msra.mxu0 0.0
    %3027 = vmatprep.subr.mxu0 0.0
    %3028 = vmatpush2.msra.mxu0 0.0
    %3029 = vmatprep.subr.mxu0 0.0
    %3030 = vmatpush2.msra.mxu0 0.0
    %3031 = vmatprep.subr.mxu0 0.0
    %3032 = vmatpush2.msra.mxu0 0.0
    %3033 = vmatprep.subr.mxu0 0.0
    %3034 = vmatpush2.msra.mxu0 0.0
    %3035 = vmatprep.subr.mxu0 0.0
    %3036 = vmatpush2.msra.mxu0 0.0
    %3037 = vmatprep.subr.mxu0 0.0
    %3038 = vmatpush2.msra.mxu0 0.0
    %3039 = vmatprep.mubr.f32.mxu0 0.0
    %3040 = vmatmul.mubr.f32.gmra.mxu0 %v2964
    %v3041 = vpop.f32.mrf.mxu0
    %v3042 = vadd.f32 0.0, %v3041
    %v3043 = vpop.f32.mrf.mxu0
    %3044 = vmatprep.mubr.f32.mxu0 0.0
    %3045 = vmatmul.mubr.f32.gmra.mxu0 %v2967
    %v3046 = vpop.f32.mrf.mxu0
    %v3047 = vadd.f32 0.0, %v3046
    %v3048 = vpop.f32.mrf.mxu0
    %3049 = vmatprep.mubr.f32.mxu0 0.0
    %3050 = vmatmul.mubr.f32.gmra.mxu0 %v2970
    %v3051 = vpop.f32.mrf.mxu0
    %v3052 = vadd.f32 0.0, %v3051
    %v3053 = vpop.f32.mrf.mxu0
    %3054 = vmatprep.mubr.f32.mxu0 0.0
    %3055 = vmatmul.mubr.f32.gmra.mxu0 %v2973
    %v3056 = vpop.f32.mrf.mxu0
    %v3057 = vadd.f32 0.0, %v3056
    %v3058 = vpop.f32.mrf.mxu0
    %3059 = vdwg.mxu0
    %v3061 = vsel %vm2335, %v2664, 0
    %v3064 = vsel %vm2335, %v2665, 0
    %v3067 = vsel %vm2335, %v2666, 0
    %v3070 = vsel %vm2335, %v2667, 0
    %3072 = vmatprep.subr.mxu0 0.0
    %3073 = vmatpush1.msra.mxu0 0.0
    %3074 = vmatprep.subr.mxu0 0.0
    %3075 = vmatpush1.msra.mxu0 0.0
    %3076 = vmatprep.subr.mxu0 0.0
    %3077 = vmatpush1.msra.mxu0 0.0
    %3078 = vmatprep.subr.mxu0 0.0
    %3079 = vmatpush1.msra.mxu0 0.0
    %3080 = vmatprep.subr.mxu0 0.0
    %3081 = vmatpush1.msra.mxu0 0.0
    %3082 = vmatprep.subr.mxu0 0.0
    %3083 = vmatpush1.msra.mxu0 0.0
    %3084 = vmatprep.subr.mxu0 0.0
    %3085 = vmatpush1.msra.mxu0 0.0
    %3086 = vmatprep.subr.mxu0 0.0
    %3087 = vmatpush1.msra.mxu0 0.0
    %3088 = vmatprep.subr.mxu0 0.0
    %3089 = vmatpush1.msra.mxu0 0.0
    %3090 = vmatprep.subr.mxu0 0.0
    %3091 = vmatpush1.msra.mxu0 0.0
    %3092 = vmatprep.subr.mxu0 0.0
    %3093 = vmatpush1.msra.mxu0 0.0
    %3094 = vmatprep.subr.mxu0 0.0
    %3095 = vmatpush1.msra.mxu0 0.0
    %3096 = vmatprep.subr.mxu0 0.0
    %3097 = vmatpush1.msra.mxu0 %v1588
    %3098 = vmatprep.subr.mxu0 0.0
    %3099 = vmatpush1.msra.mxu0 %v1583
    %3100 = vmatprep.subr.mxu0 0.0
    %3101 = vmatpush1.msra.mxu0 %v1578
    %3102 = vmatprep.subr.mxu0 0.0
    %3103 = vmatpush1.msra.mxu0 %v1573
    %3104 = vmatprep.subr.mxu0 0.0
    %3105 = vmatpush2.msra.mxu0 0.0
    %3106 = vmatprep.subr.mxu0 0.0
    %3107 = vmatpush2.msra.mxu0 0.0
    %3108 = vmatprep.subr.mxu0 0.0
    %3109 = vmatpush2.msra.mxu0 0.0
    %3110 = vmatprep.subr.mxu0 0.0
    %3111 = vmatpush2.msra.mxu0 0.0
    %3112 = vmatprep.subr.mxu0 0.0
    %3113 = vmatpush2.msra.mxu0 0.0
    %3114 = vmatprep.subr.mxu0 0.0
    %3115 = vmatpush2.msra.mxu0 0.0
    %3116 = vmatprep.subr.mxu0 0.0
    %3117 = vmatpush2.msra.mxu0 0.0
    %3118 = vmatprep.subr.mxu0 0.0
    %3119 = vmatpush2.msra.mxu0 0.0
    %3120 = vmatprep.subr.mxu0 0.0
    %3121 = vmatpush2.msra.mxu0 0.0
    %3122 = vmatprep.subr.mxu0 0.0
    %3123 = vmatpush2.msra.mxu0 0.0
    %3124 = vmatprep.subr.mxu0 0.0
    %3125 = vmatpush2.msra.mxu0 0.0
    %3126 = vmatprep.subr.mxu0 0.0
    %3127 = vmatpush2.msra.mxu0 0.0
    %3128 = vmatprep.subr.mxu0 0.0
    %3129 = vmatpush2.msra.mxu0 0.0
    %3130 = vmatprep.subr.mxu0 0.0
    %3131 = vmatpush2.msra.mxu0 0.0
    %3132 = vmatprep.subr.mxu0 0.0
    %3133 = vmatpush2.msra.mxu0 0.0
    %3134 = vmatprep.subr.mxu0 0.0
    %3135 = vmatpush2.msra.mxu0 0.0
    %3136 = vmatprep.mubr.f32.mxu0 0.0
    %3137 = vmatmul.mubr.f32.gmra.mxu0 %v3061
    %v3138 = vpop.f32.mrf.mxu0
    %v3139 = vadd.f32 0.0, %v3138
    %v3140 = vpop.f32.mrf.mxu0
    %3141 = vmatprep.mubr.f32.mxu0 0.0
    %3142 = vmatmul.mubr.f32.gmra.mxu0 %v3064
    %v3143 = vpop.f32.mrf.mxu0
    %v3144 = vadd.f32 0.0, %v3143
    %v3145 = vpop.f32.mrf.mxu0
    %3146 = vmatprep.mubr.f32.mxu0 0.0
    %3147 = vmatmul.mubr.f32.gmra.mxu0 %v3067
    %v3148 = vpop.f32.mrf.mxu0
    %v3149 = vadd.f32 0.0, %v3148
    %v3150 = vpop.f32.mrf.mxu0
    %3151 = vmatprep.mubr.f32.mxu0 0.0
    %3152 = vmatmul.mubr.f32.gmra.mxu0 %v3070
    %v3153 = vpop.f32.mrf.mxu0
    %v3154 = vadd.f32 0.0, %v3153
    %v3155 = vpop.f32.mrf.mxu0
    %3156 = vdwg.mxu0
    %v3158 = vsel %vm2335, %v2668, 0
    %v3161 = vsel %vm2335, %v2669, 0
    %v3164 = vsel %vm2335, %v2670, 0
    %v3167 = vsel %vm2335, %v2671, 0
    %3169 = vmatprep.subr.mxu0 0.0
    %3170 = vmatpush1.msra.mxu0 0.0
    %3171 = vmatprep.subr.mxu0 0.0
    %3172 = vmatpush1.msra.mxu0 0.0
    %3173 = vmatprep.subr.mxu0 0.0
    %3174 = vmatpush1.msra.mxu0 0.0
    %3175 = vmatprep.subr.mxu0 0.0
    %3176 = vmatpush1.msra.mxu0 0.0
    %3177 = vmatprep.subr.mxu0 0.0
    %3178 = vmatpush1.msra.mxu0 0.0
    %3179 = vmatprep.subr.mxu0 0.0
    %3180 = vmatpush1.msra.mxu0 0.0
    %3181 = vmatprep.subr.mxu0 0.0
    %3182 = vmatpush1.msra.mxu0 0.0
    %3183 = vmatprep.subr.mxu0 0.0
    %3184 = vmatpush1.msra.mxu0 0.0
    %3185 = vmatprep.subr.mxu0 0.0
    %3186 = vmatpush1.msra.mxu0 0.0
    %3187 = vmatprep.subr.mxu0 0.0
    %3188 = vmatpush1.msra.mxu0 0.0
    %3189 = vmatprep.subr.mxu0 0.0
    %3190 = vmatpush1.msra.mxu0 0.0
    %3191 = vmatprep.subr.mxu0 0.0
    %3192 = vmatpush1.msra.mxu0 0.0
    %3193 = vmatprep.subr.mxu0 0.0
    %3194 = vmatpush1.msra.mxu0 %v1673
    %3195 = vmatprep.subr.mxu0 0.0
    %3196 = vmatpush1.msra.mxu0 %v1668
    %3197 = vmatprep.subr.mxu0 0.0
    %3198 = vmatpush1.msra.mxu0 %v1663
    %3199 = vmatprep.subr.mxu0 0.0
    %3200 = vmatpush1.msra.mxu0 %v1658
    %3201 = vmatprep.subr.mxu0 0.0
    %3202 = vmatpush2.msra.mxu0 0.0
    %3203 = vmatprep.subr.mxu0 0.0
    %3204 = vmatpush2.msra.mxu0 0.0
    %3205 = vmatprep.subr.mxu0 0.0
    %3206 = vmatpush2.msra.mxu0 0.0
    %3207 = vmatprep.subr.mxu0 0.0
    %3208 = vmatpush2.msra.mxu0 0.0
    %3209 = vmatprep.subr.mxu0 0.0
    %3210 = vmatpush2.msra.mxu0 0.0
    %3211 = vmatprep.subr.mxu0 0.0
    %3212 = vmatpush2.msra.mxu0 0.0
    %3213 = vmatprep.subr.mxu0 0.0
    %3214 = vmatpush2.msra.mxu0 0.0
    %3215 = vmatprep.subr.mxu0 0.0
    %3216 = vmatpush2.msra.mxu0 0.0
    %3217 = vmatprep.subr.mxu0 0.0
    %3218 = vmatpush2.msra.mxu0 0.0
    %3219 = vmatprep.subr.mxu0 0.0
    %3220 = vmatpush2.msra.mxu0 0.0
    %3221 = vmatprep.subr.mxu0 0.0
    %3222 = vmatpush2.msra.mxu0 0.0
    %3223 = vmatprep.subr.mxu0 0.0
    %3224 = vmatpush2.msra.mxu0 0.0
    %3225 = vmatprep.subr.mxu0 0.0
    %3226 = vmatpush2.msra.mxu0 0.0
    %3227 = vmatprep.subr.mxu0 0.0
    %3228 = vmatpush2.msra.mxu0 0.0
    %3229 = vmatprep.subr.mxu0 0.0
    %3230 = vmatpush2.msra.mxu0 0.0
    %3231 = vmatprep.subr.mxu0 0.0
    %3232 = vmatpush2.msra.mxu0 0.0
    %3233 = vmatprep.mubr.f32.mxu0 0.0
    %3234 = vmatmul.mubr.f32.gmra.mxu0 %v3158
    %v3235 = vpop.f32.mrf.mxu0
    %v3236 = vadd.f32 0.0, %v3235
    %v3237 = vpop.f32.mrf.mxu0
    %3238 = vmatprep.mubr.f32.mxu0 0.0
    %3239 = vmatmul.mubr.f32.gmra.mxu0 %v3161
    %v3240 = vpop.f32.mrf.mxu0
    %v3241 = vadd.f32 0.0, %v3240
    %v3242 = vpop.f32.mrf.mxu0
    %3243 = vmatprep.mubr.f32.mxu0 0.0
    %3244 = vmatmul.mubr.f32.gmra.mxu0 %v3164
    %v3245 = vpop.f32.mrf.mxu0
    %v3246 = vadd.f32 0.0, %v3245
    %v3247 = vpop.f32.mrf.mxu0
    %3248 = vmatprep.mubr.f32.mxu0 0.0
    %3249 = vmatmul.mubr.f32.gmra.mxu0 %v3167
    %v3250 = vpop.f32.mrf.mxu0
    %v3251 = vadd.f32 0.0, %v3250
    %v3252 = vpop.f32.mrf.mxu0
    %3253 = vdwg.mxu0
    %v3254 = vld [vmem:[%s2] sm:$0xff]
    %v3255 = vld [vmem:[%s2 + $0x8] sm:$0xff]
    %v3256 = vld [vmem:[%s2 + $0x10] sm:$0xff]
    %v3257 = vld [vmem:[%s2 + $0x18] sm:$0xff]
    %v3258 = vld [vmem:[%s2 + $0x20] sm:$0xff]
    %v3259 = vld [vmem:[%s2 + $0x28] sm:$0xff]
    %v3261 = vsel %vm1680, %v2751, 0
    %v3264 = vsel %vm1680, %v2756, 0
    %v3267 = vsel %vm1680, %v2761, 0
    %v3270 = vsel %vm1680, %v2766, 0
    %3272 = vmatprep.subr.mxu0 0.0
    %3273 = vmatpush1.msra.mxu0 0.0
    %3274 = vmatprep.subr.mxu0 0.0
    %3275 = vmatpush1.msra.mxu0 0.0
    %3276 = vmatprep.subr.mxu0 0.0
    %3277 = vmatpush1.msra.mxu0 0.0
    %3278 = vmatprep.subr.mxu0 0.0
    %3279 = vmatpush1.msra.mxu0 0.0
    %3280 = vmatprep.subr.mxu0 0.0
    %3281 = vmatpush1.msra.mxu0 0.0
    %3282 = vmatprep.subr.mxu0 0.0
    %3283 = vmatpush1.msra.mxu0 0.0
    %3284 = vmatprep.subr.mxu0 0.0
    %3285 = vmatpush1.msra.mxu0 0.0
    %3286 = vmatprep.subr.mxu0 0.0
    %3287 = vmatpush1.msra.mxu0 0.0
    %3288 = vmatprep.subr.mxu0 0.0
    %3289 = vmatpush1.msra.mxu0 0.0
    %3290 = vmatprep.subr.mxu0 0.0
    %3291 = vmatpush1.msra.mxu0 0.0
    %3292 = vmatprep.subr.mxu0 0.0
    %3293 = vmatpush1.msra.mxu0 0.0
    %3294 = vmatprep.subr.mxu0 0.0
    %3295 = vmatpush1.msra.mxu0 0.0
    %3296 = vmatprep.subr.mxu0 0.0
    %3297 = vmatpush1.msra.mxu0 0.0
    %3298 = vmatprep.subr.mxu0 0.0
    %3299 = vmatpush1.msra.mxu0 0.0
    %3300 = vmatprep.subr.mxu0 0.0
    %3301 = vmatpush1.msra.mxu0 0.0
    %3302 = vmatprep.subr.mxu0 0.0
    %3303 = vmatpush1.msra.mxu0 %v3254
    %3304 = vmatprep.subr.mxu0 0.0
    %3305 = vmatpush2.msra.mxu0 0.0
    %3306 = vmatprep.subr.mxu0 0.0
    %3307 = vmatpush2.msra.mxu0 0.0
    %3308 = vmatprep.subr.mxu0 0.0
    %3309 = vmatpush2.msra.mxu0 0.0
    %3310 = vmatprep.subr.mxu0 0.0
    %3311 = vmatpush2.msra.mxu0 0.0
    %3312 = vmatprep.subr.mxu0 0.0
    %3313 = vmatpush2.msra.mxu0 0.0
    %3314 = vmatprep.subr.mxu0 0.0
    %3315 = vmatpush2.msra.mxu0 0.0
    %3316 = vmatprep.subr.mxu0 0.0
    %3317 = vmatpush2.msra.mxu0 0.0
    %3318 = vmatprep.subr.mxu0 0.0
    %3319 = vmatpush2.msra.mxu0 0.0
    %3320 = vmatprep.subr.mxu0 0.0
    %3321 = vmatpush2.msra.mxu0 0.0
    %3322 = vmatprep.subr.mxu0 0.0
    %3323 = vmatpush2.msra.mxu0 0.0
    %3324 = vmatprep.subr.mxu0 0.0
    %3325 = vmatpush2.msra.mxu0 0.0
    %3326 = vmatprep.subr.mxu0 0.0
    %3327 = vmatpush2.msra.mxu0 0.0
    %3328 = vmatprep.subr.mxu0 0.0
    %3329 = vmatpush2.msra.mxu0 0.0
    %3330 = vmatprep.subr.mxu0 0.0
    %3331 = vmatpush2.msra.mxu0 0.0
    %3332 = vmatprep.subr.mxu0 0.0
    %3333 = vmatpush2.msra.mxu0 0.0
    %3334 = vmatprep.subr.mxu0 0.0
    %3335 = vmatpush2.msra.mxu0 0.0
    %3336 = vmatprep.mubr.f32.mxu0 0.0
    %3337 = vmatmul.mubr.f32.gmra.mxu0 %v3261
    %v3338 = vpop.f32.mrf.mxu0
    %v3339 = vadd.f32 0.0, %v3338
    %v3340 = vpop.f32.mrf.mxu0
    %3341 = vmatprep.mubr.f32.mxu0 0.0
    %3342 = vmatmul.mubr.f32.gmra.mxu0 %v3264
    %v3343 = vpop.f32.mrf.mxu0
    %v3344 = vadd.f32 0.0, %v3343
    %v3345 = vpop.f32.mrf.mxu0
    %3346 = vmatprep.mubr.f32.mxu0 0.0
    %3347 = vmatmul.mubr.f32.gmra.mxu0 %v3267
    %v3348 = vpop.f32.mrf.mxu0
    %v3349 = vadd.f32 0.0, %v3348
    %v3350 = vpop.f32.mrf.mxu0
    %3351 = vmatprep.mubr.f32.mxu0 0.0
    %3352 = vmatmul.mubr.f32.gmra.mxu0 %v3270
    %v3353 = vpop.f32.mrf.mxu0
    %v3354 = vadd.f32 0.0, %v3353
    %v3355 = vpop.f32.mrf.mxu0
    %3356 = vdwg.mxu0
    %v3358 = vsel %vm1680, %v2848, 0
    %v3361 = vsel %vm1680, %v2853, 0
    %v3364 = vsel %vm1680, %v2858, 0
    %v3367 = vsel %vm1680, %v2863, 0
    %3369 = vmatprep.subr.mxu0 0.0
    %3370 = vmatpush1.msra.mxu0 0.0
    %3371 = vmatprep.subr.mxu0 0.0
    %3372 = vmatpush1.msra.mxu0 0.0
    %3373 = vmatprep.subr.mxu0 0.0
    %3374 = vmatpush1.msra.mxu0 0.0
    %3375 = vmatprep.subr.mxu0 0.0
    %3376 = vmatpush1.msra.mxu0 0.0
    %3377 = vmatprep.subr.mxu0 0.0
    %3378 = vmatpush1.msra.mxu0 0.0
    %3379 = vmatprep.subr.mxu0 0.0
    %3380 = vmatpush1.msra.mxu0 0.0
    %3381 = vmatprep.subr.mxu0 0.0
    %3382 = vmatpush1.msra.mxu0 0.0
    %3383 = vmatprep.subr.mxu0 0.0
    %3384 = vmatpush1.msra.mxu0 0.0
    %3385 = vmatprep.subr.mxu0 0.0
    %3386 = vmatpush1.msra.mxu0 0.0
    %3387 = vmatprep.subr.mxu0 0.0
    %3388 = vmatpush1.msra.mxu0 0.0
    %3389 = vmatprep.subr.mxu0 0.0
    %3390 = vmatpush1.msra.mxu0 0.0
    %3391 = vmatprep.subr.mxu0 0.0
    %3392 = vmatpush1.msra.mxu0 0.0
    %3393 = vmatprep.subr.mxu0 0.0
    %3394 = vmatpush1.msra.mxu0 0.0
    %3395 = vmatprep.subr.mxu0 0.0
    %3396 = vmatpush1.msra.mxu0 0.0
    %3397 = vmatprep.subr.mxu0 0.0
    %3398 = vmatpush1.msra.mxu0 0.0
    %3399 = vmatprep.subr.mxu0 0.0
    %3400 = vmatpush1.msra.mxu0 %v3255
    %3401 = vmatprep.subr.mxu0 0.0
    %3402 = vmatpush2.msra.mxu0 0.0
    %3403 = vmatprep.subr.mxu0 0.0
    %3404 = vmatpush2.msra.mxu0 0.0
    %3405 = vmatprep.subr.mxu0 0.0
    %3406 = vmatpush2.msra.mxu0 0.0
    %3407 = vmatprep.subr.mxu0 0.0
    %3408 = vmatpush2.msra.mxu0 0.0
    %3409 = vmatprep.subr.mxu0 0.0
    %3410 = vmatpush2.msra.mxu0 0.0
    %3411 = vmatprep.subr.mxu0 0.0
    %3412 = vmatpush2.msra.mxu0 0.0
    %3413 = vmatprep.subr.mxu0 0.0
    %3414 = vmatpush2.msra.mxu0 0.0
    %3415 = vmatprep.subr.mxu0 0.0
    %3416 = vmatpush2.msra.mxu0 0.0
    %3417 = vmatprep.subr.mxu0 0.0
    %3418 = vmatpush2.msra.mxu0 0.0
    %3419 = vmatprep.subr.mxu0 0.0
    %3420 = vmatpush2.msra.mxu0 0.0
    %3421 = vmatprep.subr.mxu0 0.0
    %3422 = vmatpush2.msra.mxu0 0.0
    %3423 = vmatprep.subr.mxu0 0.0
    %3424 = vmatpush2.msra.mxu0 0.0
    %3425 = vmatprep.subr.mxu0 0.0
    %3426 = vmatpush2.msra.mxu0 0.0
    %3427 = vmatprep.subr.mxu0 0.0
    %3428 = vmatpush2.msra.mxu0 0.0
    %3429 = vmatprep.subr.mxu0 0.0
    %3430 = vmatpush2.msra.mxu0 0.0
    %3431 = vmatprep.subr.mxu0 0.0
    %3432 = vmatpush2.msra.mxu0 0.0
    %3433 = vmatprep.mubr.f32.mxu0 0.0
    %3434 = vmatmul.mubr.f32.gmra.mxu0 %v3358
    %v3435 = vpop.f32.mrf.mxu0
    %v3436 = vadd.f32 0.0, %v3435
    %v3437 = vpop.f32.mrf.mxu0
    %3438 = vmatprep.mubr.f32.mxu0 0.0
    %3439 = vmatmul.mubr.f32.gmra.mxu0 %v3361
    %v3440 = vpop.f32.mrf.mxu0
    %v3441 = vadd.f32 0.0, %v3440
    %v3442 = vpop.f32.mrf.mxu0
    %3443 = vmatprep.mubr.f32.mxu0 0.0
    %3444 = vmatmul.mubr.f32.gmra.mxu0 %v3364
    %v3445 = vpop.f32.mrf.mxu0
    %v3446 = vadd.f32 0.0, %v3445
    %v3447 = vpop.f32.mrf.mxu0
    %3448 = vmatprep.mubr.f32.mxu0 0.0
    %3449 = vmatmul.mubr.f32.gmra.mxu0 %v3367
    %v3450 = vpop.f32.mrf.mxu0
    %v3451 = vadd.f32 0.0, %v3450
    %v3452 = vpop.f32.mrf.mxu0
    %3453 = vdwg.mxu0
    %v3455 = vsel %vm1680, %v2945, 0
    %v3458 = vsel %vm1680, %v2950, 0
    %v3461 = vsel %vm1680, %v2955, 0
    %v3464 = vsel %vm1680, %v2960, 0
    %3466 = vmatprep.subr.mxu0 0.0
    %3467 = vmatpush1.msra.mxu0 0.0
    %3468 = vmatprep.subr.mxu0 0.0
    %3469 = vmatpush1.msra.mxu0 0.0
    %3470 = vmatprep.subr.mxu0 0.0
    %3471 = vmatpush1.msra.mxu0 0.0
    %3472 = vmatprep.subr.mxu0 0.0
    %3473 = vmatpush1.msra.mxu0 0.0
    %3474 = vmatprep.subr.mxu0 0.0
    %3475 = vmatpush1.msra.mxu0 0.0
    %3476 = vmatprep.subr.mxu0 0.0
    %3477 = vmatpush1.msra.mxu0 0.0
    %3478 = vmatprep.subr.mxu0 0.0
    %3479 = vmatpush1.msra.mxu0 0.0
    %3480 = vmatprep.subr.mxu0 0.0
    %3481 = vmatpush1.msra.mxu0 0.0
    %3482 = vmatprep.subr.mxu0 0.0
    %3483 = vmatpush1.msra.mxu0 0.0
    %3484 = vmatprep.subr.mxu0 0.0
    %3485 = vmatpush1.msra.mxu0 0.0
    %3486 = vmatprep.subr.mxu0 0.0
    %3487 = vmatpush1.msra.mxu0 0.0
    %3488 = vmatprep.subr.mxu0 0.0
    %3489 = vmatpush1.msra.mxu0 0.0
    %3490 = vmatprep.subr.mxu0 0.0
    %3491 = vmatpush1.msra.mxu0 0.0
    %3492 = vmatprep.subr.mxu0 0.0
    %3493 = vmatpush1.msra.mxu0 0.0
    %3494 = vmatprep.subr.mxu0 0.0
    %3495 = vmatpush1.msra.mxu0 0.0
    %3496 = vmatprep.subr.mxu0 0.0
    %3497 = vmatpush1.msra.mxu0 %v3256
    %3498 = vmatprep.subr.mxu0 0.0
    %3499 = vmatpush2.msra.mxu0 0.0
    %3500 = vmatprep.subr.mxu0 0.0
    %3501 = vmatpush2.msra.mxu0 0.0
    %3502 = vmatprep.subr.mxu0 0.0
    %3503 = vmatpush2.msra.mxu0 0.0
    %3504 = vmatprep.subr.mxu0 0.0
    %3505 = vmatpush2.msra.mxu0 0.0
    %3506 = vmatprep.subr.mxu0 0.0
    %3507 = vmatpush2.msra.mxu0 0.0
    %3508 = vmatprep.subr.mxu0 0.0
    %3509 = vmatpush2.msra.mxu0 0.0
    %3510 = vmatprep.subr.mxu0 0.0
    %3511 = vmatpush2.msra.mxu0 0.0
    %3512 = vmatprep.subr.mxu0 0.0
    %3513 = vmatpush2.msra.mxu0 0.0
    %3514 = vmatprep.subr.mxu0 0.0
    %3515 = vmatpush2.msra.mxu0 0.0
    %3516 = vmatprep.subr.mxu0 0.0
    %3517 = vmatpush2.msra.mxu0 0.0
    %3518 = vmatprep.subr.mxu0 0.0
    %3519 = vmatpush2.msra.mxu0 0.0
    %3520 = vmatprep.subr.mxu0 0.0
    %3521 = vmatpush2.msra.mxu0 0.0
    %3522 = vmatprep.subr.mxu0 0.0
    %3523 = vmatpush2.msra.mxu0 0.0
    %3524 = vmatprep.subr.mxu0 0.0
    %3525 = vmatpush2.msra.mxu0 0.0
    %3526 = vmatprep.subr.mxu0 0.0
    %3527 = vmatpush2.msra.mxu0 0.0
    %3528 = vmatprep.subr.mxu0 0.0
    %3529 = vmatpush2.msra.mxu0 0.0
    %3530 = vmatprep.mubr.f32.mxu0 0.0
    %3531 = vmatmul.mubr.f32.gmra.mxu0 %v3455
    %v3532 = vpop.f32.mrf.mxu0
    %v3533 = vadd.f32 0.0, %v3532
    %v3534 = vpop.f32.mrf.mxu0
    %3535 = vmatprep.mubr.f32.mxu0 0.0
    %3536 = vmatmul.mubr.f32.gmra.mxu0 %v3458
    %v3537 = vpop.f32.mrf.mxu0
    %v3538 = vadd.f32 0.0, %v3537
    %v3539 = vpop.f32.mrf.mxu0
    %3540 = vmatprep.mubr.f32.mxu0 0.0
    %3541 = vmatmul.mubr.f32.gmra.mxu0 %v3461
    %v3542 = vpop.f32.mrf.mxu0
    %v3543 = vadd.f32 0.0, %v3542
    %v3544 = vpop.f32.mrf.mxu0
    %3545 = vmatprep.mubr.f32.mxu0 0.0
    %3546 = vmatmul.mubr.f32.gmra.mxu0 %v3464
    %v3547 = vpop.f32.mrf.mxu0
    %v3548 = vadd.f32 0.0, %v3547
    %v3549 = vpop.f32.mrf.mxu0
    %3550 = vdwg.mxu0
    %v3552 = vsel %vm1680, %v3042, 0
    %v3555 = vsel %vm1680, %v3047, 0
    %v3558 = vsel %vm1680, %v3052, 0
    %v3561 = vsel %vm1680, %v3057, 0
    %3563 = vmatprep.subr.mxu0 0.0
    %3564 = vmatpush1.msra.mxu0 0.0
    %3565 = vmatprep.subr.mxu0 0.0
    %3566 = vmatpush1.msra.mxu0 0.0
    %3567 = vmatprep.subr.mxu0 0.0
    %3568 = vmatpush1.msra.mxu0 0.0
    %3569 = vmatprep.subr.mxu0 0.0
    %3570 = vmatpush1.msra.mxu0 0.0
    %3571 = vmatprep.subr.mxu0 0.0
    %3572 = vmatpush1.msra.mxu0 0.0
    %3573 = vmatprep.subr.mxu0 0.0
    %3574 = vmatpush1.msra.mxu0 0.0
    %3575 = vmatprep.subr.mxu0 0.0
    %3576 = vmatpush1.msra.mxu0 0.0
    %3577 = vmatprep.subr.mxu0 0.0
    %3578 = vmatpush1.msra.mxu0 0.0
    %3579 = vmatprep.subr.mxu0 0.0
    %3580 = vmatpush1.msra.mxu0 0.0
    %3581 = vmatprep.subr.mxu0 0.0
    %3582 = vmatpush1.msra.mxu0 0.0
    %3583 = vmatprep.subr.mxu0 0.0
    %3584 = vmatpush1.msra.mxu0 0.0
    %3585 = vmatprep.subr.mxu0 0.0
    %3586 = vmatpush1.msra.mxu0 0.0
    %3587 = vmatprep.subr.mxu0 0.0
    %3588 = vmatpush1.msra.mxu0 0.0
    %3589 = vmatprep.subr.mxu0 0.0
    %3590 = vmatpush1.msra.mxu0 0.0
    %3591 = vmatprep.subr.mxu0 0.0
    %3592 = vmatpush1.msra.mxu0 0.0
    %3593 = vmatprep.subr.mxu0 0.0
    %3594 = vmatpush1.msra.mxu0 %v3257
    %3595 = vmatprep.subr.mxu0 0.0
    %3596 = vmatpush2.msra.mxu0 0.0
    %3597 = vmatprep.subr.mxu0 0.0
    %3598 = vmatpush2.msra.mxu0 0.0
    %3599 = vmatprep.subr.mxu0 0.0
    %3600 = vmatpush2.msra.mxu0 0.0
    %3601 = vmatprep.subr.mxu0 0.0
    %3602 = vmatpush2.msra.mxu0 0.0
    %3603 = vmatprep.subr.mxu0 0.0
    %3604 = vmatpush2.msra.mxu0 0.0
    %3605 = vmatprep.subr.mxu0 0.0
    %3606 = vmatpush2.msra.mxu0 0.0
    %3607 = vmatprep.subr.mxu0 0.0
    %3608 = vmatpush2.msra.mxu0 0.0
    %3609 = vmatprep.subr.mxu0 0.0
    %3610 = vmatpush2.msra.mxu0 0.0
    %3611 = vmatprep.subr.mxu0 0.0
    %3612 = vmatpush2.msra.mxu0 0.0
    %3613 = vmatprep.subr.mxu0 0.0
    %3614 = vmatpush2.msra.mxu0 0.0
    %3615 = vmatprep.subr.mxu0 0.0
    %3616 = vmatpush2.msra.mxu0 0.0
    %3617 = vmatprep.subr.mxu0 0.0
    %3618 = vmatpush2.msra.mxu0 0.0
    %3619 = vmatprep.subr.mxu0 0.0
    %3620 = vmatpush2.msra.mxu0 0.0
    %3621 = vmatprep.subr.mxu0 0.0
    %3622 = vmatpush2.msra.mxu0 0.0
    %3623 = vmatprep.subr.mxu0 0.0
    %3624 = vmatpush2.msra.mxu0 0.0
    %3625 = vmatprep.subr.mxu0 0.0
    %3626 = vmatpush2.msra.mxu0 0.0
    %3627 = vmatprep.mubr.f32.mxu0 0.0
    %3628 = vmatmul.mubr.f32.gmra.mxu0 %v3552
    %v3629 = vpop.f32.mrf.mxu0
    %v3630 = vadd.f32 0.0, %v3629
    %v3631 = vpop.f32.mrf.mxu0
    %3632 = vmatprep.mubr.f32.mxu0 0.0
    %3633 = vmatmul.mubr.f32.gmra.mxu0 %v3555
    %v3634 = vpop.f32.mrf.mxu0
    %v3635 = vadd.f32 0.0, %v3634
    %v3636 = vpop.f32.mrf.mxu0
    %3637 = vmatprep.mubr.f32.mxu0 0.0
    %3638 = vmatmul.mubr.f32.gmra.mxu0 %v3558
    %v3639 = vpop.f32.mrf.mxu0
    %v3640 = vadd.f32 0.0, %v3639
    %v3641 = vpop.f32.mrf.mxu0
    %3642 = vmatprep.mubr.f32.mxu0 0.0
    %3643 = vmatmul.mubr.f32.gmra.mxu0 %v3561
    %v3644 = vpop.f32.mrf.mxu0
    %v3645 = vadd.f32 0.0, %v3644
    %v3646 = vpop.f32.mrf.mxu0
    %3647 = vdwg.mxu0
    %v3649 = vsel %vm1680, %v3139, 0
    %v3652 = vsel %vm1680, %v3144, 0
    %v3655 = vsel %vm1680, %v3149, 0
    %v3658 = vsel %vm1680, %v3154, 0
    %3660 = vmatprep.subr.mxu0 0.0
    %3661 = vmatpush1.msra.mxu0 0.0
    %3662 = vmatprep.subr.mxu0 0.0
    %3663 = vmatpush1.msra.mxu0 0.0
    %3664 = vmatprep.subr.mxu0 0.0
    %3665 = vmatpush1.msra.mxu0 0.0
    %3666 = vmatprep.subr.mxu0 0.0
    %3667 = vmatpush1.msra.mxu0 0.0
    %3668 = vmatprep.subr.mxu0 0.0
    %3669 = vmatpush1.msra.mxu0 0.0
    %3670 = vmatprep.subr.mxu0 0.0
    %3671 = vmatpush1.msra.mxu0 0.0
    %3672 = vmatprep.subr.mxu0 0.0
    %3673 = vmatpush1.msra.mxu0 0.0
    %3674 = vmatprep.subr.mxu0 0.0
    %3675 = vmatpush1.msra.mxu0 0.0
    %3676 = vmatprep.subr.mxu0 0.0
    %3677 = vmatpush1.msra.mxu0 0.0
    %3678 = vmatprep.subr.mxu0 0.0
    %3679 = vmatpush1.msra.mxu0 0.0
    %3680 = vmatprep.subr.mxu0 0.0
    %3681 = vmatpush1.msra.mxu0 0.0
    %3682 = vmatprep.subr.mxu0 0.0
    %3683 = vmatpush1.msra.mxu0 0.0
    %3684 = vmatprep.subr.mxu0 0.0
    %3685 = vmatpush1.msra.mxu0 0.0
    %3686 = vmatprep.subr.mxu0 0.0
    %3687 = vmatpush1.msra.mxu0 0.0
    %3688 = vmatprep.subr.mxu0 0.0
    %3689 = vmatpush1.msra.mxu0 0.0
    %3690 = vmatprep.subr.mxu0 0.0
    %3691 = vmatpush1.msra.mxu0 %v3258
    %3692 = vmatprep.subr.mxu0 0.0
    %3693 = vmatpush2.msra.mxu0 0.0
    %3694 = vmatprep.subr.mxu0 0.0
    %3695 = vmatpush2.msra.mxu0 0.0
    %3696 = vmatprep.subr.mxu0 0.0
    %3697 = vmatpush2.msra.mxu0 0.0
    %3698 = vmatprep.subr.mxu0 0.0
    %3699 = vmatpush2.msra.mxu0 0.0
    %3700 = vmatprep.subr.mxu0 0.0
    %3701 = vmatpush2.msra.mxu0 0.0
    %3702 = vmatprep.subr.mxu0 0.0
    %3703 = vmatpush2.msra.mxu0 0.0
    %3704 = vmatprep.subr.mxu0 0.0
    %3705 = vmatpush2.msra.mxu0 0.0
    %3706 = vmatprep.subr.mxu0 0.0
    %3707 = vmatpush2.msra.mxu0 0.0
    %3708 = vmatprep.subr.mxu0 0.0
    %3709 = vmatpush2.msra.mxu0 0.0
    %3710 = vmatprep.subr.mxu0 0.0
    %3711 = vmatpush2.msra.mxu0 0.0
    %3712 = vmatprep.subr.mxu0 0.0
    %3713 = vmatpush2.msra.mxu0 0.0
    %3714 = vmatprep.subr.mxu0 0.0
    %3715 = vmatpush2.msra.mxu0 0.0
    %3716 = vmatprep.subr.mxu0 0.0
    %3717 = vmatpush2.msra.mxu0 0.0
    %3718 = vmatprep.subr.mxu0 0.0
    %3719 = vmatpush2.msra.mxu0 0.0
    %3720 = vmatprep.subr.mxu0 0.0
    %3721 = vmatpush2.msra.mxu0 0.0
    %3722 = vmatprep.subr.mxu0 0.0
    %3723 = vmatpush2.msra.mxu0 0.0
    %3724 = vmatprep.mubr.f32.mxu0 0.0
    %3725 = vmatmul.mubr.f32.gmra.mxu0 %v3649
    %v3726 = vpop.f32.mrf.mxu0
    %v3727 = vadd.f32 0.0, %v3726
    %v3728 = vpop.f32.mrf.mxu0
    %3729 = vmatprep.mubr.f32.mxu0 0.0
    %3730 = vmatmul.mubr.f32.gmra.mxu0 %v3652
    %v3731 = vpop.f32.mrf.mxu0
    %v3732 = vadd.f32 0.0, %v3731
    %v3733 = vpop.f32.mrf.mxu0
    %3734 = vmatprep.mubr.f32.mxu0 0.0
    %3735 = vmatmul.mubr.f32.gmra.mxu0 %v3655
    %v3736 = vpop.f32.mrf.mxu0
    %v3737 = vadd.f32 0.0, %v3736
    %v3738 = vpop.f32.mrf.mxu0
    %3739 = vmatprep.mubr.f32.mxu0 0.0
    %3740 = vmatmul.mubr.f32.gmra.mxu0 %v3658
    %v3741 = vpop.f32.mrf.mxu0
    %v3742 = vadd.f32 0.0, %v3741
    %v3743 = vpop.f32.mrf.mxu0
    %3744 = vdwg.mxu0
    %v3746 = vsel %vm1680, %v3236, 0
    %v3749 = vsel %vm1680, %v3241, 0
    %v3752 = vsel %vm1680, %v3246, 0
    %v3755 = vsel %vm1680, %v3251, 0
    %3757 = vmatprep.subr.mxu0 0.0
    %3758 = vmatpush1.msra.mxu0 0.0
    %3759 = vmatprep.subr.mxu0 0.0
    %3760 = vmatpush1.msra.mxu0 0.0
    %3761 = vmatprep.subr.mxu0 0.0
    %3762 = vmatpush1.msra.mxu0 0.0
    %3763 = vmatprep.subr.mxu0 0.0
    %3764 = vmatpush1.msra.mxu0 0.0
    %3765 = vmatprep.subr.mxu0 0.0
    %3766 = vmatpush1.msra.mxu0 0.0
    %3767 = vmatprep.subr.mxu0 0.0
    %3768 = vmatpush1.msra.mxu0 0.0
    %3769 = vmatprep.subr.mxu0 0.0
    %3770 = vmatpush1.msra.mxu0 0.0
    %3771 = vmatprep.subr.mxu0 0.0
    %3772 = vmatpush1.msra.mxu0 0.0
    %3773 = vmatprep.subr.mxu0 0.0
    %3774 = vmatpush1.msra.mxu0 0.0
    %3775 = vmatprep.subr.mxu0 0.0
    %3776 = vmatpush1.msra.mxu0 0.0
    %3777 = vmatprep.subr.mxu0 0.0
    %3778 = vmatpush1.msra.mxu0 0.0
    %3779 = vmatprep.subr.mxu0 0.0
    %3780 = vmatpush1.msra.mxu0 0.0
    %3781 = vmatprep.subr.mxu0 0.0
    %3782 = vmatpush1.msra.mxu0 0.0
    %3783 = vmatprep.subr.mxu0 0.0
    %3784 = vmatpush1.msra.mxu0 0.0
    %3785 = vmatprep.subr.mxu0 0.0
    %3786 = vmatpush1.msra.mxu0 0.0
    %3787 = vmatprep.subr.mxu0 0.0
    %3788 = vmatpush1.msra.mxu0 %v3259
    %3789 = vmatprep.subr.mxu0 0.0
    %3790 = vmatpush2.msra.mxu0 0.0
    %3791 = vmatprep.subr.mxu0 0.0
    %3792 = vmatpush2.msra.mxu0 0.0
    %3793 = vmatprep.subr.mxu0 0.0
    %3794 = vmatpush2.msra.mxu0 0.0
    %3795 = vmatprep.subr.mxu0 0.0
    %3796 = vmatpush2.msra.mxu0 0.0
    %3797 = vmatprep.subr.mxu0 0.0
    %3798 = vmatpush2.msra.mxu0 0.0
    %3799 = vmatprep.subr.mxu0 0.0
    %3800 = vmatpush2.msra.mxu0 0.0
    %3801 = vmatprep.subr.mxu0 0.0
    %3802 = vmatpush2.msra.mxu0 0.0
    %3803 = vmatprep.subr.mxu0 0.0
    %3804 = vmatpush2.msra.mxu0 0.0
    %3805 = vmatprep.subr.mxu0 0.0
    %3806 = vmatpush2.msra.mxu0 0.0
    %3807 = vmatprep.subr.mxu0 0.0
    %3808 = vmatpush2.msra.mxu0 0.0
    %3809 = vmatprep.subr.mxu0 0.0
    %3810 = vmatpush2.msra.mxu0 0.0
    %3811 = vmatprep.subr.mxu0 0.0
    %3812 = vmatpush2.msra.mxu0 0.0
    %3813 = vmatprep.subr.mxu0 0.0
    %3814 = vmatpush2.msra.mxu0 0.0
    %3815 = vmatprep.subr.mxu0 0.0
    %3816 = vmatpush2.msra.mxu0 0.0
    %3817 = vmatprep.subr.mxu0 0.0
    %3818 = vmatpush2.msra.mxu0 0.0
    %3819 = vmatprep.subr.mxu0 0.0
    %3820 = vmatpush2.msra.mxu0 0.0
    %3821 = vmatprep.mubr.f32.mxu0 0.0
    %3822 = vmatmul.mubr.f32.gmra.mxu0 %v3746
    %v3823 = vpop.f32.mrf.mxu0
    %v3824 = vadd.f32 0.0, %v3823
    %v3825 = vpop.f32.mrf.mxu0
    %3826 = vmatprep.mubr.f32.mxu0 0.0
    %3827 = vmatmul.mubr.f32.gmra.mxu0 %v3749
    %v3828 = vpop.f32.mrf.mxu0
    %v3829 = vadd.f32 0.0, %v3828
    %v3830 = vpop.f32.mrf.mxu0
    %3831 = vmatprep.mubr.f32.mxu0 0.0
    %3832 = vmatmul.mubr.f32.gmra.mxu0 %v3752
    %v3833 = vpop.f32.mrf.mxu0
    %v3834 = vadd.f32 0.0, %v3833
    %v3835 = vpop.f32.mrf.mxu0
    %3836 = vmatprep.mubr.f32.mxu0 0.0
    %3837 = vmatmul.mubr.f32.gmra.mxu0 %v3755
    %v3838 = vpop.f32.mrf.mxu0
    %v3839 = vadd.f32 0.0, %v3838
    %v3840 = vpop.f32.mrf.mxu0
    %3841 = vdwg.mxu0
    %v3842 = vsel %vm133, %v3339, 0.0
    %v3843 = vsel %vm133, %v3436, 0.0
    %v3844 = vadd.f32 %v3842, %v3843
    %v3845 = vsel %vm133, %v3533, 0.0
    %v3846 = vadd.f32 %v3844, %v3845
    %v3847 = vsel %vm133, %v3630, 0.0
    %v3848 = vadd.f32 %v3846, %v3847
    %v3849 = vsel %vm133, %v3727, 0.0
    %v3850 = vadd.f32 %v3848, %v3849
    %v3851 = vsel %vm133, %v3824, 0.0
    %v3852 = vadd.f32 %v3850, %v3851
    %v3853 = vsel %vm133, %v3344, 0.0
    %v3854 = vsel %vm133, %v3441, 0.0
    %v3855 = vadd.f32 %v3853, %v3854
    %v3856 = vsel %vm133, %v3538, 0.0
    %v3857 = vadd.f32 %v3855, %v3856
    %v3858 = vsel %vm133, %v3635, 0.0
    %v3859 = vadd.f32 %v3857, %v3858
    %v3860 = vsel %vm133, %v3732, 0.0
    %v3861 = vadd.f32 %v3859, %v3860
    %v3862 = vsel %vm133, %v3829, 0.0
    %v3863 = vadd.f32 %v3861, %v3862
    %v3864 = vsel %vm133, %v3349, 0.0
    %v3865 = vsel %vm133, %v3446, 0.0
    %v3866 = vadd.f32 %v3864, %v3865
    %v3867 = vsel %vm133, %v3543, 0.0
    %v3868 = vadd.f32 %v3866, %v3867
    %v3869 = vsel %vm133, %v3640, 0.0
    %v3870 = vadd.f32 %v3868, %v3869
    %v3871 = vsel %vm133, %v3737, 0.0
    %v3872 = vadd.f32 %v3870, %v3871
    %v3873 = vsel %vm133, %v3834, 0.0
    %v3874 = vadd.f32 %v3872, %v3873
    %v3875 = vsel %vm133, %v3354, 0.0
    %v3876 = vsel %vm133, %v3451, 0.0
    %v3877 = vadd.f32 %v3875, %v3876
    %v3878 = vsel %vm133, %v3548, 0.0
    %v3879 = vadd.f32 %v3877, %v3878
    %v3880 = vsel %vm133, %v3645, 0.0
    %v3881 = vadd.f32 %v3879, %v3880
    %v3882 = vsel %vm133, %v3742, 0.0
    %v3883 = vadd.f32 %v3881, %v3882
    %v3884 = vsel %vm133, %v3839, 0.0
    %v3885 = vadd.f32 %v3883, %v3884
    %v3886 = vld [vmem:[%s3] sm:$0x1]
    %v3888 = vlaneseq
    %v3889 = vshrl.u32 %v3888, 7
    %v3890 = vsub.s32 0, %v3889
    %v3891 = vrot.slane %v3886, %v3890
    %v3893 = vadd.f32 %v3852, %v3891
    %v3894 = vadd.f32 %v3863, %v3891
    %v3895 = vadd.f32 %v3874, %v3891
    %v3896 = vadd.f32 %v3885, %v3891
    %3897 = vst.msk [vmem:[#allocation2] sm:$0xff] %vm133, %v3893
    %3898 = vst.msk [vmem:[#allocation2 + $0x8] sm:$0xff] %vm133, %v3894
    %3899 = vst.msk [vmem:[#allocation2 + $0x10] sm:$0xff] %vm133, %v3895
    %3900 = vst.msk [vmem:[#allocation2 + $0x18] sm:$0xff] %vm133, %v3896
    // Predicated region
    $region22: #{tpu_custom_call.1} parent=1 // pred_check
      _
    $region23: #{tpu_custom_call.1} parent=1 // pred_check_branch
      %3902 = sbr.rel (0) target = $region25
    $region24: #{tpu_custom_call.1} parent=1 // pred_region
      %s3904 = ssub.s32 512, 512
      %3905 = vsyncadd [#allocation3], %s3904
      %s3906 = sshll.u32 [#allocation2], 4
      %s3907 = int_to_ptr.vmem [resolvable:$true] %s3906
      %3912 = dma.vmem_to_hbm [thread:$0]  %s3907, 512, %s5, [#allocation3], 128, 128, 8
    $region25: #{tpu_custom_call.1} parent=1 // pred_fallthru
      _
    // Predicated region
    $region26: #{tpu_custom_call.1} parent=1 // pred_check
      _
    $region27: #{tpu_custom_call.1} parent=1 // pred_check_branch
      %3914 = sbr.rel (0) target = $region29
    $region28: #{tpu_custom_call.1} parent=1 // pred_region
      %3915 = dma.done [#allocation3], 512
    $region29: #{tpu_custom_call.1} parent=1 // pred_fallthru
      _
    %3916 = vsyncpa [#allocation3], 1

</llo_original>
